<compile_context>
chip_gen: v6e
topology: v6e:2x2x1
jax: 0.10.0
libtpu: 0.0.40
codegen_flags: <defaults>
</compile_context>

<pallas_src>
import functools

import jax
import jax.numpy as jnp
from jax.experimental import pallas as pl
from jax.experimental.pallas import tpu as pltpu


def _round_up(n, m):
    return ((n + m - 1) // m) * m


def dfsmn_kernel(*refs, lorder, rorder, residual, matmul_dtype, de_chunk,
                 lpad_aligned):
    if rorder > 0:
        x_ref, we_ref, be_ref, ws_ref, wl_ref, wr_ref, o_ref, pbuf_ref = refs
    else:
        x_ref, we_ref, be_ref, ws_ref, wl_ref, o_ref, pbuf_ref = refs
        wr_ref = None

    Bb, T, Din = x_ref.shape
    De = we_ref.shape[1]
    Dout = o_ref.shape[-1]
    LPAD = lorder - 1
    M = Bb * T

    # ---- expand (Affine) -> ReLU -> shrink (Linear), K-chunked over De ---------
    # Chunking bounds the live (M, De) activation to (M, de_chunk) so large
    # production De does not blow VMEM / spill; exact (ReLU is columnwise).
    xm = x_ref[...].reshape(M, Din).astype(matmul_dtype)   # only bf16 copy stays live
    p = jnp.zeros((M, Dout), jnp.float32)
    for c0 in range(0, De, de_chunk):
        c1 = min(c0 + de_chunk, De)
        h = jnp.dot(xm, we_ref[:, c0:c1], preferred_element_type=jnp.float32)
        h = jnp.maximum(h + be_ref[:, c0:c1], 0.0)
        p = p + jnp.dot(h.astype(matmul_dtype), ws_ref[c0:c1, :],
                        preferred_element_type=jnp.float32)
    p3 = p.reshape(Bb, T, Dout)

    # ---- FSMN memory block: per-feature temporal FIR ---------------------------
    # p3 is staged into a zero-padded VMEM scratch at a sublane-aligned offset
    # (lpad_aligned % 8 == 0) so the store is an unmasked full-tile vst.
    # Pad zeroing happens every grid step on purpose: with a "parallel" axis a
    # core may never execute step 0, so program_id-gated init would be unsafe.
    if lpad_aligned > 0:
        pbuf_ref[:, :lpad_aligned, :] = jnp.zeros((Bb, lpad_aligned, Dout),
                                                  jnp.float32)
    if rorder > 0:
        pbuf_ref[:, lpad_aligned + T:lpad_aligned + T + rorder, :] = jnp.zeros(
            (Bb, rorder, Dout), jnp.float32)
    pbuf_ref[:, lpad_aligned:lpad_aligned + T, :] = p3

    off_l = lpad_aligned - LPAD        # causal tap k reads    p[t - LPAD + k]
    off_r = lpad_aligned + 1           # lookahead tap k reads p[t + 1 + k]

    # Round-robin the taps into independent accumulator streams (breaks the serial
    # add chain so the VPU can co-issue), then pairwise-sum the streams.
    n_streams = 4
    streams = [None] * n_streams
    streams[0] = p3
    idx = 1
    wl = wl_ref[...]                                        # hoisted tap weights
    for k in range(lorder):
        term = wl[k][None, None, :] * pbuf_ref[:, off_l + k:off_l + k + T, :]
        s = idx % n_streams
        streams[s] = term if streams[s] is None else streams[s] + term
        idx += 1
    if rorder > 0:
        wr = wr_ref[...]                                    # hoisted tap weights
        for k in range(rorder):
            term = wr[k][None, None, :] * pbuf_ref[:, off_r + k:off_r + k + T, :]
            s = idx % n_streams
            streams[s] = term if streams[s] is None else streams[s] + term
            idx += 1
    live = [s for s in streams if s is not None]
    while len(live) > 1:
        nxt = [live[i] + live[i + 1] for i in range(0, len(live) - 1, 2)]
        if len(live) % 2:
            nxt.append(live[-1])
        live = nxt
    acc = live[0]

    if residual:                       # x.shape[-1] == out.shape[-1] (static)
        acc = acc + x_ref[...]         # re-read the VMEM block; don't keep f32 x live

    o_ref[...] = acc.astype(o_ref.dtype)


def dfsmn_unit(x, we, be, ws, wl, wr=None, *, lorder, rorder,
               block_b=None, rows_target=256, de_chunk=256,
               matmul_dtype=jnp.bfloat16):
    B, T, Din = x.shape
    De = we.shape[1]
    Dout = ws.shape[1]
    if lorder < 1:
        raise ValueError("lorder must be >= 1")
    if rorder > 0 and wr is None:
        raise ValueError("wr must be provided when rorder > 0")
    residual = (Din == Dout)
    LPAD_A = _round_up(lorder - 1, 8)           # sublane-aligned left pad

    de_chunk = min(de_chunk, De)
    if De % de_chunk != 0:
        de_chunk = De                           # keep chunks exact

    # ---- batch-block selection --------------------------------------------------
    # Target ~rows_target MXU rows per step, but prefer >= 2 grid steps when B
    # allows (pipeline depth; both TensorCores busy on v7x).  Prefer divisors of
    # B; otherwise pad B instead of collapsing to block_b = 1 (tiny-M matmuls).
    if block_b is None:
        cap = max(1, min(B, pl.cdiv(rows_target, T)))
        min_grid = 2 if B >= 2 else 1
        for bb in range(cap, 0, -1):
            if pl.cdiv(B, bb) < min_grid:
                continue
            if B % bb == 0:
                block_b = bb
                break
        if block_b is None:
            for bb in range(cap, 0, -1):
                if pl.cdiv(B, bb) >= min_grid:
                    block_b = bb
                    break
        if block_b is None:
            block_b = 1
    grid_b = pl.cdiv(B, block_b)
    B_pad = grid_b * block_b
    x_p = x if B_pad == B else jnp.pad(x, ((0, B_pad - B), (0, 0), (0, 0)))

    # bf16 MXU operands (f32 accumulation); halves weight DMA too.
    we_c = we.astype(matmul_dtype)
    ws_c = ws.astype(matmul_dtype)

    kernel = functools.partial(
        dfsmn_kernel, lorder=lorder, rorder=rorder, residual=residual,
        matmul_dtype=matmul_dtype, de_chunk=de_chunk, lpad_aligned=LPAD_A)

    M = block_b * T
    flops = (2 * B_pad * T * (Din * De + De * Dout)
             + 2 * B_pad * T * Dout * (lorder + rorder + 1))
    itemsize = x.dtype.itemsize
    bytes_accessed = (B_pad * T * Din * itemsize + B_pad * T * Dout * itemsize
                      + we_c.size * we_c.dtype.itemsize
                      + ws_c.size * ws_c.dtype.itemsize
                      + be.size * be.dtype.itemsize
                      + wl.size * wl.dtype.itemsize
                      + (wr.size * wr.dtype.itemsize if rorder > 0 else 0))

    # ---- VMEM budget: explicit footprint, capped at 3/4 of physical VMEM -------
    w_bytes = ((Din * De + De * Dout) * we_c.dtype.itemsize
               + De * be.dtype.itemsize + (lorder + rorder) * Dout * 4)
    est = (2 * block_b * T * Din * 4                      # x blocks (double-buffered)
           + 2 * block_b * T * Dout * 4                   # out blocks
           + 2 * w_bytes                                   # weights (worst case 2x)
           + block_b * (LPAD_A + T + rorder) * Dout * 4   # FIR scratch
           + M * de_chunk * 4 + 4 * M * Dout * 4)         # live h chunk + p/acc temps
    try:
        phys_vmem = int(getattr(pltpu.get_tpu_info(), "vmem_capacity_bytes",
                                64 * 1024 * 1024))
    except Exception:
        phys_vmem = 64 * 1024 * 1024                       # conservative (v7x per-TC)
    vmem_limit = int(min(phys_vmem * 3 // 4, max(32 * 1024 * 1024, 2 * est)))

    def build(single_buffer_weights):
        wkw = ({"pipeline_mode": pl.Buffered(1)} if single_buffer_weights else {})
        in_specs = [
            pl.BlockSpec((block_b, T, Din), lambda b: (b, 0, 0)),     # x batch block
            pl.BlockSpec((Din, De), lambda b: (0, 0), **wkw),         # expand W (in,out)
            pl.BlockSpec((1, De), lambda b: (0, 0), **wkw),           # expand bias
            pl.BlockSpec((De, Dout), lambda b: (0, 0), **wkw),        # shrink W (in,out)
            pl.BlockSpec((lorder, Dout), lambda b: (0, 0), **wkw),    # causal FIR taps
        ]
        if rorder > 0:
            in_specs.append(pl.BlockSpec((rorder, Dout), lambda b: (0, 0), **wkw))
        return pl.pallas_call(
            kernel,
            out_shape=jax.ShapeDtypeStruct((B_pad, T, Dout), x.dtype),
            grid_spec=pltpu.PrefetchScalarGridSpec(
                num_scalar_prefetch=0,
                grid=(grid_b,),
                in_specs=in_specs,
                out_specs=pl.BlockSpec((block_b, T, Dout), lambda b: (b, 0, 0)),
                scratch_shapes=[
                    # zero-padded, sublane-aligned p buffer for the FIR taps
                    pltpu.VMEM((block_b, LPAD_A + T + rorder, Dout), jnp.float32),
                ],
            ),
            compiler_params=pltpu.CompilerParams(
                dimension_semantics=("parallel",),
                vmem_limit_bytes=vmem_limit,
            ),
            cost_estimate=pl.CostEstimate(flops=flops, transcendentals=0,
                                          bytes_accessed=bytes_accessed),
        )

    args = [x_p, we_c, be, ws_c, wl] + ([wr] if rorder > 0 else [])
    try:
        out = build(True)(*args)      # constant weight blocks single-buffered
    except Exception:
        out = build(False)(*args)     # fall back to default double-buffering
    return out if B_pad == B else out[:B]


def dfsmn_reference(x, we, be, ws, wl, wr, *, lorder, rorder, matmul_dtype=None):
    """Pure-JAX reference mirroring the PyTorch forward (optionally bf16 matmul inputs)."""
    if matmul_dtype is None:
        matmul_dtype = x.dtype
    h = jnp.dot(x.astype(matmul_dtype), we.astype(matmul_dtype),
                preferred_element_type=jnp.float32) + be
    h = jax.nn.relu(h)                                   # F.relu(self.expand(x))
    p = jnp.dot(h.astype(matmul_dtype), ws.astype(matmul_dtype),
                preferred_element_type=jnp.float32)      # self.shrink(out1)
    T = p.shape[1]
    padded = jnp.pad(p, ((0, 0), (lorder - 1, rorder), (0, 0)))
    acc = p
    for k in range(lorder):
        acc = acc + wl[k][None, None, :] * padded[:, k:k + T, :]
    for k in range(rorder):
        acc = acc + wr[k][None, None, :] * padded[:, lorder + k:lorder + k + T, :]
    if x.shape[-1] == acc.shape[-1]:
        acc = x + acc
    return acc


if __name__ == "__main__":
    # Small [batch, time, feature] shapes; feature dims are multiples of 128 and T a
    # multiple of 8 (lane-dense stores, free (Bb,T,D)->(Bb*T,D) relayout).
    B, T = 4, 64
    dimin, dimexpand, dimout = 128, 256, 128
    lorder, rorder = 10, 1

    key = jax.random.PRNGKey(0)
    kx, k1, k2, k3, k4, k5 = jax.random.split(key, 6)

    x = jax.random.normal(kx, (B, T, dimin), dtype=jnp.float32)
    # AffineTransform(dimin, dimexpand): Linear weight (out,in) stored transposed (in,out)
    we = jax.random.normal(k1, (dimin, dimexpand), dtype=jnp.float32) * 0.1
    be = jax.random.normal(k2, (1, dimexpand), dtype=jnp.float32) * 0.1
    # LinearTransform(dimexpand, dimout): Linear(bias=False), transposed (in,out)
    ws = jax.random.normal(k3, (dimexpand, dimout), dtype=jnp.float32) * 0.1
    # Fsmn depthwise conv weights: conv_left [dimout,1,lorder,1] -> (lorder, dimout)
    wl = jax.random.normal(k4, (lorder, dimout), dtype=jnp.float32) * 0.1
    # conv_right [dimout,1,rorder,1] -> (rorder, dimout)
    wr = jax.random.normal(k5, (rorder, dimout), dtype=jnp.float32) * 0.1

    out = dfsmn_unit(x, we, be, ws, wl, wr, lorder=lorder, rorder=rorder)
    out = jax.block_until_ready(out)
    assert out.shape == (B, T, dimout)

    # Matched reference (same bf16 MXU inputs, f32 accumulation) -> tight match.
    ref_bf16 = dfsmn_reference(x, we, be, ws, wl, wr, lorder=lorder, rorder=rorder,
                               matmul_dtype=jnp.bfloat16)
    assert jnp.allclose(out, ref_bf16, atol=2e-3, rtol=2e-3), "mismatch vs matched reference"

    # Full-f32 PyTorch semantics; looser tolerance only because of bf16 MXU inputs.
    ref_f32 = dfsmn_reference(x, we, be, ws, wl, wr, lorder=lorder, rorder=rorder,
                              matmul_dtype=jnp.float32)
    assert jnp.allclose(out, ref_f32, atol=5e-2, rtol=5e-2), "mismatch vs f32 reference"

    print("KERNEL_OK")
</pallas_src>

<mosaic_0001>
module attributes {stable_mosaic.version = 11 : i64} {
  func.func @dfsmn_kernel(%arg0: i32, %arg1: memref<2x64x128xf32, #tpu.memory_space<vmem>>, %arg2: memref<128x256xbf16, #tpu.memory_space<vmem>>, %arg3: memref<1x256xf32, #tpu.memory_space<vmem>>, %arg4: memref<256x128xbf16, #tpu.memory_space<vmem>>, %arg5: memref<10x128xf32, #tpu.memory_space<vmem>>, %arg6: memref<1x128xf32, #tpu.memory_space<vmem>>, %arg7: memref<2x64x128xf32, #tpu.memory_space<vmem>>, %arg8: memref<2x81x128xf32, #tpu.memory_space<vmem>>) attributes {dimension_semantics = [#tpu.dimension_semantics<parallel>], iteration_bounds = array<i64: 2>, scalar_prefetch = 0 : i64, scratch_operands = 1 : i64, tpu.core_type = #tpu.core_type<tc>, window_params = [{transform_indices = @transform_0, window_bounds = array<i64: 2, 64, 128>}, {pipeline_mode = #tpu.pipeline_mode<synchronous>, transform_indices = @transform_1, window_bounds = array<i64: 128, 256>}, {pipeline_mode = #tpu.pipeline_mode<synchronous>, transform_indices = @transform_2, window_bounds = array<i64: 1, 256>}, {pipeline_mode = #tpu.pipeline_mode<synchronous>, transform_indices = @transform_3, window_bounds = array<i64: 256, 128>}, {pipeline_mode = #tpu.pipeline_mode<synchronous>, transform_indices = @transform_4, window_bounds = array<i64: 10, 128>}, {pipeline_mode = #tpu.pipeline_mode<synchronous>, transform_indices = @transform_5, window_bounds = array<i64: 1, 128>}, {transform_indices = @transform_6, window_bounds = array<i64: 2, 64, 128>}]} {
    %c0 = arith.constant 0 : index
    %c0_0 = arith.constant 0 : index
    %c0_1 = arith.constant 0 : index
    %0 = vector.load %arg1[%c0, %c0_0, %c0_1] : memref<2x64x128xf32, #tpu.memory_space<vmem>>, vector<2x64x128xf32>
    %1 = vector.shape_cast %0 : vector<2x64x128xf32> to vector<128x128xf32>
    %2 = arith.truncf %1 : vector<128x128xf32> to vector<128x128xbf16>
    %cst = arith.constant 0.000000e+00 : f32
    %3 = vector.broadcast %cst : f32 to vector<128x128xf32>
    %c0_2 = arith.constant 0 : index
    %c0_3 = arith.constant 0 : index
    %4 = vector.load %arg2[%c0_2, %c0_3] : memref<128x256xbf16, #tpu.memory_space<vmem>>, vector<128x256xbf16>
    %cst_4 = arith.constant dense<0.000000e+00> : vector<128x256xf32>
    %5 = tpu.matmul %2, %4, %cst_4 {dimension_numbers = #tpu.dot_dimension_numbers<[1], [0], [0], [1], [0, 0, 1, 1], [], []>} : vector<128x128xbf16>, vector<128x256xbf16>, vector<128x256xf32> -> vector<128x256xf32>
    %c0_5 = arith.constant 0 : index
    %c0_6 = arith.constant 0 : index
    %6 = vector.load %arg3[%c0_5, %c0_6] : memref<1x256xf32, #tpu.memory_space<vmem>>, vector<1x256xf32>
    %7 = vector.broadcast %6 : vector<1x256xf32> to vector<128x256xf32>
    %8 = arith.addf %5, %7 : vector<128x256xf32>
    %cst_7 = arith.constant 0.000000e+00 : f32
    %9 = vector.broadcast %cst_7 : f32 to vector<128x256xf32>
    %10 = arith.maximumf %8, %9 : vector<128x256xf32>
    %11 = arith.truncf %10 : vector<128x256xf32> to vector<128x256xbf16>
    %c0_8 = arith.constant 0 : index
    %c0_9 = arith.constant 0 : index
    %12 = vector.load %arg4[%c0_8, %c0_9] : memref<256x128xbf16, #tpu.memory_space<vmem>>, vector<256x128xbf16>
    %cst_10 = arith.constant dense<0.000000e+00> : vector<128x128xf32>
    %13 = tpu.matmul %11, %12, %cst_10 {dimension_numbers = #tpu.dot_dimension_numbers<[1], [0], [0], [1], [0, 0, 1, 1], [], []>} : vector<128x256xbf16>, vector<256x128xbf16>, vector<128x128xf32> -> vector<128x128xf32>
    %14 = arith.addf %3, %13 : vector<128x128xf32>
    %15 = vector.shape_cast %14 : vector<128x128xf32> to vector<2x64x128xf32>
    %cst_11 = arith.constant 0.000000e+00 : f32
    %16 = vector.broadcast %cst_11 : f32 to vector<2x16x128xf32>
    %c0_12 = arith.constant 0 : index
    %c0_13 = arith.constant 0 : index
    %c0_14 = arith.constant 0 : index
    %17 = vector.load %arg8[%c0_12, %c0_13, %c0_14] : memref<2x81x128xf32, #tpu.memory_space<vmem>>, vector<2x16x128xf32>
    tpu.vector_store %arg8[%c0_12, %c0_13, %c0_14], %16 {strides = array<i32>} : memref<2x81x128xf32, #tpu.memory_space<vmem>>, vector<2x16x128xf32>,
    %cst_15 = arith.constant 0.000000e+00 : f32
    %18 = vector.broadcast %cst_15 : f32 to vector<2x1x128xf32>
    %c0_16 = arith.constant 0 : index
    %c80 = arith.constant 80 : index
    %c0_17 = arith.constant 0 : index
    %19 = vector.load %arg8[%c0_16, %c80, %c0_17] : memref<2x81x128xf32, #tpu.memory_space<vmem>>, vector<2x1x128xf32>
    tpu.vector_store %arg8[%c0_16, %c80, %c0_17], %18 {strides = array<i32>} : memref<2x81x128xf32, #tpu.memory_space<vmem>>, vector<2x1x128xf32>,
    %c0_18 = arith.constant 0 : index
    %c16 = arith.constant 16 : index
    %c0_19 = arith.constant 0 : index
    %20 = vector.load %arg8[%c0_18, %c16, %c0_19] : memref<2x81x128xf32, #tpu.memory_space<vmem>>, vector<2x64x128xf32>
    tpu.vector_store %arg8[%c0_18, %c16, %c0_19], %15 {strides = array<i32>} : memref<2x81x128xf32, #tpu.memory_space<vmem>>, vector<2x64x128xf32>,
    %c0_20 = arith.constant 0 : index
    %c0_21 = arith.constant 0 : index
    %21 = vector.load %arg5[%c0_20, %c0_21] : memref<10x128xf32, #tpu.memory_space<vmem>>, vector<10x128xf32>
    %22 = vector.extract_strided_slice %21 {offsets = [0, 0], sizes = [1, 128], strides = [1, 1]} : vector<10x128xf32> to vector<1x128xf32>
    %23 = vector.shape_cast %22 : vector<1x128xf32> to vector<128xf32>
    %24 = vector.shape_cast %23 : vector<128xf32> to vector<1x1x128xf32>
    %c0_22 = arith.constant 0 : index
    %c7 = arith.constant 7 : index
    %c0_23 = arith.constant 0 : index
    %25 = vector.load %arg8[%c0_22, %c7, %c0_23] : memref<2x81x128xf32, #tpu.memory_space<vmem>>, vector<2x64x128xf32>
    %26 = vector.broadcast %24 : vector<1x1x128xf32> to vector<2x64x128xf32>
    %27 = arith.mulf %26, %25 : vector<2x64x128xf32>
    %28 = vector.extract_strided_slice %21 {offsets = [1, 0], sizes = [1, 128], strides = [1, 1]} : vector<10x128xf32> to vector<1x128xf32>
    %29 = vector.shape_cast %28 : vector<1x128xf32> to vector<128xf32>
    %30 = vector.shape_cast %29 : vector<128xf32> to vector<1x1x128xf32>
    %c0_24 = arith.constant 0 : index
    %c8 = arith.constant 8 : index
    %c0_25 = arith.constant 0 : index
    %31 = vector.load %arg8[%c0_24, %c8, %c0_25] : memref<2x81x128xf32, #tpu.memory_space<vmem>>, vector<2x64x128xf32>
    %32 = vector.broadcast %30 : vector<1x1x128xf32> to vector<2x64x128xf32>
    %33 = arith.mulf %32, %31 : vector<2x64x128xf32>
    %34 = vector.extract_strided_slice %21 {offsets = [2, 0], sizes = [1, 128], strides = [1, 1]} : vector<10x128xf32> to vector<1x128xf32>
    %35 = vector.shape_cast %34 : vector<1x128xf32> to vector<128xf32>
    %36 = vector.shape_cast %35 : vector<128xf32> to vector<1x1x128xf32>
    %c0_26 = arith.constant 0 : index
    %c9 = arith.constant 9 : index
    %c0_27 = arith.constant 0 : index
    %37 = vector.load %arg8[%c0_26, %c9, %c0_27] : memref<2x81x128xf32, #tpu.memory_space<vmem>>, vector<2x64x128xf32>
    %38 = vector.broadcast %36 : vector<1x1x128xf32> to vector<2x64x128xf32>
    %39 = arith.mulf %38, %37 : vector<2x64x128xf32>
    %40 = vector.extract_strided_slice %21 {offsets = [3, 0], sizes = [1, 128], strides = [1, 1]} : vector<10x128xf32> to vector<1x128xf32>
    %41 = vector.shape_cast %40 : vector<1x128xf32> to vector<128xf32>
    %42 = vector.shape_cast %41 : vector<128xf32> to vector<1x1x128xf32>
    %c0_28 = arith.constant 0 : index
    %c10 = arith.constant 10 : index
    %c0_29 = arith.constant 0 : index
    %43 = vector.load %arg8[%c0_28, %c10, %c0_29] : memref<2x81x128xf32, #tpu.memory_space<vmem>>, vector<2x64x128xf32>
    %44 = vector.broadcast %42 : vector<1x1x128xf32> to vector<2x64x128xf32>
    %45 = arith.mulf %44, %43 : vector<2x64x128xf32>
    %46 = arith.addf %15, %45 : vector<2x64x128xf32>
    %47 = vector.extract_strided_slice %21 {offsets = [4, 0], sizes = [1, 128], strides = [1, 1]} : vector<10x128xf32> to vector<1x128xf32>
    %48 = vector.shape_cast %47 : vector<1x128xf32> to vector<128xf32>
    %49 = vector.shape_cast %48 : vector<128xf32> to vector<1x1x128xf32>
    %c0_30 = arith.constant 0 : index
    %c11 = arith.constant 11 : index
    %c0_31 = arith.constant 0 : index
    %50 = vector.load %arg8[%c0_30, %c11, %c0_31] : memref<2x81x128xf32, #tpu.memory_space<vmem>>, vector<2x64x128xf32>
    %51 = vector.broadcast %49 : vector<1x1x128xf32> to vector<2x64x128xf32>
    %52 = arith.mulf %51, %50 : vector<2x64x128xf32>
    %53 = arith.addf %27, %52 : vector<2x64x128xf32>
    %54 = vector.extract_strided_slice %21 {offsets = [5, 0], sizes = [1, 128], strides = [1, 1]} : vector<10x128xf32> to vector<1x128xf32>
    %55 = vector.shape_cast %54 : vector<1x128xf32> to vector<128xf32>
    %56 = vector.shape_cast %55 : vector<128xf32> to vector<1x1x128xf32>
    %c0_32 = arith.constant 0 : index
    %c12 = arith.constant 12 : index
    %c0_33 = arith.constant 0 : index
    %57 = vector.load %arg8[%c0_32, %c12, %c0_33] : memref<2x81x128xf32, #tpu.memory_space<vmem>>, vector<2x64x128xf32>
    %58 = vector.broadcast %56 : vector<1x1x128xf32> to vector<2x64x128xf32>
    %59 = arith.mulf %58, %57 : vector<2x64x128xf32>
    %60 = arith.addf %33, %59 : vector<2x64x128xf32>
    %61 = vector.extract_strided_slice %21 {offsets = [6, 0], sizes = [1, 128], strides = [1, 1]} : vector<10x128xf32> to vector<1x128xf32>
    %62 = vector.shape_cast %61 : vector<1x128xf32> to vector<128xf32>
    %63 = vector.shape_cast %62 : vector<128xf32> to vector<1x1x128xf32>
    %c0_34 = arith.constant 0 : index
    %c13 = arith.constant 13 : index
    %c0_35 = arith.constant 0 : index
    %64 = vector.load %arg8[%c0_34, %c13, %c0_35] : memref<2x81x128xf32, #tpu.memory_space<vmem>>, vector<2x64x128xf32>
    %65 = vector.broadcast %63 : vector<1x1x128xf32> to vector<2x64x128xf32>
    %66 = arith.mulf %65, %64 : vector<2x64x128xf32>
    %67 = arith.addf %39, %66 : vector<2x64x128xf32>
    %68 = vector.extract_strided_slice %21 {offsets = [7, 0], sizes = [1, 128], strides = [1, 1]} : vector<10x128xf32> to vector<1x128xf32>
    %69 = vector.shape_cast %68 : vector<1x128xf32> to vector<128xf32>
    %70 = vector.shape_cast %69 : vector<128xf32> to vector<1x1x128xf32>
    %c0_36 = arith.constant 0 : index
    %c14 = arith.constant 14 : index
    %c0_37 = arith.constant 0 : index
    %71 = vector.load %arg8[%c0_36, %c14, %c0_37] : memref<2x81x128xf32, #tpu.memory_space<vmem>>, vector<2x64x128xf32>
    %72 = vector.broadcast %70 : vector<1x1x128xf32> to vector<2x64x128xf32>
    %73 = arith.mulf %72, %71 : vector<2x64x128xf32>
    %74 = arith.addf %46, %73 : vector<2x64x128xf32>
    %75 = vector.extract_strided_slice %21 {offsets = [8, 0], sizes = [1, 128], strides = [1, 1]} : vector<10x128xf32> to vector<1x128xf32>
    %76 = vector.shape_cast %75 : vector<1x128xf32> to vector<128xf32>
    %77 = vector.shape_cast %76 : vector<128xf32> to vector<1x1x128xf32>
    %c0_38 = arith.constant 0 : index
    %c15 = arith.constant 15 : index
    %c0_39 = arith.constant 0 : index
    %78 = vector.load %arg8[%c0_38, %c15, %c0_39] : memref<2x81x128xf32, #tpu.memory_space<vmem>>, vector<2x64x128xf32>
    %79 = vector.broadcast %77 : vector<1x1x128xf32> to vector<2x64x128xf32>
    %80 = arith.mulf %79, %78 : vector<2x64x128xf32>
    %81 = arith.addf %53, %80 : vector<2x64x128xf32>
    %82 = vector.extract_strided_slice %21 {offsets = [9, 0], sizes = [1, 128], strides = [1, 1]} : vector<10x128xf32> to vector<1x128xf32>
    %83 = vector.shape_cast %82 : vector<1x128xf32> to vector<128xf32>
    %84 = vector.shape_cast %83 : vector<128xf32> to vector<1x1x128xf32>
    %c0_40 = arith.constant 0 : index
    %c16_41 = arith.constant 16 : index
    %c0_42 = arith.constant 0 : index
    %85 = vector.load %arg8[%c0_40, %c16_41, %c0_42] : memref<2x81x128xf32, #tpu.memory_space<vmem>>, vector<2x64x128xf32>
    %86 = vector.broadcast %84 : vector<1x1x128xf32> to vector<2x64x128xf32>
    %87 = arith.mulf %86, %85 : vector<2x64x128xf32>
    %88 = arith.addf %60, %87 : vector<2x64x128xf32>
    %c0_43 = arith.constant 0 : index
    %c0_44 = arith.constant 0 : index
    %89 = vector.load %arg6[%c0_43, %c0_44] : memref<1x128xf32, #tpu.memory_space<vmem>>, vector<1x128xf32>
    %90 = vector.shape_cast %89 : vector<1x128xf32> to vector<128xf32>
    %91 = vector.shape_cast %90 : vector<128xf32> to vector<1x1x128xf32>
    %c0_45 = arith.constant 0 : index
    %c17 = arith.constant 17 : index
    %c0_46 = arith.constant 0 : index
    %92 = vector.load %arg8[%c0_45, %c17, %c0_46] : memref<2x81x128xf32, #tpu.memory_space<vmem>>, vector<2x64x128xf32>
    %93 = vector.broadcast %91 : vector<1x1x128xf32> to vector<2x64x128xf32>
    %94 = arith.mulf %93, %92 : vector<2x64x128xf32>
    %95 = arith.addf %67, %94 : vector<2x64x128xf32>
    %96 = arith.addf %74, %81 : vector<2x64x128xf32>
    %97 = arith.addf %88, %95 : vector<2x64x128xf32>
    %98 = arith.addf %96, %97 : vector<2x64x128xf32>
    %c0_47 = arith.constant 0 : index
    %c0_48 = arith.constant 0 : index
    %c0_49 = arith.constant 0 : index
    %99 = vector.load %arg1[%c0_47, %c0_48, %c0_49] : memref<2x64x128xf32, #tpu.memory_space<vmem>>, vector<2x64x128xf32>
    %100 = arith.addf %98, %99 : vector<2x64x128xf32>
    %c0_50 = arith.constant 0 : index
    %c0_51 = arith.constant 0 : index
    %c0_52 = arith.constant 0 : index
    %101 = vector.load %arg7[%c0_50, %c0_51, %c0_52] : memref<2x64x128xf32, #tpu.memory_space<vmem>>, vector<2x64x128xf32>
    tpu.vector_store %arg7[%c0_50, %c0_51, %c0_52], %100 {strides = array<i32>} : memref<2x64x128xf32, #tpu.memory_space<vmem>>, vector<2x64x128xf32>,
    return
  }
  func.func @transform_0(%arg0: i32) -> (i32, i32, i32) {
    %c0_i32 = arith.constant 0 : i32
    %c0_i32_0 = arith.constant 0 : i32
    %c0_i32_1 = arith.constant 0 : i32
    return %arg0, %c0_i32, %c0_i32_0 : i32, i32, i32
  }
  func.func @transform_1(%arg0: i32) -> (i32, i32) {
    %c0_i32 = arith.constant 0 : i32
    %c0_i32_0 = arith.constant 0 : i32
    %c0_i32_1 = arith.constant 0 : i32
    return %c0_i32, %c0_i32_0 : i32, i32
  }
  func.func @transform_2(%arg0: i32) -> (i32, i32) {
    %c0_i32 = arith.constant 0 : i32
    %c0_i32_0 = arith.constant 0 : i32
    %c0_i32_1 = arith.constant 0 : i32
    return %c0_i32, %c0_i32_0 : i32, i32
  }
  func.func @transform_3(%arg0: i32) -> (i32, i32) {
    %c0_i32 = arith.constant 0 : i32
    %c0_i32_0 = arith.constant 0 : i32
    %c0_i32_1 = arith.constant 0 : i32
    return %c0_i32, %c0_i32_0 : i32, i32
  }
  func.func @transform_4(%arg0: i32) -> (i32, i32) {
    %c0_i32 = arith.constant 0 : i32
    %c0_i32_0 = arith.constant 0 : i32
    %c0_i32_1 = arith.constant 0 : i32
    return %c0_i32, %c0_i32_0 : i32, i32
  }
  func.func @transform_5(%arg0: i32) -> (i32, i32) {
    %c0_i32 = arith.constant 0 : i32
    %c0_i32_0 = arith.constant 0 : i32
    %c0_i32_1 = arith.constant 0 : i32
    return %c0_i32, %c0_i32_0 : i32, i32
  }
  func.func @transform_6(%arg0: i32) -> (i32, i32, i32) {
    %c0_i32 = arith.constant 0 : i32
    %c0_i32_0 = arith.constant 0 : i32
    %c0_i32_1 = arith.constant 0 : i32
    return %arg0, %c0_i32, %c0_i32_0 : i32, i32, i32
  }
}

module attributes {stable_mosaic.version = 11 : i64} {
  func.func @dfsmn_kernel(%arg0: i32, %arg1: memref<2x64x128xf32, #tpu.memory_space<vmem>>, %arg2: memref<128x256xbf16, #tpu.memory_space<vmem>>, %arg3: memref<1x256xf32, #tpu.memory_space<vmem>>, %arg4: memref<256x128xbf16, #tpu.memory_space<vmem>>, %arg5: memref<10x128xf32, #tpu.memory_space<vmem>>, %arg6: memref<1x128xf32, #tpu.memory_space<vmem>>, %arg7: memref<2x64x128xf32, #tpu.memory_space<vmem>>, %arg8: memref<2x81x128xf32, #tpu.memory_space<vmem>>) attributes {dimension_semantics = [#tpu.dimension_semantics<parallel>], iteration_bounds = array<i64: 2>, scalar_prefetch = 0 : i64, scratch_operands = 1 : i64, tpu.core_type = #tpu.core_type<tc>, window_params = [{transform_indices = @transform_0, window_bounds = array<i64: 2, 64, 128>}, {pipeline_mode = #tpu.pipeline_mode<synchronous>, transform_indices = @transform_1, window_bounds = array<i64: 128, 256>}, {pipeline_mode = #tpu.pipeline_mode<synchronous>, transform_indices = @transform_2, window_bounds = array<i64: 1, 256>}, {pipeline_mode = #tpu.pipeline_mode<synchronous>, transform_indices = @transform_3, window_bounds = array<i64: 256, 128>}, {pipeline_mode = #tpu.pipeline_mode<synchronous>, transform_indices = @transform_4, window_bounds = array<i64: 10, 128>}, {pipeline_mode = #tpu.pipeline_mode<synchronous>, transform_indices = @transform_5, window_bounds = array<i64: 1, 128>}, {transform_indices = @transform_6, window_bounds = array<i64: 2, 64, 128>}]} {
    %c0 = arith.constant 0 : index
    %c0_0 = arith.constant 0 : index
    %c0_1 = arith.constant 0 : index
    %0 = vector.load %arg1[%c0, %c0_0, %c0_1] : memref<2x64x128xf32, #tpu.memory_space<vmem>>, vector<2x64x128xf32>
    %1 = vector.shape_cast %0 : vector<2x64x128xf32> to vector<128x128xf32>
    %2 = arith.truncf %1 : vector<128x128xf32> to vector<128x128xbf16>
    %cst = arith.constant 0.000000e+00 : f32
    %3 = vector.broadcast %cst : f32 to vector<128x128xf32>
    %c0_2 = arith.constant 0 : index
    %c0_3 = arith.constant 0 : index
    %4 = vector.load %arg2[%c0_2, %c0_3] : memref<128x256xbf16, #tpu.memory_space<vmem>>, vector<128x256xbf16>
    %cst_4 = arith.constant dense<0.000000e+00> : vector<128x256xf32>
    %5 = tpu.matmul %2, %4, %cst_4 {dimension_numbers = #tpu.dot_dimension_numbers<[1], [0], [0], [1], [0, 0, 1, 1], [], []>} : vector<128x128xbf16>, vector<128x256xbf16>, vector<128x256xf32> -> vector<128x256xf32>
    %c0_5 = arith.constant 0 : index
    %c0_6 = arith.constant 0 : index
    %6 = vector.load %arg3[%c0_5, %c0_6] : memref<1x256xf32, #tpu.memory_space<vmem>>, vector<1x256xf32>
    %7 = vector.broadcast %6 : vector<1x256xf32> to vector<128x256xf32>
    %8 = arith.addf %5, %7 : vector<128x256xf32>
    %cst_7 = arith.constant 0.000000e+00 : f32
    %9 = vector.broadcast %cst_7 : f32 to vector<128x256xf32>
    %10 = arith.maximumf %8, %9 : vector<128x256xf32>
    %11 = arith.truncf %10 : vector<128x256xf32> to vector<128x256xbf16>
    %c0_8 = arith.constant 0 : index
    %c0_9 = arith.constant 0 : index
    %12 = vector.load %arg4[%c0_8, %c0_9] : memref<256x128xbf16, #tpu.memory_space<vmem>>, vector<256x128xbf16>
    %cst_10 = arith.constant dense<0.000000e+00> : vector<128x128xf32>
    %13 = tpu.matmul %11, %12, %cst_10 {dimension_numbers = #tpu.dot_dimension_numbers<[1], [0], [0], [1], [0, 0, 1, 1], [], []>} : vector<128x256xbf16>, vector<256x128xbf16>, vector<128x128xf32> -> vector<128x128xf32>
    %14 = arith.addf %3, %13 : vector<128x128xf32>
    %15 = vector.shape_cast %14 : vector<128x128xf32> to vector<2x64x128xf32>
    %cst_11 = arith.constant 0.000000e+00 : f32
    %16 = vector.broadcast %cst_11 : f32 to vector<2x16x128xf32>
    %c0_12 = arith.constant 0 : index
    %c0_13 = arith.constant 0 : index
    %c0_14 = arith.constant 0 : index
    %17 = vector.load %arg8[%c0_12, %c0_13, %c0_14] : memref<2x81x128xf32, #tpu.memory_space<vmem>>, vector<2x16x128xf32>
    tpu.vector_store %arg8[%c0_12, %c0_13, %c0_14], %16 {strides = array<i32>} : memref<2x81x128xf32, #tpu.memory_space<vmem>>, vector<2x16x128xf32>,
    %cst_15 = arith.constant 0.000000e+00 : f32
    %18 = vector.broadcast %cst_15 : f32 to vector<2x1x128xf32>
    %c0_16 = arith.constant 0 : index
    %c80 = arith.constant 80 : index
    %c0_17 = arith.constant 0 : index
    %19 = vector.load %arg8[%c0_16, %c80, %c0_17] : memref<2x81x128xf32, #tpu.memory_space<vmem>>, vector<2x1x128xf32>
    tpu.vector_store %arg8[%c0_16, %c80, %c0_17], %18 {strides = array<i32>} : memref<2x81x128xf32, #tpu.memory_space<vmem>>, vector<2x1x128xf32>,
    %c0_18 = arith.constant 0 : index
    %c16 = arith.constant 16 : index
    %c0_19 = arith.constant 0 : index
    %20 = vector.load %arg8[%c0_18, %c16, %c0_19] : memref<2x81x128xf32, #tpu.memory_space<vmem>>, vector<2x64x128xf32>
    tpu.vector_store %arg8[%c0_18, %c16, %c0_19], %15 {strides = array<i32>} : memref<2x81x128xf32, #tpu.memory_space<vmem>>, vector<2x64x128xf32>,
    %c0_20 = arith.constant 0 : index
    %c0_21 = arith.constant 0 : index
    %21 = vector.load %arg5[%c0_20, %c0_21] : memref<10x128xf32, #tpu.memory_space<vmem>>, vector<10x128xf32>
    %22 = vector.extract_strided_slice %21 {offsets = [0, 0], sizes = [1, 128], strides = [1, 1]} : vector<10x128xf32> to vector<1x128xf32>
    %23 = vector.shape_cast %22 : vector<1x128xf32> to vector<128xf32>
    %24 = vector.shape_cast %23 : vector<128xf32> to vector<1x1x128xf32>
    %c0_22 = arith.constant 0 : index
    %c7 = arith.constant 7 : index
    %c0_23 = arith.constant 0 : index
    %25 = vector.load %arg8[%c0_22, %c7, %c0_23] : memref<2x81x128xf32, #tpu.memory_space<vmem>>, vector<2x64x128xf32>
    %26 = vector.broadcast %24 : vector<1x1x128xf32> to vector<2x64x128xf32>
    %27 = arith.mulf %26, %25 : vector<2x64x128xf32>
    %28 = vector.extract_strided_slice %21 {offsets = [1, 0], sizes = [1, 128], strides = [1, 1]} : vector<10x128xf32> to vector<1x128xf32>
    %29 = vector.shape_cast %28 : vector<1x128xf32> to vector<128xf32>
    %30 = vector.shape_cast %29 : vector<128xf32> to vector<1x1x128xf32>
    %c0_24 = arith.constant 0 : index
    %c8 = arith.constant 8 : index
    %c0_25 = arith.constant 0 : index
    %31 = vector.load %arg8[%c0_24, %c8, %c0_25] : memref<2x81x128xf32, #tpu.memory_space<vmem>>, vector<2x64x128xf32>
    %32 = vector.broadcast %30 : vector<1x1x128xf32> to vector<2x64x128xf32>
    %33 = arith.mulf %32, %31 : vector<2x64x128xf32>
    %34 = vector.extract_strided_slice %21 {offsets = [2, 0], sizes = [1, 128], strides = [1, 1]} : vector<10x128xf32> to vector<1x128xf32>
    %35 = vector.shape_cast %34 : vector<1x128xf32> to vector<128xf32>
    %36 = vector.shape_cast %35 : vector<128xf32> to vector<1x1x128xf32>
    %c0_26 = arith.constant 0 : index
    %c9 = arith.constant 9 : index
    %c0_27 = arith.constant 0 : index
    %37 = vector.load %arg8[%c0_26, %c9, %c0_27] : memref<2x81x128xf32, #tpu.memory_space<vmem>>, vector<2x64x128xf32>
    %38 = vector.broadcast %36 : vector<1x1x128xf32> to vector<2x64x128xf32>
    %39 = arith.mulf %38, %37 : vector<2x64x128xf32>
    %40 = vector.extract_strided_slice %21 {offsets = [3, 0], sizes = [1, 128], strides = [1, 1]} : vector<10x128xf32> to vector<1x128xf32>
    %41 = vector.shape_cast %40 : vector<1x128xf32> to vector<128xf32>
    %42 = vector.shape_cast %41 : vector<128xf32> to vector<1x1x128xf32>
    %c0_28 = arith.constant 0 : index
    %c10 = arith.constant 10 : index
    %c0_29 = arith.constant 0 : index
    %43 = vector.load %arg8[%c0_28, %c10, %c0_29] : memref<2x81x128xf32, #tpu.memory_space<vmem>>, vector<2x64x128xf32>
    %44 = vector.broadcast %42 : vector<1x1x128xf32> to vector<2x64x128xf32>
    %45 = arith.mulf %44, %43 : vector<2x64x128xf32>
    %46 = arith.addf %15, %45 : vector<2x64x128xf32>
    %47 = vector.extract_strided_slice %21 {offsets = [4, 0], sizes = [1, 128], strides = [1, 1]} : vector<10x128xf32> to vector<1x128xf32>
    %48 = vector.shape_cast %47 : vector<1x128xf32> to vector<128xf32>
    %49 = vector.shape_cast %48 : vector<128xf32> to vector<1x1x128xf32>
    %c0_30 = arith.constant 0 : index
    %c11 = arith.constant 11 : index
    %c0_31 = arith.constant 0 : index
    %50 = vector.load %arg8[%c0_30, %c11, %c0_31] : memref<2x81x128xf32, #tpu.memory_space<vmem>>, vector<2x64x128xf32>
    %51 = vector.broadcast %49 : vector<1x1x128xf32> to vector<2x64x128xf32>
    %52 = arith.mulf %51, %50 : vector<2x64x128xf32>
    %53 = arith.addf %27, %52 : vector<2x64x128xf32>
    %54 = vector.extract_strided_slice %21 {offsets = [5, 0], sizes = [1, 128], strides = [1, 1]} : vector<10x128xf32> to vector<1x128xf32>
    %55 = vector.shape_cast %54 : vector<1x128xf32> to vector<128xf32>
    %56 = vector.shape_cast %55 : vector<128xf32> to vector<1x1x128xf32>
    %c0_32 = arith.constant 0 : index
    %c12 = arith.constant 12 : index
    %c0_33 = arith.constant 0 : index
    %57 = vector.load %arg8[%c0_32, %c12, %c0_33] : memref<2x81x128xf32, #tpu.memory_space<vmem>>, vector<2x64x128xf32>
    %58 = vector.broadcast %56 : vector<1x1x128xf32> to vector<2x64x128xf32>
    %59 = arith.mulf %58, %57 : vector<2x64x128xf32>
    %60 = arith.addf %33, %59 : vector<2x64x128xf32>
    %61 = vector.extract_strided_slice %21 {offsets = [6, 0], sizes = [1, 128], strides = [1, 1]} : vector<10x128xf32> to vector<1x128xf32>
    %62 = vector.shape_cast %61 : vector<1x128xf32> to vector<128xf32>
    %63 = vector.shape_cast %62 : vector<128xf32> to vector<1x1x128xf32>
    %c0_34 = arith.constant 0 : index
    %c13 = arith.constant 13 : index
    %c0_35 = arith.constant 0 : index
    %64 = vector.load %arg8[%c0_34, %c13, %c0_35] : memref<2x81x128xf32, #tpu.memory_space<vmem>>, vector<2x64x128xf32>
    %65 = vector.broadcast %63 : vector<1x1x128xf32> to vector<2x64x128xf32>
    %66 = arith.mulf %65, %64 : vector<2x64x128xf32>
    %67 = arith.addf %39, %66 : vector<2x64x128xf32>
    %68 = vector.extract_strided_slice %21 {offsets = [7, 0], sizes = [1, 128], strides = [1, 1]} : vector<10x128xf32> to vector<1x128xf32>
    %69 = vector.shape_cast %68 : vector<1x128xf32> to vector<128xf32>
    %70 = vector.shape_cast %69 : vector<128xf32> to vector<1x1x128xf32>
    %c0_36 = arith.constant 0 : index
    %c14 = arith.constant 14 : index
    %c0_37 = arith.constant 0 : index
    %71 = vector.load %arg8[%c0_36, %c14, %c0_37] : memref<2x81x128xf32, #tpu.memory_space<vmem>>, vector<2x64x128xf32>
    %72 = vector.broadcast %70 : vector<1x1x128xf32> to vector<2x64x128xf32>
    %73 = arith.mulf %72, %71 : vector<2x64x128xf32>
    %74 = arith.addf %46, %73 : vector<2x64x128xf32>
    %75 = vector.extract_strided_slice %21 {offsets = [8, 0], sizes = [1, 128], strides = [1, 1]} : vector<10x128xf32> to vector<1x128xf32>
    %76 = vector.shape_cast %75 : vector<1x128xf32> to vector<128xf32>
    %77 = vector.shape_cast %76 : vector<128xf32> to vector<1x1x128xf32>
    %c0_38 = arith.constant 0 : index
    %c15 = arith.constant 15 : index
    %c0_39 = arith.constant 0 : index
    %78 = vector.load %arg8[%c0_38, %c15, %c0_39] : memref<2x81x128xf32, #tpu.memory_space<vmem>>, vector<2x64x128xf32>
    %79 = vector.broadcast %77 : vector<1x1x128xf32> to vector<2x64x128xf32>
    %80 = arith.mulf %79, %78 : vector<2x64x128xf32>
    %81 = arith.addf %53, %80 : vector<2x64x128xf32>
    %82 = vector.extract_strided_slice %21 {offsets = [9, 0], sizes = [1, 128], strides = [1, 1]} : vector<10x128xf32> to vector<1x128xf32>
    %83 = vector.shape_cast %82 : vector<1x128xf32> to vector<128xf32>
    %84 = vector.shape_cast %83 : vector<128xf32> to vector<1x1x128xf32>
    %c0_40 = arith.constant 0 : index
    %c16_41 = arith.constant 16 : index
    %c0_42 = arith.constant 0 : index
    %85 = vector.load %arg8[%c0_40, %c16_41, %c0_42] : memref<2x81x128xf32, #tpu.memory_space<vmem>>, vector<2x64x128xf32>
    %86 = vector.broadcast %84 : vector<1x1x128xf32> to vector<2x64x128xf32>
    %87 = arith.mulf %86, %85 : vector<2x64x128xf32>
    %88 = arith.addf %60, %87 : vector<2x64x128xf32>
    %c0_43 = arith.constant 0 : index
    %c0_44 = arith.constant 0 : index
    %89 = vector.load %arg6[%c0_43, %c0_44] : memref<1x128xf32, #tpu.memory_space<vmem>>, vector<1x128xf32>
    %90 = vector.shape_cast %89 : vector<1x128xf32> to vector<128xf32>
    %91 = vector.shape_cast %90 : vector<128xf32> to vector<1x1x128xf32>
    %c0_45 = arith.constant 0 : index
    %c17 = arith.constant 17 : index
    %c0_46 = arith.constant 0 : index
    %92 = vector.load %arg8[%c0_45, %c17, %c0_46] : memref<2x81x128xf32, #tpu.memory_space<vmem>>, vector<2x64x128xf32>
    %93 = vector.broadcast %91 : vector<1x1x128xf32> to vector<2x64x128xf32>
    %94 = arith.mulf %93, %92 : vector<2x64x128xf32>
    %95 = arith.addf %67, %94 : vector<2x64x128xf32>
    %96 = arith.addf %74, %81 : vector<2x64x128xf32>
    %97 = arith.addf %88, %95 : vector<2x64x128xf32>
    %98 = arith.addf %96, %97 : vector<2x64x128xf32>
    %c0_47 = arith.constant 0 : index
    %c0_48 = arith.constant 0 : index
    %c0_49 = arith.constant 0 : index
    %99 = vector.load %arg1[%c0_47, %c0_48, %c0_49] : memref<2x64x128xf32, #tpu.memory_space<vmem>>, vector<2x64x128xf32>
    %100 = arith.addf %98, %99 : vector<2x64x128xf32>
    %c0_50 = arith.constant 0 : index
    %c0_51 = arith.constant 0 : index
    %c0_52 = arith.constant 0 : index
    %101 = vector.load %arg7[%c0_50, %c0_51, %c0_52] : memref<2x64x128xf32, #tpu.memory_space<vmem>>, vector<2x64x128xf32>
    tpu.vector_store %arg7[%c0_50, %c0_51, %c0_52], %100 {strides = array<i32>} : memref<2x64x128xf32, #tpu.memory_space<vmem>>, vector<2x64x128xf32>,
    return
  }
  func.func @transform_0(%arg0: i32) -> (i32, i32, i32) {
    %c0_i32 = arith.constant 0 : i32
    %c0_i32_0 = arith.constant 0 : i32
    %c0_i32_1 = arith.constant 0 : i32
    return %arg0, %c0_i32, %c0_i32_0 : i32, i32, i32
  }
  func.func @transform_1(%arg0: i32) -> (i32, i32) {
    %c0_i32 = arith.constant 0 : i32
    %c0_i32_0 = arith.constant 0 : i32
    %c0_i32_1 = arith.constant 0 : i32
    return %c0_i32, %c0_i32_0 : i32, i32
  }
  func.func @transform_2(%arg0: i32) -> (i32, i32) {
    %c0_i32 = arith.constant 0 : i32
    %c0_i32_0 = arith.constant 0 : i32
    %c0_i32_1 = arith.constant 0 : i32
    return %c0_i32, %c0_i32_0 : i32, i32
  }
  func.func @transform_3(%arg0: i32) -> (i32, i32) {
    %c0_i32 = arith.constant 0 : i32
    %c0_i32_0 = arith.constant 0 : i32
    %c0_i32_1 = arith.constant 0 : i32
    return %c0_i32, %c0_i32_0 : i32, i32
  }
  func.func @transform_4(%arg0: i32) -> (i32, i32) {
    %c0_i32 = arith.constant 0 : i32
    %c0_i32_0 = arith.constant 0 : i32
    %c0_i32_1 = arith.constant 0 : i32
    return %c0_i32, %c0_i32_0 : i32, i32
  }
  func.func @transform_5(%arg0: i32) -> (i32, i32) {
    %c0_i32 = arith.constant 0 : i32
    %c0_i32_0 = arith.constant 0 : i32
    %c0_i32_1 = arith.constant 0 : i32
    return %c0_i32, %c0_i32_0 : i32, i32
  }
  func.func @transform_6(%arg0: i32) -> (i32, i32, i32) {
    %c0_i32 = arith.constant 0 : i32
    %c0_i32_0 = arith.constant 0 : i32
    %c0_i32_1 = arith.constant 0 : i32
    return %arg0, %c0_i32, %c0_i32_0 : i32, i32, i32
  }
}

</mosaic_0001>

<llo_original>
// kernel: tpu_custom_call.1
$region0: #{tpu_custom_call.1}
  #allocation0 [shape = 'u32[]', space=smem, size = 0x4, offset = 0x4, fixed_abs, tag = 'smem constant byte address 0x4 - core index']
  #allocation1 [shape = 'u32[144,128]{1,0:T(1,128)}', space=vmem, size = 0x12000, scoped, tag = 'internal scratch']
  #allocation2 [shape = 'f32[2,81,128]{2,1,0:T(8,128)}', space=vmem, size = 0x16000, scoped, tag = 'scratch operand']
  %s0 = inlined_call_operand.hbm [shape: f32[4,64,128], index: 0, kind: input, shape index: {}]
  %s1 = inlined_call_operand.hbm [shape: bf16[128,256], index: 1, kind: input, shape index: {}]
  %s2 = inlined_call_operand.vmem [shape: f32[1,256], index: 2, kind: input, shape index: {}]
  %s3 = inlined_call_operand.hbm [shape: bf16[256,128], index: 3, kind: input, shape index: {}]
  %s4 = inlined_call_operand.hbm [shape: f32[10,128], index: 4, kind: input, shape index: {}]
  %s5 = inlined_call_operand.vmem [shape: f32[1,128], index: 5, kind: input, shape index: {}]
  %s6 = inlined_call_operand.hbm [shape: f32[4,64,128], index: 6, kind: output, shape index: {}]
  %s7 = sld [smem:[#allocation0]]
  $region73: #{tpu_custom_call.1} parent=0
    _
  %s9 = ssub.s32 1, %s7
  %s10 = scalar_select 0, %s9, %s7
  $region1: #{tpu_custom_call.1} parent=0
    #allocation3 [shape = 'u8[131072]{0}', space=vmem, size = 0x20000, scoped, tag = 'input window, operand 0']
    #allocation4 [shape = 's32[2]{0}', space=sflag, size = 0x8, scoped, tag = 'scoped memory for tpu_custom_call.1']
    #allocation5 [shape = 's32[2]{0}', space=sflag, size = 0x8, scoped, tag = 'scoped memory for tpu_custom_call.1']
    #allocation6 [shape = 'u8[65536]{0}', space=vmem, size = 0x10000, scoped, tag = 'input window, operand 1, single buffered']
    #allocation7 [shape = 's32[1]{0}', space=sflag, size = 0x4, scoped, tag = 'scoped memory for tpu_custom_call.1']
    #allocation8 [shape = 'u8[65536]{0}', space=vmem, size = 0x10000, scoped, tag = 'input window, operand 3, single buffered']
    #allocation9 [shape = 'u8[8192]{0}', space=vmem, size = 0x2000, scoped, tag = 'input window, operand 4, single buffered']
    #allocation10 [shape = 's32[1]{0}', space=sflag, size = 0x4, scoped, tag = 'scoped memory for tpu_custom_call.1']
    #allocation11 [shape = 'u8[131072]{0}', space=vmem, size = 0x20000, scoped, tag = 'output window, operand 0']
    %11 = vsyncpa [#allocation4], 0
    %s12 = scalar_lea.sflag [#allocation4], 1
    %13 = vsyncpa %s12, 0
    %14 = vsyncpa [#allocation7], 0
    %15 = vsyncpa [#allocation10], 0
    %16 = vsyncpa [#allocation5], 0
    %s17 = scalar_lea.sflag [#allocation5], 1
    %18 = vsyncpa %s17, 0
    loop: start=0, step=1, limit=4
    $region2: #{tpu_custom_call.1} parent=1 // loop_pre_header
      _
    $region3: #{tpu_custom_call.1} parent=1 // loop_header
      %s20 = sphi 0, %s24
      %p21 = scmp.ge.s32.totalorder %s20, 4
      %s30 = sphi 0, %s32
      %s33 = sphi 0, %s30
      %s34 = sphi 0, %s33
      %s50 = sphi 0, %s34
      %s54 = sphi 0, %s54
      %s56 = sphi 0, %s54
      %s57 = sphi 0, %s56
      %s71 = sphi 0, %s57
      %s75 = sphi 0, %s75
      %s77 = sphi 0, %s75
      %s78 = sphi 0, %s77
      %s92 = sphi 0, %s78
      %s96 = sphi 0, %s96
      %s98 = sphi 0, %s96
      %s99 = sphi 0, %s98
      %s113 = sphi 0, %s99
      %s117 = sphi 0, %s117
      %s119 = sphi 0, %s117
      %s120 = sphi 0, %s119
      %s134 = sphi 0, %s120
      %s138 = sphi 0, %s138
      %s140 = sphi 0, %s138
      %s141 = sphi 0, %s140
      %s155 = sphi 0, %s141
      %s161 = sphi 0, %s163
      %s164 = sphi 0, %s161
      %s165 = sphi 0, %s164
      %s181 = sphi 0, %s165
    $region4: #{tpu_custom_call.1} parent=1 // loop_header_branch
      %23 = sbr.rel (%p21) target = $region8
    $region5: #{tpu_custom_call.1} parent=1 // loop_body
      %s25 = ssub.s32 %s20, 1
      %s26 = ssub.s32 %s20, 2
      %s27 = sadd.s32 %s20, 1
      %s28 = ssub.s32 %s20, %s27
      %p29 = scmp.eq.s32.totalorder %s28, 0
      %s31 = sadd.s32 %s30, 1
      %s32 = scalar_select %p29, %s30, %s31
      %p35 = pneg %p29
      %p36 = scmp.eq.s32.totalorder %s20, 1
      %p37 = por %p35, %p36
      %p38 = scmp.ne.s32.totalorder %s30, %s33
      %p39 = scmp.eq.s32.totalorder %s20, 0
      %p40 = por %p38, %p39
      %p41 = scmp.ne.s32.totalorder %s30, %s33
      %p42 = scmp.eq.s32.totalorder %s25, 1
      %p43 = por %p41, %p42
      %p44 = scmp.ne.s32.totalorder %s33, %s34
      %p45 = scmp.eq.s32.totalorder %s25, 0
      %p46 = por %p44, %p45
      %p47 = scmp.ne.s32.totalorder %s33, %s34
      %p48 = scmp.eq.s32.totalorder %s26, 1
      %p49 = por %p47, %p48
      %p51 = scmp.ne.s32.totalorder %s34, %s50
      %p52 = scmp.eq.s32.totalorder %s26, 0
      %p53 = por %p51, %p52
      %s55 = sadd.s32 %s54, 1
      %p58 = scmp.eq.s32.totalorder %s20, 1
      %p59 = scmp.ne.s32.totalorder %s54, %s56
      %p60 = scmp.eq.s32.totalorder %s20, 0
      %p61 = por %p59, %p60
      %p62 = scmp.ne.s32.totalorder %s54, %s56
      %p63 = scmp.eq.s32.totalorder %s25, 1
      %p64 = por %p62, %p63
      %p65 = scmp.ne.s32.totalorder %s56, %s57
      %p66 = scmp.eq.s32.totalorder %s25, 0
      %p67 = por %p65, %p66
      %p68 = scmp.ne.s32.totalorder %s56, %s57
      %p69 = scmp.eq.s32.totalorder %s26, 1
      %p70 = por %p68, %p69
      %p72 = scmp.ne.s32.totalorder %s57, %s71
      %p73 = scmp.eq.s32.totalorder %s26, 0
      %p74 = por %p72, %p73
      %s76 = sadd.s32 %s75, 1
      %p79 = scmp.eq.s32.totalorder %s20, 1
      %p80 = scmp.ne.s32.totalorder %s75, %s77
      %p81 = scmp.eq.s32.totalorder %s20, 0
      %p82 = por %p80, %p81
      %p83 = scmp.ne.s32.totalorder %s75, %s77
      %p84 = scmp.eq.s32.totalorder %s25, 1
      %p85 = por %p83, %p84
      %p86 = scmp.ne.s32.totalorder %s77, %s78
      %p87 = scmp.eq.s32.totalorder %s25, 0
      %p88 = por %p86, %p87
      %p89 = scmp.ne.s32.totalorder %s77, %s78
      %p90 = scmp.eq.s32.totalorder %s26, 1
      %p91 = por %p89, %p90
      %p93 = scmp.ne.s32.totalorder %s78, %s92
      %p94 = scmp.eq.s32.totalorder %s26, 0
      %p95 = por %p93, %p94
      %s97 = sadd.s32 %s96, 1
      %p100 = scmp.eq.s32.totalorder %s20, 1
      %p101 = scmp.ne.s32.totalorder %s96, %s98
      %p102 = scmp.eq.s32.totalorder %s20, 0
      %p103 = por %p101, %p102
      %p104 = scmp.ne.s32.totalorder %s96, %s98
      %p105 = scmp.eq.s32.totalorder %s25, 1
      %p106 = por %p104, %p105
      %p107 = scmp.ne.s32.totalorder %s98, %s99
      %p108 = scmp.eq.s32.totalorder %s25, 0
      %p109 = por %p107, %p108
      %p110 = scmp.ne.s32.totalorder %s98, %s99
      %p111 = scmp.eq.s32.totalorder %s26, 1
      %p112 = por %p110, %p111
      %p114 = scmp.ne.s32.totalorder %s99, %s113
      %p115 = scmp.eq.s32.totalorder %s26, 0
      %p116 = por %p114, %p115
      %s118 = sadd.s32 %s117, 1
      %p121 = scmp.eq.s32.totalorder %s20, 1
      %p122 = scmp.ne.s32.totalorder %s117, %s119
      %p123 = scmp.eq.s32.totalorder %s20, 0
      %p124 = por %p122, %p123
      %p125 = scmp.ne.s32.totalorder %s117, %s119
      %p126 = scmp.eq.s32.totalorder %s25, 1
      %p127 = por %p125, %p126
      %p128 = scmp.ne.s32.totalorder %s119, %s120
      %p129 = scmp.eq.s32.totalorder %s25, 0
      %p130 = por %p128, %p129
      %p131 = scmp.ne.s32.totalorder %s119, %s120
      %p132 = scmp.eq.s32.totalorder %s26, 1
      %p133 = por %p131, %p132
      %p135 = scmp.ne.s32.totalorder %s120, %s134
      %p136 = scmp.eq.s32.totalorder %s26, 0
      %p137 = por %p135, %p136
      %s139 = sadd.s32 %s138, 1
      %p142 = scmp.eq.s32.totalorder %s20, 1
      %p143 = scmp.ne.s32.totalorder %s138, %s140
      %p144 = scmp.eq.s32.totalorder %s20, 0
      %p145 = por %p143, %p144
      %p146 = scmp.ne.s32.totalorder %s138, %s140
      %p147 = scmp.eq.s32.totalorder %s25, 1
      %p148 = por %p146, %p147
      %p149 = scmp.ne.s32.totalorder %s140, %s141
      %p150 = scmp.eq.s32.totalorder %s25, 0
      %p151 = por %p149, %p150
      %p152 = scmp.ne.s32.totalorder %s140, %s141
      %p153 = scmp.eq.s32.totalorder %s26, 1
      %p154 = por %p152, %p153
      %p156 = scmp.ne.s32.totalorder %s141, %s155
      %p157 = scmp.eq.s32.totalorder %s26, 0
      %p158 = por %p156, %p157
      %s159 = ssub.s32 %s20, %s27
      %p160 = scmp.eq.s32.totalorder %s159, 0
      %s162 = sadd.s32 %s161, 1
      %s163 = scalar_select %p160, %s161, %s162
      %p166 = pneg %p160
      %p167 = scmp.eq.s32.totalorder %s20, 1
      %p168 = por %p166, %p167
      %p169 = scmp.ne.s32.totalorder %s161, %s164
      %p170 = scmp.eq.s32.totalorder %s20, 0
      %p171 = por %p169, %p170
      %p172 = scmp.ne.s32.totalorder %s161, %s164
      %p173 = scmp.eq.s32.totalorder %s25, 1
      %p174 = por %p172, %p173
      %p175 = scmp.ne.s32.totalorder %s164, %s165
      %p176 = scmp.eq.s32.totalorder %s25, 0
      %p177 = por %p175, %p176
      %p178 = scmp.ne.s32.totalorder %s164, %s165
      %p179 = scmp.eq.s32.totalorder %s26, 1
      %p180 = por %p178, %p179
      %p182 = scmp.ne.s32.totalorder %s165, %s181
      %p183 = scmp.eq.s32.totalorder %s26, 0
      %p184 = por %p182, %p183
      %p185 = scmp.le.s32.totalorder 1, %s20
      %p186 = scmp.lt.s32.totalorder %s20, 3
      %p187 = pnand %p185, %p186
      %p188 = pneg %p187
      // Predicated region
      $region9: #{tpu_custom_call.1} parent=5 // pred_check
        _
      $region10: #{tpu_custom_call.1} parent=5 // pred_check_branch
        %190 = sbr.rel (%p187) target = $region12
      $region11: #{tpu_custom_call.1} parent=5 // pred_region
        %s191 = ssub.s32 %s20, 1
        // Predicated region
        $region13: #{tpu_custom_call.1} parent=11 // pred_check
          %p192 = pneg %p67
        $region14: #{tpu_custom_call.1} parent=11 // pred_check_branch
          %194 = sbr.rel (%p192) target = $region16
        $region15: #{tpu_custom_call.1} parent=11 // pred_region
          %s196 = ssub.s32 2048, 2048
          %197 = vsyncadd [#allocation7], %s196
          %s198 = sshll.u32 [#allocation6], 4
          %s199 = int_to_ptr.vmem [resolvable:$true] %s198
          %204 = dma.hbm_to_vmem [thread:$0]  %s1, 2048, %s199, [#allocation7], 128, 128, 8
        $region16: #{tpu_custom_call.1} parent=11 // pred_fallthru
          _
        // Predicated region
        $region17: #{tpu_custom_call.1} parent=11 // pred_check
          %p205 = pneg %p88
        $region18: #{tpu_custom_call.1} parent=11 // pred_check_branch
          %207 = sbr.rel (%p205) target = $region20
        $region19: #{tpu_custom_call.1} parent=11 // pred_region
          _
        $region20: #{tpu_custom_call.1} parent=11 // pred_fallthru
          _
        // Predicated region
        $region21: #{tpu_custom_call.1} parent=11 // pred_check
          %p208 = pneg %p109
        $region22: #{tpu_custom_call.1} parent=11 // pred_check_branch
          %210 = sbr.rel (%p208) target = $region24
        $region23: #{tpu_custom_call.1} parent=11 // pred_region
          %s212 = ssub.s32 2048, 2048
          %213 = vsyncadd [#allocation7], %s212
          %s214 = sshll.u32 [#allocation8], 4
          %s215 = int_to_ptr.vmem [resolvable:$true] %s214
          %220 = dma.hbm_to_vmem [thread:$0]  %s3, 2048, %s215, [#allocation7], 64, 64, 4
        $region24: #{tpu_custom_call.1} parent=11 // pred_fallthru
          _
        // Predicated region
        $region25: #{tpu_custom_call.1} parent=11 // pred_check
          %p221 = pneg %p130
        $region26: #{tpu_custom_call.1} parent=11 // pred_check_branch
          %223 = sbr.rel (%p221) target = $region28
        $region27: #{tpu_custom_call.1} parent=11 // pred_region
          %s225 = ssub.s32 256, 256
          %226 = vsyncadd [#allocation10], %s225
          %s227 = sshll.u32 [#allocation9], 4
          %s228 = int_to_ptr.vmem [resolvable:$true] %s227
          %233 = dma.hbm_to_vmem [thread:$0]  %s4, 256, %s228, [#allocation10], 128, 128, 8
        $region28: #{tpu_custom_call.1} parent=11 // pred_fallthru
          _
        // Predicated region
        $region29: #{tpu_custom_call.1} parent=11 // pred_check
          %p234 = pneg %p151
        $region30: #{tpu_custom_call.1} parent=11 // pred_check_branch
          %236 = sbr.rel (%p234) target = $region32
        $region31: #{tpu_custom_call.1} parent=11 // pred_region
          _
        $region32: #{tpu_custom_call.1} parent=11 // pred_fallthru
          _
      $region12: #{tpu_custom_call.1} parent=5 // pred_fallthru
        _
      %p237 = scmp.lt.s32.totalorder %s20, 2
      // Predicated region
      $region33: #{tpu_custom_call.1} parent=5 // pred_check
        %p238 = pneg %p237
      $region34: #{tpu_custom_call.1} parent=5 // pred_check_branch
        %240 = sbr.rel (%p238) target = $region36
      $region35: #{tpu_custom_call.1} parent=5 // pred_region
        // Predicated region
        $region37: #{tpu_custom_call.1} parent=35 // pred_check
          %p241 = pneg %p40
        $region38: #{tpu_custom_call.1} parent=35 // pred_check_branch
          %243 = sbr.rel (%p241) target = $region40
        $region39: #{tpu_custom_call.1} parent=35 // pred_region
          %s244 = sand.u32 %s30, 1
          %s245 = scalar_lea.sflag [#allocation4], %s244
          %s246 = sand.u32 %s30, 1
          %s247 = smul.addr %s246, 128
          %s248 = scalar_lea.vmem [#allocation3], %s247
          %s249 = smul.u32 2, %s20
          %s251 = ssub.s32 2048, 2048
          %252 = vsyncadd %s245, %s251
          %s253 = smul.addr %s249, 8
          %s254 = smul.addr %s253, 128
          %s255 = scalar_lea.hbm %s0, %s254
          %s256 = sshll.u32 %s248, 4
          %s257 = int_to_ptr.vmem [resolvable:$true] %s256
          %262 = dma.hbm_to_vmem [thread:$0]  %s255, 2048, %s257, %s245, 128, 128, 8
        $region40: #{tpu_custom_call.1} parent=35 // pred_fallthru
          _
      $region36: #{tpu_custom_call.1} parent=5 // pred_fallthru
        _
      %p263 = scmp.le.s32.totalorder 1, %s20
      %p264 = scmp.lt.s32.totalorder %s20, 3
      %p265 = pnand %p263, %p264
      %p266 = pneg %p265
      // Predicated region
      $region41: #{tpu_custom_call.1} parent=5 // pred_check
        _
      $region42: #{tpu_custom_call.1} parent=5 // pred_check_branch
        %268 = sbr.rel (%p265) target = $region44
      $region43: #{tpu_custom_call.1} parent=5 // pred_region
        %s269 = ssub.s32 %s20, 1
        %s270 = sand.u32 %s33, 1
        %s271 = scalar_lea.sflag [#allocation4], %s270
        %s272 = sand.u32 %s33, 1
        %s273 = smul.addr %s272, 128
        %s274 = scalar_lea.vmem [#allocation3], %s273
        // Predicated region
        $region45: #{tpu_custom_call.1} parent=43 // pred_check
          %p275 = pneg %p46
        $region46: #{tpu_custom_call.1} parent=43 // pred_check_branch
          %277 = sbr.rel (%p275) target = $region48
        $region47: #{tpu_custom_call.1} parent=43 // pred_region
          %278 = dma.done %s271, 2048
        $region48: #{tpu_custom_call.1} parent=43 // pred_fallthru
          _
        // Predicated region
        $region49: #{tpu_custom_call.1} parent=43 // pred_check
          %p279 = pneg %p67
        $region50: #{tpu_custom_call.1} parent=43 // pred_check_branch
          %281 = sbr.rel (%p279) target = $region52
        $region51: #{tpu_custom_call.1} parent=43 // pred_region
          %282 = dma.done [#allocation7], 2048
        $region52: #{tpu_custom_call.1} parent=43 // pred_fallthru
          _
        // Predicated region
        $region53: #{tpu_custom_call.1} parent=43 // pred_check
          %p283 = pneg %p109
        $region54: #{tpu_custom_call.1} parent=43 // pred_check_branch
          %285 = sbr.rel (%p283) target = $region56
        $region55: #{tpu_custom_call.1} parent=43 // pred_region
          %286 = dma.done [#allocation7], 2048
        $region56: #{tpu_custom_call.1} parent=43 // pred_fallthru
          _
        // Predicated region
        $region57: #{tpu_custom_call.1} parent=43 // pred_check
          %p287 = pneg %p130
        $region58: #{tpu_custom_call.1} parent=43 // pred_check_branch
          %289 = sbr.rel (%p287) target = $region60
        $region59: #{tpu_custom_call.1} parent=43 // pred_region
          %290 = dma.done [#allocation10], 256
        $region60: #{tpu_custom_call.1} parent=43 // pred_fallthru
          _
        %s291 = sand.u32 %s33, 1
        %s292 = scalar_lea.sflag [#allocation4], %s291
        %s293 = sand.u32 %s33, 1
        %s294 = smul.addr %s293, 128
        %s295 = scalar_lea.vmem [#allocation3], %s294
        %p296 = pneg %p46
        %p297 = pneg %p43
        %p298 = pneg %p67
        %p299 = pneg %p64
        %p300 = pneg %p88
        %p301 = pneg %p85
        %p302 = pneg %p109
        %p303 = pneg %p106
        %p304 = pneg %p130
        %p305 = pneg %p127
        %p306 = pneg %p151
        %p307 = pneg %p148
        %p308 = pneg %p177
        %p309 = pneg %p174
        %s310 = sand.u32 %s164, 1
        %s311 = scalar_lea.sflag [#allocation5], %s310
        %s312 = sand.u32 %s164, 1
        %s313 = smul.addr %s312, 128
        %s314 = scalar_lea.vmem [#allocation11], %s313
        %s315 = smul.u32 2, %s25
        %s316 = smul.u32 2, %s25
        %v318 = vld [vmem:[%s274] sm:$0xff]
        %v319 = vld [vmem:[%s274 + $0x8] sm:$0xff]
        %v320 = vld [vmem:[%s274 + $0x10] sm:$0xff]
        %v321 = vld [vmem:[%s274 + $0x18] sm:$0xff]
        %v322 = vld [vmem:[%s274 + $0x20] sm:$0xff]
        %v323 = vld [vmem:[%s274 + $0x28] sm:$0xff]
        %v324 = vld [vmem:[%s274 + $0x30] sm:$0xff]
        %v325 = vld [vmem:[%s274 + $0x38] sm:$0xff]
        %v326 = vld [vmem:[%s274 + $0x40] sm:$0xff]
        %v327 = vld [vmem:[%s274 + $0x48] sm:$0xff]
        %v328 = vld [vmem:[%s274 + $0x50] sm:$0xff]
        %v329 = vld [vmem:[%s274 + $0x58] sm:$0xff]
        %v330 = vld [vmem:[%s274 + $0x60] sm:$0xff]
        %v331 = vld [vmem:[%s274 + $0x68] sm:$0xff]
        %v332 = vld [vmem:[%s274 + $0x70] sm:$0xff]
        %v333 = vld [vmem:[%s274 + $0x78] sm:$0xff]
        %v334 = vpack.c.bf16 %v319, %v318
        %v335 = vpack.c.bf16 %v321, %v320
        %v336 = vpack.c.bf16 %v323, %v322
        %v337 = vpack.c.bf16 %v325, %v324
        %v338 = vpack.c.bf16 %v327, %v326
        %v339 = vpack.c.bf16 %v329, %v328
        %v340 = vpack.c.bf16 %v331, %v330
        %v341 = vpack.c.bf16 %v333, %v332
        %v342 = vld [vmem:[#allocation6] sm:$0xff]
        %v343 = vld [vmem:[#allocation6 + $0x8] sm:$0xff]
        %v344 = vld [vmem:[#allocation6 + $0x10] sm:$0xff]
        %v345 = vld [vmem:[#allocation6 + $0x18] sm:$0xff]
        %v346 = vld [vmem:[#allocation6 + $0x20] sm:$0xff]
        %v347 = vld [vmem:[#allocation6 + $0x28] sm:$0xff]
        %v348 = vld [vmem:[#allocation6 + $0x30] sm:$0xff]
        %v349 = vld [vmem:[#allocation6 + $0x38] sm:$0xff]
        %v350 = vld [vmem:[#allocation6 + $0x40] sm:$0xff]
        %v351 = vld [vmem:[#allocation6 + $0x48] sm:$0xff]
        %v352 = vld [vmem:[#allocation6 + $0x50] sm:$0xff]
        %v353 = vld [vmem:[#allocation6 + $0x58] sm:$0xff]
        %v354 = vld [vmem:[#allocation6 + $0x60] sm:$0xff]
        %v355 = vld [vmem:[#allocation6 + $0x68] sm:$0xff]
        %v356 = vld [vmem:[#allocation6 + $0x70] sm:$0xff]
        %v357 = vld [vmem:[#allocation6 + $0x78] sm:$0xff]
        %v358 = vld [vmem:[%s2] sm:$0x3]
        %v360 = vlaneseq
        %v361 = vshrl.u32 %v360, 7
        %v362 = vsub.s32 0, %v361
        %v363 = vrot.slane %v358, %v362
        %v364 = vlaneseq
        %v365 = vshrl.u32 %v364, 7
        %v366 = vsub.s32 1, %v365
        %v367 = vrot.slane %v358, %v366
        %v386 = vunpack.c.l.b16 %v342
        %v387 = vunpack.c.h.b16 %v342
        %v388 = vunpack.c.l.b16 %v343
        %v389 = vunpack.c.h.b16 %v343
        %v390 = vunpack.c.l.b16 %v344
        %v391 = vunpack.c.h.b16 %v344
        %v392 = vunpack.c.l.b16 %v345
        %v393 = vunpack.c.h.b16 %v345
        %v394 = vunpack.c.l.b16 %v346
        %v395 = vunpack.c.h.b16 %v346
        %v396 = vunpack.c.l.b16 %v347
        %v397 = vunpack.c.h.b16 %v347
        %v398 = vunpack.c.l.b16 %v348
        %v399 = vunpack.c.h.b16 %v348
        %v400 = vunpack.c.l.b16 %v349
        %v401 = vunpack.c.h.b16 %v349
        %v402 = vunpack.c.l.b16 %v350
        %v403 = vunpack.c.h.b16 %v350
        %v404 = vunpack.c.l.b16 %v351
        %v405 = vunpack.c.h.b16 %v351
        %v406 = vunpack.c.l.b16 %v352
        %v407 = vunpack.c.h.b16 %v352
        %v408 = vunpack.c.l.b16 %v353
        %v409 = vunpack.c.h.b16 %v353
        %v410 = vunpack.c.l.b16 %v354
        %v411 = vunpack.c.h.b16 %v354
        %v412 = vunpack.c.l.b16 %v355
        %v413 = vunpack.c.h.b16 %v355
        %v414 = vunpack.c.l.b16 %v356
        %v415 = vunpack.c.h.b16 %v356
        %v416 = vunpack.c.l.b16 %v357
        %v417 = vunpack.c.h.b16 %v357
        %v418 = vpack.c.b16 %v388, %v386
        %v419 = vpack.c.b16 %v389, %v387
        %v420 = vpack.c.b16 %v392, %v390
        %v421 = vpack.c.b16 %v393, %v391
        %v422 = vpack.c.b16 %v396, %v394
        %v423 = vpack.c.b16 %v397, %v395
        %v424 = vpack.c.b16 %v400, %v398
        %v425 = vpack.c.b16 %v401, %v399
        %v426 = vpack.c.b16 %v404, %v402
        %v427 = vpack.c.b16 %v405, %v403
        %v428 = vpack.c.b16 %v408, %v406
        %v429 = vpack.c.b16 %v409, %v407
        %v430 = vpack.c.b16 %v412, %v410
        %v431 = vpack.c.b16 %v413, %v411
        %v432 = vpack.c.b16 %v416, %v414
        %v433 = vpack.c.b16 %v417, %v415
        %450 = vmatprep.subr.bf16.mxu0 %v433
        %451 = vmatpush1.bf16.msra.mxu0 %v432
        %452 = vmatprep.subr.bf16.mxu0 %v431
        %453 = vmatpush1.bf16.msra.mxu0 %v430
        %454 = vmatprep.subr.bf16.mxu0 %v429
        %455 = vmatpush1.bf16.msra.mxu0 %v428
        %456 = vmatprep.subr.bf16.mxu0 %v427
        %457 = vmatpush1.bf16.msra.mxu0 %v426
        %458 = vmatprep.subr.bf16.mxu0 %v425
        %459 = vmatpush1.bf16.msra.mxu0 %v424
        %460 = vmatprep.subr.bf16.mxu0 %v423
        %461 = vmatpush1.bf16.msra.mxu0 %v422
        %462 = vmatprep.subr.bf16.mxu0 %v421
        %463 = vmatpush1.bf16.msra.mxu0 %v420
        %464 = vmatprep.subr.bf16.mxu0 %v419
        %465 = vmatpush1.bf16.msra.mxu0 %v418
        %466 = vmatprep.subr.bf16.mxu0 0
        %467 = vmatpush2.bf16.msra.mxu0 0
        %468 = vmatprep.subr.bf16.mxu0 0
        %469 = vmatpush2.bf16.msra.mxu0 0
        %470 = vmatprep.subr.bf16.mxu0 0
        %471 = vmatpush2.bf16.msra.mxu0 0
        %472 = vmatprep.subr.bf16.mxu0 0
        %473 = vmatpush2.bf16.msra.mxu0 0
        %474 = vmatprep.subr.bf16.mxu0 0
        %475 = vmatpush2.bf16.msra.mxu0 0
        %476 = vmatprep.subr.bf16.mxu0 0
        %477 = vmatpush2.bf16.msra.mxu0 0
        %478 = vmatprep.subr.bf16.mxu0 0
        %479 = vmatpush2.bf16.msra.mxu0 0
        %480 = vmatprep.subr.bf16.mxu0 0
        %481 = vmatpush2.bf16.msra.mxu0 0
        %482 = vmatprep.mubr.bf16.mxu0 0
        %483 = vmatmul.mubr.bf16.gmra.mxu0 %v334
        %v484 = vpop.f32.mrf.mxu0
        %v485 = vadd.f32 %v363, %v484
        %v486 = vpop.f32.mrf.mxu0
        %v487 = vadd.f32 %v367, %v486
        %v488 = vpop.f32.mrf.mxu0
        %v489 = vadd.f32 %v363, %v488
        %v490 = vpop.f32.mrf.mxu0
        %v491 = vadd.f32 %v367, %v490
        %492 = vmatprep.mubr.bf16.mxu0 0
        %493 = vmatmul.mubr.bf16.gmra.mxu0 %v335
        %v494 = vpop.f32.mrf.mxu0
        %v495 = vadd.f32 %v363, %v494
        %v496 = vpop.f32.mrf.mxu0
        %v497 = vadd.f32 %v367, %v496
        %v498 = vpop.f32.mrf.mxu0
        %v499 = vadd.f32 %v363, %v498
        %v500 = vpop.f32.mrf.mxu0
        %v501 = vadd.f32 %v367, %v500
        %502 = vmatprep.mubr.bf16.mxu0 0
        %503 = vmatmul.mubr.bf16.gmra.mxu0 %v336
        %v504 = vpop.f32.mrf.mxu0
        %v505 = vadd.f32 %v363, %v504
        %v506 = vpop.f32.mrf.mxu0
        %v507 = vadd.f32 %v367, %v506
        %v508 = vpop.f32.mrf.mxu0
        %v509 = vadd.f32 %v363, %v508
        %v510 = vpop.f32.mrf.mxu0
        %v511 = vadd.f32 %v367, %v510
        %512 = vmatprep.mubr.bf16.mxu0 0
        %513 = vmatmul.mubr.bf16.gmra.mxu0 %v337
        %v514 = vpop.f32.mrf.mxu0
        %v515 = vadd.f32 %v363, %v514
        %v516 = vpop.f32.mrf.mxu0
        %v517 = vadd.f32 %v367, %v516
        %v518 = vpop.f32.mrf.mxu0
        %v519 = vadd.f32 %v363, %v518
        %v520 = vpop.f32.mrf.mxu0
        %v521 = vadd.f32 %v367, %v520
        %522 = vmatprep.mubr.bf16.mxu0 0
        %523 = vmatmul.mubr.bf16.gmra.mxu0 %v338
        %v524 = vpop.f32.mrf.mxu0
        %v525 = vadd.f32 %v363, %v524
        %v526 = vpop.f32.mrf.mxu0
        %v527 = vadd.f32 %v367, %v526
        %v528 = vpop.f32.mrf.mxu0
        %v529 = vadd.f32 %v363, %v528
        %v530 = vpop.f32.mrf.mxu0
        %v531 = vadd.f32 %v367, %v530
        %532 = vmatprep.mubr.bf16.mxu0 0
        %533 = vmatmul.mubr.bf16.gmra.mxu0 %v339
        %v534 = vpop.f32.mrf.mxu0
        %v535 = vadd.f32 %v363, %v534
        %v536 = vpop.f32.mrf.mxu0
        %v537 = vadd.f32 %v367, %v536
        %v538 = vpop.f32.mrf.mxu0
        %v539 = vadd.f32 %v363, %v538
        %v540 = vpop.f32.mrf.mxu0
        %v541 = vadd.f32 %v367, %v540
        %542 = vmatprep.mubr.bf16.mxu0 0
        %543 = vmatmul.mubr.bf16.gmra.mxu0 %v340
        %v544 = vpop.f32.mrf.mxu0
        %v545 = vadd.f32 %v363, %v544
        %v546 = vpop.f32.mrf.mxu0
        %v547 = vadd.f32 %v367, %v546
        %v548 = vpop.f32.mrf.mxu0
        %v549 = vadd.f32 %v363, %v548
        %v550 = vpop.f32.mrf.mxu0
        %v551 = vadd.f32 %v367, %v550
        %552 = vmatprep.mubr.bf16.mxu0 0
        %553 = vmatmul.mubr.bf16.gmra.mxu0 %v341
        %v554 = vpop.f32.mrf.mxu0
        %v555 = vadd.f32 %v363, %v554
        %v556 = vpop.f32.mrf.mxu0
        %v557 = vadd.f32 %v367, %v556
        %v558 = vpop.f32.mrf.mxu0
        %v559 = vadd.f32 %v363, %v558
        %v560 = vpop.f32.mrf.mxu0
        %v561 = vadd.f32 %v367, %v560
        %562 = vdwg.mxu0
        %v563 = vmax.f32 %v485, 0.0
        %v564 = vmax.f32 %v487, 0.0
        %v565 = vmax.f32 %v489, 0.0
        %v566 = vmax.f32 %v491, 0.0
        %v567 = vmax.f32 %v495, 0.0
        %v568 = vmax.f32 %v497, 0.0
        %v569 = vmax.f32 %v499, 0.0
        %v570 = vmax.f32 %v501, 0.0
        %v571 = vmax.f32 %v505, 0.0
        %v572 = vmax.f32 %v507, 0.0
        %v573 = vmax.f32 %v509, 0.0
        %v574 = vmax.f32 %v511, 0.0
        %v575 = vmax.f32 %v515, 0.0
        %v576 = vmax.f32 %v517, 0.0
        %v577 = vmax.f32 %v519, 0.0
        %v578 = vmax.f32 %v521, 0.0
        %v579 = vmax.f32 %v525, 0.0
        %v580 = vmax.f32 %v527, 0.0
        %v581 = vmax.f32 %v529, 0.0
        %v582 = vmax.f32 %v531, 0.0
        %v583 = vmax.f32 %v535, 0.0
        %v584 = vmax.f32 %v537, 0.0
        %v585 = vmax.f32 %v539, 0.0
        %v586 = vmax.f32 %v541, 0.0
        %v587 = vmax.f32 %v545, 0.0
        %v588 = vmax.f32 %v547, 0.0
        %v589 = vmax.f32 %v549, 0.0
        %v590 = vmax.f32 %v551, 0.0
        %v591 = vmax.f32 %v555, 0.0
        %v592 = vmax.f32 %v557, 0.0
        %v593 = vmax.f32 %v559, 0.0
        %v594 = vmax.f32 %v561, 0.0
        %v595 = vpack.c.bf16 %v565, %v563
        %v596 = vpack.c.bf16 %v566, %v564
        %v597 = vpack.c.bf16 %v569, %v567
        %v598 = vpack.c.bf16 %v570, %v568
        %v599 = vpack.c.bf16 %v573, %v571
        %v600 = vpack.c.bf16 %v574, %v572
        %v601 = vpack.c.bf16 %v577, %v575
        %v602 = vpack.c.bf16 %v578, %v576
        %v603 = vpack.c.bf16 %v581, %v579
        %v604 = vpack.c.bf16 %v582, %v580
        %v605 = vpack.c.bf16 %v585, %v583
        %v606 = vpack.c.bf16 %v586, %v584
        %v607 = vpack.c.bf16 %v589, %v587
        %v608 = vpack.c.bf16 %v590, %v588
        %v609 = vpack.c.bf16 %v593, %v591
        %v610 = vpack.c.bf16 %v594, %v592
        %v611 = vld [vmem:[#allocation8] sm:$0xf]
        %v612 = vld [vmem:[#allocation8 + $0x4] sm:$0xf]
        %v613 = vld [vmem:[#allocation8 + $0x8] sm:$0xf]
        %v614 = vld [vmem:[#allocation8 + $0xc] sm:$0xf]
        %v615 = vld [vmem:[#allocation8 + $0x10] sm:$0xf]
        %v616 = vld [vmem:[#allocation8 + $0x14] sm:$0xf]
        %v617 = vld [vmem:[#allocation8 + $0x18] sm:$0xf]
        %v618 = vld [vmem:[#allocation8 + $0x1c] sm:$0xf]
        %v619 = vld [vmem:[#allocation8 + $0x20] sm:$0xf]
        %v620 = vld [vmem:[#allocation8 + $0x24] sm:$0xf]
        %v621 = vld [vmem:[#allocation8 + $0x28] sm:$0xf]
        %v622 = vld [vmem:[#allocation8 + $0x2c] sm:$0xf]
        %v623 = vld [vmem:[#allocation8 + $0x30] sm:$0xf]
        %v624 = vld [vmem:[#allocation8 + $0x34] sm:$0xf]
        %v625 = vld [vmem:[#allocation8 + $0x38] sm:$0xf]
        %v626 = vld [vmem:[#allocation8 + $0x3c] sm:$0xf]
        %v627 = vld [vmem:[#allocation8 + $0x40] sm:$0xf]
        %v628 = vld [vmem:[#allocation8 + $0x44] sm:$0xf]
        %v629 = vld [vmem:[#allocation8 + $0x48] sm:$0xf]
        %v630 = vld [vmem:[#allocation8 + $0x4c] sm:$0xf]
        %v631 = vld [vmem:[#allocation8 + $0x50] sm:$0xf]
        %v632 = vld [vmem:[#allocation8 + $0x54] sm:$0xf]
        %v633 = vld [vmem:[#allocation8 + $0x58] sm:$0xf]
        %v634 = vld [vmem:[#allocation8 + $0x5c] sm:$0xf]
        %v635 = vld [vmem:[#allocation8 + $0x60] sm:$0xf]
        %v636 = vld [vmem:[#allocation8 + $0x64] sm:$0xf]
        %v637 = vld [vmem:[#allocation8 + $0x68] sm:$0xf]
        %v638 = vld [vmem:[#allocation8 + $0x6c] sm:$0xf]
        %v639 = vld [vmem:[#allocation8 + $0x70] sm:$0xf]
        %v640 = vld [vmem:[#allocation8 + $0x74] sm:$0xf]
        %v641 = vld [vmem:[#allocation8 + $0x78] sm:$0xf]
        %v642 = vld [vmem:[#allocation8 + $0x7c] sm:$0xf]
        %v675 = vunpack.c.l.b16 %v611
        %v676 = vunpack.c.l.b16 %v612
        %v677 = vunpack.c.l.b16 %v613
        %v678 = vunpack.c.l.b16 %v614
        %v679 = vunpack.c.l.b16 %v615
        %v680 = vunpack.c.l.b16 %v616
        %v681 = vunpack.c.l.b16 %v617
        %v682 = vunpack.c.l.b16 %v618
        %v683 = vunpack.c.l.b16 %v619
        %v684 = vunpack.c.l.b16 %v620
        %v685 = vunpack.c.l.b16 %v621
        %v686 = vunpack.c.l.b16 %v622
        %v687 = vunpack.c.l.b16 %v623
        %v688 = vunpack.c.l.b16 %v624
        %v689 = vunpack.c.l.b16 %v625
        %v690 = vunpack.c.l.b16 %v626
        %v691 = vunpack.c.l.b16 %v627
        %v692 = vunpack.c.l.b16 %v628
        %v693 = vunpack.c.l.b16 %v629
        %v694 = vunpack.c.l.b16 %v630
        %v695 = vunpack.c.l.b16 %v631
        %v696 = vunpack.c.l.b16 %v632
        %v697 = vunpack.c.l.b16 %v633
        %v698 = vunpack.c.l.b16 %v634
        %v699 = vunpack.c.l.b16 %v635
        %v700 = vunpack.c.l.b16 %v636
        %v701 = vunpack.c.l.b16 %v637
        %v702 = vunpack.c.l.b16 %v638
        %v703 = vunpack.c.l.b16 %v639
        %v704 = vunpack.c.l.b16 %v640
        %v705 = vunpack.c.l.b16 %v641
        %v706 = vunpack.c.l.b16 %v642
        %v707 = vpack.c.b16 %v676, %v675
        %v708 = vpack.c.b16 %v678, %v677
        %v709 = vpack.c.b16 %v680, %v679
        %v710 = vpack.c.b16 %v682, %v681
        %v711 = vpack.c.b16 %v684, %v683
        %v712 = vpack.c.b16 %v686, %v685
        %v713 = vpack.c.b16 %v688, %v687
        %v714 = vpack.c.b16 %v690, %v689
        %v715 = vpack.c.b16 %v692, %v691
        %v716 = vpack.c.b16 %v694, %v693
        %v717 = vpack.c.b16 %v696, %v695
        %v718 = vpack.c.b16 %v698, %v697
        %v719 = vpack.c.b16 %v700, %v699
        %v720 = vpack.c.b16 %v702, %v701
        %v721 = vpack.c.b16 %v704, %v703
        %v722 = vpack.c.b16 %v706, %v705
        %739 = vmatprep.subr.bf16.mxu0 0
        %740 = vmatpush1.bf16.msra.mxu0 %v714
        %741 = vmatprep.subr.bf16.mxu0 0
        %742 = vmatpush1.bf16.msra.mxu0 %v713
        %743 = vmatprep.subr.bf16.mxu0 0
        %744 = vmatpush1.bf16.msra.mxu0 %v712
        %745 = vmatprep.subr.bf16.mxu0 0
        %746 = vmatpush1.bf16.msra.mxu0 %v711
        %747 = vmatprep.subr.bf16.mxu0 0
        %748 = vmatpush1.bf16.msra.mxu0 %v710
        %749 = vmatprep.subr.bf16.mxu0 0
        %750 = vmatpush1.bf16.msra.mxu0 %v709
        %751 = vmatprep.subr.bf16.mxu0 0
        %752 = vmatpush1.bf16.msra.mxu0 %v708
        %753 = vmatprep.subr.bf16.mxu0 0
        %754 = vmatpush1.bf16.msra.mxu0 %v707
        %755 = vmatprep.subr.bf16.mxu0 0
        %756 = vmatpush2.bf16.msra.mxu0 %v722
        %757 = vmatprep.subr.bf16.mxu0 0
        %758 = vmatpush2.bf16.msra.mxu0 %v721
        %759 = vmatprep.subr.bf16.mxu0 0
        %760 = vmatpush2.bf16.msra.mxu0 %v720
        %761 = vmatprep.subr.bf16.mxu0 0
        %762 = vmatpush2.bf16.msra.mxu0 %v719
        %763 = vmatprep.subr.bf16.mxu0 0
        %764 = vmatpush2.bf16.msra.mxu0 %v718
        %765 = vmatprep.subr.bf16.mxu0 0
        %766 = vmatpush2.bf16.msra.mxu0 %v717
        %767 = vmatprep.subr.bf16.mxu0 0
        %768 = vmatpush2.bf16.msra.mxu0 %v716
        %769 = vmatprep.subr.bf16.mxu0 0
        %770 = vmatpush2.bf16.msra.mxu0 %v715
        %771 = vmatprep.mubr.bf16.mxu0 %v596
        %772 = vmatmul.mubr.bf16.gmra.mxu0 %v595
        %v773 = vpop.f32.mrf.mxu0
        %v774 = vadd.f32 0.0, %v773
        %v775 = vpop.f32.mrf.mxu0
        %v776 = vpop.f32.mrf.mxu0
        %v777 = vadd.f32 0.0, %v776
        %v778 = vpop.f32.mrf.mxu0
        %779 = vmatprep.mubr.bf16.mxu0 %v598
        %780 = vmatmul.mubr.bf16.gmra.mxu0 %v597
        %v781 = vpop.f32.mrf.mxu0
        %v782 = vadd.f32 0.0, %v781
        %v783 = vpop.f32.mrf.mxu0
        %v784 = vpop.f32.mrf.mxu0
        %v785 = vadd.f32 0.0, %v784
        %v786 = vpop.f32.mrf.mxu0
        %787 = vmatprep.mubr.bf16.mxu0 %v600
        %788 = vmatmul.mubr.bf16.gmra.mxu0 %v599
        %v789 = vpop.f32.mrf.mxu0
        %v790 = vadd.f32 0.0, %v789
        %v791 = vpop.f32.mrf.mxu0
        %v792 = vpop.f32.mrf.mxu0
        %v793 = vadd.f32 0.0, %v792
        %v794 = vpop.f32.mrf.mxu0
        %795 = vmatprep.mubr.bf16.mxu0 %v602
        %796 = vmatmul.mubr.bf16.gmra.mxu0 %v601
        %v797 = vpop.f32.mrf.mxu0
        %v798 = vadd.f32 0.0, %v797
        %v799 = vpop.f32.mrf.mxu0
        %v800 = vpop.f32.mrf.mxu0
        %v801 = vadd.f32 0.0, %v800
        %v802 = vpop.f32.mrf.mxu0
        %803 = vmatprep.mubr.bf16.mxu0 %v604
        %804 = vmatmul.mubr.bf16.gmra.mxu0 %v603
        %v805 = vpop.f32.mrf.mxu0
        %v806 = vadd.f32 0.0, %v805
        %v807 = vpop.f32.mrf.mxu0
        %v808 = vpop.f32.mrf.mxu0
        %v809 = vadd.f32 0.0, %v808
        %v810 = vpop.f32.mrf.mxu0
        %811 = vmatprep.mubr.bf16.mxu0 %v606
        %812 = vmatmul.mubr.bf16.gmra.mxu0 %v605
        %v813 = vpop.f32.mrf.mxu0
        %v814 = vadd.f32 0.0, %v813
        %v815 = vpop.f32.mrf.mxu0
        %v816 = vpop.f32.mrf.mxu0
        %v817 = vadd.f32 0.0, %v816
        %v818 = vpop.f32.mrf.mxu0
        %819 = vmatprep.mubr.bf16.mxu0 %v608
        %820 = vmatmul.mubr.bf16.gmra.mxu0 %v607
        %v821 = vpop.f32.mrf.mxu0
        %v822 = vadd.f32 0.0, %v821
        %v823 = vpop.f32.mrf.mxu0
        %v824 = vpop.f32.mrf.mxu0
        %v825 = vadd.f32 0.0, %v824
        %v826 = vpop.f32.mrf.mxu0
        %827 = vmatprep.mubr.bf16.mxu0 %v610
        %828 = vmatmul.mubr.bf16.gmra.mxu0 %v609
        %v829 = vpop.f32.mrf.mxu0
        %v830 = vadd.f32 0.0, %v829
        %v831 = vpop.f32.mrf.mxu0
        %v832 = vpop.f32.mrf.mxu0
        %v833 = vadd.f32 0.0, %v832
        %v834 = vpop.f32.mrf.mxu0
        %835 = vdwg.mxu0
        %836 = vst [vmem:[#allocation2] sm:$0xff] 0.0
        %837 = vst [vmem:[#allocation2 + $0x8] sm:$0xff] 0.0
        %838 = vst [vmem:[#allocation2 + $0x58] sm:$0xff] 0.0
        %839 = vst [vmem:[#allocation2 + $0x60] sm:$0xff] 0.0
        %840 = vst [vmem:[#allocation2 + $0x50] sm:$0x1] 0.0
        %841 = vst [vmem:[#allocation2 + $0xa8] sm:$0x1] 0.0
        %842 = vst [vmem:[#allocation2 + $0x10] sm:$0xff] %v774
        %843 = vst [vmem:[#allocation2 + $0x18] sm:$0xff] %v777
        %844 = vst [vmem:[#allocation2 + $0x20] sm:$0xff] %v782
        %845 = vst [vmem:[#allocation2 + $0x28] sm:$0xff] %v785
        %846 = vst [vmem:[#allocation2 + $0x30] sm:$0xff] %v790
        %847 = vst [vmem:[#allocation2 + $0x38] sm:$0xff] %v793
        %848 = vst [vmem:[#allocation2 + $0x40] sm:$0xff] %v798
        %849 = vst [vmem:[#allocation2 + $0x48] sm:$0xff] %v801
        %850 = vst [vmem:[#allocation2 + $0x68] sm:$0xff] %v806
        %851 = vst [vmem:[#allocation2 + $0x70] sm:$0xff] %v809
        %852 = vst [vmem:[#allocation2 + $0x78] sm:$0xff] %v814
        %853 = vst [vmem:[#allocation2 + $0x80] sm:$0xff] %v817
        %854 = vst [vmem:[#allocation2 + $0x88] sm:$0xff] %v822
        %855 = vst [vmem:[#allocation2 + $0x90] sm:$0xff] %v825
        %856 = vst [vmem:[#allocation2 + $0x98] sm:$0xff] %v830
        %857 = vst [vmem:[#allocation2 + $0xa0] sm:$0xff] %v833
        %v858 = vld [vmem:[#allocation9] sm:$0xff]
        %v859 = vld [vmem:[#allocation9 + $0x8] sm:$0x3]
        %v860 = vld [vmem:[#allocation2 + $0x7] sm:$0xff]
        %v861 = vld [vmem:[#allocation2 + $0xf] sm:$0xff]
        %v862 = vld [vmem:[#allocation2 + $0x17] sm:$0xff]
        %v863 = vld [vmem:[#allocation2 + $0x1f] sm:$0xff]
        %v864 = vld [vmem:[#allocation2 + $0x27] sm:$0xff]
        %v865 = vld [vmem:[#allocation2 + $0x2f] sm:$0xff]
        %v866 = vld [vmem:[#allocation2 + $0x37] sm:$0xff]
        %v867 = vld [vmem:[#allocation2 + $0x3f] sm:$0xff]
        %v868 = vld [vmem:[#allocation2 + $0x5f] sm:$0xff]
        %v869 = vld [vmem:[#allocation2 + $0x67] sm:$0xff]
        %v870 = vld [vmem:[#allocation2 + $0x6f] sm:$0xff]
        %v871 = vld [vmem:[#allocation2 + $0x77] sm:$0xff]
        %v872 = vld [vmem:[#allocation2 + $0x7f] sm:$0xff]
        %v873 = vld [vmem:[#allocation2 + $0x87] sm:$0xff]
        %v874 = vld [vmem:[#allocation2 + $0x8f] sm:$0xff]
        %v875 = vld [vmem:[#allocation2 + $0x97] sm:$0xff]
        %v876 = vlaneseq
        %v877 = vshrl.u32 %v876, 7
        %v878 = vsub.s32 0, %v877
        %v879 = vrot.slane %v858, %v878
        %v880 = vmul.f32 %v879, %v860
        %v881 = vmul.f32 %v879, %v861
        %v882 = vmul.f32 %v879, %v862
        %v883 = vmul.f32 %v879, %v863
        %v884 = vmul.f32 %v879, %v864
        %v885 = vmul.f32 %v879, %v865
        %v886 = vmul.f32 %v879, %v866
        %v887 = vmul.f32 %v879, %v867
        %v888 = vmul.f32 %v879, %v868
        %v889 = vmul.f32 %v879, %v869
        %v890 = vmul.f32 %v879, %v870
        %v891 = vmul.f32 %v879, %v871
        %v892 = vmul.f32 %v879, %v872
        %v893 = vmul.f32 %v879, %v873
        %v894 = vmul.f32 %v879, %v874
        %v895 = vmul.f32 %v879, %v875
        %v896 = vld [vmem:[#allocation2 + $0x8] sm:$0xff]
        %v897 = vld [vmem:[#allocation2 + $0x10] sm:$0xff]
        %v898 = vld [vmem:[#allocation2 + $0x18] sm:$0xff]
        %v899 = vld [vmem:[#allocation2 + $0x20] sm:$0xff]
        %v900 = vld [vmem:[#allocation2 + $0x28] sm:$0xff]
        %v901 = vld [vmem:[#allocation2 + $0x30] sm:$0xff]
        %v902 = vld [vmem:[#allocation2 + $0x38] sm:$0xff]
        %v903 = vld [vmem:[#allocation2 + $0x40] sm:$0xff]
        %v904 = vld [vmem:[#allocation2 + $0x60] sm:$0xff]
        %v905 = vld [vmem:[#allocation2 + $0x68] sm:$0xff]
        %v906 = vld [vmem:[#allocation2 + $0x70] sm:$0xff]
        %v907 = vld [vmem:[#allocation2 + $0x78] sm:$0xff]
        %v908 = vld [vmem:[#allocation2 + $0x80] sm:$0xff]
        %v909 = vld [vmem:[#allocation2 + $0x88] sm:$0xff]
        %v910 = vld [vmem:[#allocation2 + $0x90] sm:$0xff]
        %v911 = vld [vmem:[#allocation2 + $0x98] sm:$0xff]
        %v912 = vlaneseq
        %v913 = vshrl.u32 %v912, 7
        %v914 = vsub.s32 1, %v913
        %v915 = vrot.slane %v858, %v914
        %v916 = vmul.f32 %v915, %v896
        %v917 = vmul.f32 %v915, %v897
        %v918 = vmul.f32 %v915, %v898
        %v919 = vmul.f32 %v915, %v899
        %v920 = vmul.f32 %v915, %v900
        %v921 = vmul.f32 %v915, %v901
        %v922 = vmul.f32 %v915, %v902
        %v923 = vmul.f32 %v915, %v903
        %v924 = vmul.f32 %v915, %v904
        %v925 = vmul.f32 %v915, %v905
        %v926 = vmul.f32 %v915, %v906
        %v927 = vmul.f32 %v915, %v907
        %v928 = vmul.f32 %v915, %v908
        %v929 = vmul.f32 %v915, %v909
        %v930 = vmul.f32 %v915, %v910
        %v931 = vmul.f32 %v915, %v911
        %v932 = vld [vmem:[#allocation2 + $0x9] sm:$0xff]
        %v933 = vld [vmem:[#allocation2 + $0x11] sm:$0xff]
        %v934 = vld [vmem:[#allocation2 + $0x19] sm:$0xff]
        %v935 = vld [vmem:[#allocation2 + $0x21] sm:$0xff]
        %v936 = vld [vmem:[#allocation2 + $0x29] sm:$0xff]
        %v937 = vld [vmem:[#allocation2 + $0x31] sm:$0xff]
        %v938 = vld [vmem:[#allocation2 + $0x39] sm:$0xff]
        %v939 = vld [vmem:[#allocation2 + $0x41] sm:$0xff]
        %v940 = vld [vmem:[#allocation2 + $0x61] sm:$0xff]
        %v941 = vld [vmem:[#allocation2 + $0x69] sm:$0xff]
        %v942 = vld [vmem:[#allocation2 + $0x71] sm:$0xff]
        %v943 = vld [vmem:[#allocation2 + $0x79] sm:$0xff]
        %v944 = vld [vmem:[#allocation2 + $0x81] sm:$0xff]
        %v945 = vld [vmem:[#allocation2 + $0x89] sm:$0xff]
        %v946 = vld [vmem:[#allocation2 + $0x91] sm:$0xff]
        %v947 = vld [vmem:[#allocation2 + $0x99] sm:$0xff]
        %v948 = vlaneseq
        %v949 = vshrl.u32 %v948, 7
        %v950 = vsub.s32 2, %v949
        %v951 = vrot.slane %v858, %v950
        %v952 = vmul.f32 %v951, %v932
        %v953 = vmul.f32 %v951, %v933
        %v954 = vmul.f32 %v951, %v934
        %v955 = vmul.f32 %v951, %v935
        %v956 = vmul.f32 %v951, %v936
        %v957 = vmul.f32 %v951, %v937
        %v958 = vmul.f32 %v951, %v938
        %v959 = vmul.f32 %v951, %v939
        %v960 = vmul.f32 %v951, %v940
        %v961 = vmul.f32 %v951, %v941
        %v962 = vmul.f32 %v951, %v942
        %v963 = vmul.f32 %v951, %v943
        %v964 = vmul.f32 %v951, %v944
        %v965 = vmul.f32 %v951, %v945
        %v966 = vmul.f32 %v951, %v946
        %v967 = vmul.f32 %v951, %v947
        %v968 = vld [vmem:[#allocation2 + $0xa] sm:$0xff]
        %v969 = vld [vmem:[#allocation2 + $0x12] sm:$0xff]
        %v970 = vld [vmem:[#allocation2 + $0x1a] sm:$0xff]
        %v971 = vld [vmem:[#allocation2 + $0x22] sm:$0xff]
        %v972 = vld [vmem:[#allocation2 + $0x2a] sm:$0xff]
        %v973 = vld [vmem:[#allocation2 + $0x32] sm:$0xff]
        %v974 = vld [vmem:[#allocation2 + $0x3a] sm:$0xff]
        %v975 = vld [vmem:[#allocation2 + $0x42] sm:$0xff]
        %v976 = vld [vmem:[#allocation2 + $0x62] sm:$0xff]
        %v977 = vld [vmem:[#allocation2 + $0x6a] sm:$0xff]
        %v978 = vld [vmem:[#allocation2 + $0x72] sm:$0xff]
        %v979 = vld [vmem:[#allocation2 + $0x7a] sm:$0xff]
        %v980 = vld [vmem:[#allocation2 + $0x82] sm:$0xff]
        %v981 = vld [vmem:[#allocation2 + $0x8a] sm:$0xff]
        %v982 = vld [vmem:[#allocation2 + $0x92] sm:$0xff]
        %v983 = vld [vmem:[#allocation2 + $0x9a] sm:$0xff]
        %v984 = vlaneseq
        %v985 = vshrl.u32 %v984, 7
        %v986 = vsub.s32 3, %v985
        %v987 = vrot.slane %v858, %v986
        %v988 = vmul.f32 %v987, %v968
        %v989 = vmul.f32 %v987, %v969
        %v990 = vmul.f32 %v987, %v970
        %v991 = vmul.f32 %v987, %v971
        %v992 = vmul.f32 %v987, %v972
        %v993 = vmul.f32 %v987, %v973
        %v994 = vmul.f32 %v987, %v974
        %v995 = vmul.f32 %v987, %v975
        %v996 = vmul.f32 %v987, %v976
        %v997 = vmul.f32 %v987, %v977
        %v998 = vmul.f32 %v987, %v978
        %v999 = vmul.f32 %v987, %v979
        %v1000 = vmul.f32 %v987, %v980
        %v1001 = vmul.f32 %v987, %v981
        %v1002 = vmul.f32 %v987, %v982
        %v1003 = vmul.f32 %v987, %v983
        %v1004 = vadd.f32 %v774, %v988
        %v1005 = vadd.f32 %v777, %v989
        %v1006 = vadd.f32 %v782, %v990
        %v1007 = vadd.f32 %v785, %v991
        %v1008 = vadd.f32 %v790, %v992
        %v1009 = vadd.f32 %v793, %v993
        %v1010 = vadd.f32 %v798, %v994
        %v1011 = vadd.f32 %v801, %v995
        %v1012 = vadd.f32 %v806, %v996
        %v1013 = vadd.f32 %v809, %v997
        %v1014 = vadd.f32 %v814, %v998
        %v1015 = vadd.f32 %v817, %v999
        %v1016 = vadd.f32 %v822, %v1000
        %v1017 = vadd.f32 %v825, %v1001
        %v1018 = vadd.f32 %v830, %v1002
        %v1019 = vadd.f32 %v833, %v1003
        %v1020 = vld [vmem:[#allocation2 + $0xb] sm:$0xff]
        %v1021 = vld [vmem:[#allocation2 + $0x13] sm:$0xff]
        %v1022 = vld [vmem:[#allocation2 + $0x1b] sm:$0xff]
        %v1023 = vld [vmem:[#allocation2 + $0x23] sm:$0xff]
        %v1024 = vld [vmem:[#allocation2 + $0x2b] sm:$0xff]
        %v1025 = vld [vmem:[#allocation2 + $0x33] sm:$0xff]
        %v1026 = vld [vmem:[#allocation2 + $0x3b] sm:$0xff]
        %v1027 = vld [vmem:[#allocation2 + $0x43] sm:$0xff]
        %v1028 = vld [vmem:[#allocation2 + $0x63] sm:$0xff]
        %v1029 = vld [vmem:[#allocation2 + $0x6b] sm:$0xff]
        %v1030 = vld [vmem:[#allocation2 + $0x73] sm:$0xff]
        %v1031 = vld [vmem:[#allocation2 + $0x7b] sm:$0xff]
        %v1032 = vld [vmem:[#allocation2 + $0x83] sm:$0xff]
        %v1033 = vld [vmem:[#allocation2 + $0x8b] sm:$0xff]
        %v1034 = vld [vmem:[#allocation2 + $0x93] sm:$0xff]
        %v1035 = vld [vmem:[#allocation2 + $0x9b] sm:$0xff]
        %v1036 = vlaneseq
        %v1037 = vshrl.u32 %v1036, 7
        %v1038 = vsub.s32 4, %v1037
        %v1039 = vrot.slane %v858, %v1038
        %v1040 = vmul.f32 %v1039, %v1020
        %v1041 = vmul.f32 %v1039, %v1021
        %v1042 = vmul.f32 %v1039, %v1022
        %v1043 = vmul.f32 %v1039, %v1023
        %v1044 = vmul.f32 %v1039, %v1024
        %v1045 = vmul.f32 %v1039, %v1025
        %v1046 = vmul.f32 %v1039, %v1026
        %v1047 = vmul.f32 %v1039, %v1027
        %v1048 = vmul.f32 %v1039, %v1028
        %v1049 = vmul.f32 %v1039, %v1029
        %v1050 = vmul.f32 %v1039, %v1030
        %v1051 = vmul.f32 %v1039, %v1031
        %v1052 = vmul.f32 %v1039, %v1032
        %v1053 = vmul.f32 %v1039, %v1033
        %v1054 = vmul.f32 %v1039, %v1034
        %v1055 = vmul.f32 %v1039, %v1035
        %v1056 = vadd.f32 %v880, %v1040
        %v1057 = vadd.f32 %v881, %v1041
        %v1058 = vadd.f32 %v882, %v1042
        %v1059 = vadd.f32 %v883, %v1043
        %v1060 = vadd.f32 %v884, %v1044
        %v1061 = vadd.f32 %v885, %v1045
        %v1062 = vadd.f32 %v886, %v1046
        %v1063 = vadd.f32 %v887, %v1047
        %v1064 = vadd.f32 %v888, %v1048
        %v1065 = vadd.f32 %v889, %v1049
        %v1066 = vadd.f32 %v890, %v1050
        %v1067 = vadd.f32 %v891, %v1051
        %v1068 = vadd.f32 %v892, %v1052
        %v1069 = vadd.f32 %v893, %v1053
        %v1070 = vadd.f32 %v894, %v1054
        %v1071 = vadd.f32 %v895, %v1055
        %v1072 = vld [vmem:[#allocation2 + $0xc] sm:$0xff]
        %v1073 = vld [vmem:[#allocation2 + $0x14] sm:$0xff]
        %v1074 = vld [vmem:[#allocation2 + $0x1c] sm:$0xff]
        %v1075 = vld [vmem:[#allocation2 + $0x24] sm:$0xff]
        %v1076 = vld [vmem:[#allocation2 + $0x2c] sm:$0xff]
        %v1077 = vld [vmem:[#allocation2 + $0x34] sm:$0xff]
        %v1078 = vld [vmem:[#allocation2 + $0x3c] sm:$0xff]
        %v1079 = vld [vmem:[#allocation2 + $0x44] sm:$0xff]
        %v1080 = vld [vmem:[#allocation2 + $0x64] sm:$0xff]
        %v1081 = vld [vmem:[#allocation2 + $0x6c] sm:$0xff]
        %v1082 = vld [vmem:[#allocation2 + $0x74] sm:$0xff]
        %v1083 = vld [vmem:[#allocation2 + $0x7c] sm:$0xff]
        %v1084 = vld [vmem:[#allocation2 + $0x84] sm:$0xff]
        %v1085 = vld [vmem:[#allocation2 + $0x8c] sm:$0xff]
        %v1086 = vld [vmem:[#allocation2 + $0x94] sm:$0xff]
        %v1087 = vld [vmem:[#allocation2 + $0x9c] sm:$0xff]
        %v1088 = vlaneseq
        %v1089 = vshrl.u32 %v1088, 7
        %v1090 = vsub.s32 5, %v1089
        %v1091 = vrot.slane %v858, %v1090
        %v1092 = vmul.f32 %v1091, %v1072
        %v1093 = vmul.f32 %v1091, %v1073
        %v1094 = vmul.f32 %v1091, %v1074
        %v1095 = vmul.f32 %v1091, %v1075
        %v1096 = vmul.f32 %v1091, %v1076
        %v1097 = vmul.f32 %v1091, %v1077
        %v1098 = vmul.f32 %v1091, %v1078
        %v1099 = vmul.f32 %v1091, %v1079
        %v1100 = vmul.f32 %v1091, %v1080
        %v1101 = vmul.f32 %v1091, %v1081
        %v1102 = vmul.f32 %v1091, %v1082
        %v1103 = vmul.f32 %v1091, %v1083
        %v1104 = vmul.f32 %v1091, %v1084
        %v1105 = vmul.f32 %v1091, %v1085
        %v1106 = vmul.f32 %v1091, %v1086
        %v1107 = vmul.f32 %v1091, %v1087
        %v1108 = vadd.f32 %v916, %v1092
        %v1109 = vadd.f32 %v917, %v1093
        %v1110 = vadd.f32 %v918, %v1094
        %v1111 = vadd.f32 %v919, %v1095
        %v1112 = vadd.f32 %v920, %v1096
        %v1113 = vadd.f32 %v921, %v1097
        %v1114 = vadd.f32 %v922, %v1098
        %v1115 = vadd.f32 %v923, %v1099
        %v1116 = vadd.f32 %v924, %v1100
        %v1117 = vadd.f32 %v925, %v1101
        %v1118 = vadd.f32 %v926, %v1102
        %v1119 = vadd.f32 %v927, %v1103
        %v1120 = vadd.f32 %v928, %v1104
        %v1121 = vadd.f32 %v929, %v1105
        %v1122 = vadd.f32 %v930, %v1106
        %v1123 = vadd.f32 %v931, %v1107
        %v1124 = vld [vmem:[#allocation2 + $0xd] sm:$0xff]
        %v1125 = vld [vmem:[#allocation2 + $0x15] sm:$0xff]
        %v1126 = vld [vmem:[#allocation2 + $0x1d] sm:$0xff]
        %v1127 = vld [vmem:[#allocation2 + $0x25] sm:$0xff]
        %v1128 = vld [vmem:[#allocation2 + $0x2d] sm:$0xff]
        %v1129 = vld [vmem:[#allocation2 + $0x35] sm:$0xff]
        %v1130 = vld [vmem:[#allocation2 + $0x3d] sm:$0xff]
        %v1131 = vld [vmem:[#allocation2 + $0x45] sm:$0xff]
        %v1132 = vld [vmem:[#allocation2 + $0x65] sm:$0xff]
        %v1133 = vld [vmem:[#allocation2 + $0x6d] sm:$0xff]
        %v1134 = vld [vmem:[#allocation2 + $0x75] sm:$0xff]
        %v1135 = vld [vmem:[#allocation2 + $0x7d] sm:$0xff]
        %v1136 = vld [vmem:[#allocation2 + $0x85] sm:$0xff]
        %v1137 = vld [vmem:[#allocation2 + $0x8d] sm:$0xff]
        %v1138 = vld [vmem:[#allocation2 + $0x95] sm:$0xff]
        %v1139 = vld [vmem:[#allocation2 + $0x9d] sm:$0xff]
        %v1140 = vlaneseq
        %v1141 = vshrl.u32 %v1140, 7
        %v1142 = vsub.s32 6, %v1141
        %v1143 = vrot.slane %v858, %v1142
        %v1144 = vmul.f32 %v1143, %v1124
        %v1145 = vmul.f32 %v1143, %v1125
        %v1146 = vmul.f32 %v1143, %v1126
        %v1147 = vmul.f32 %v1143, %v1127
        %v1148 = vmul.f32 %v1143, %v1128
        %v1149 = vmul.f32 %v1143, %v1129
        %v1150 = vmul.f32 %v1143, %v1130
        %v1151 = vmul.f32 %v1143, %v1131
        %v1152 = vmul.f32 %v1143, %v1132
        %v1153 = vmul.f32 %v1143, %v1133
        %v1154 = vmul.f32 %v1143, %v1134
        %v1155 = vmul.f32 %v1143, %v1135
        %v1156 = vmul.f32 %v1143, %v1136
        %v1157 = vmul.f32 %v1143, %v1137
        %v1158 = vmul.f32 %v1143, %v1138
        %v1159 = vmul.f32 %v1143, %v1139
        %v1160 = vadd.f32 %v952, %v1144
        %v1161 = vadd.f32 %v953, %v1145
        %v1162 = vadd.f32 %v954, %v1146
        %v1163 = vadd.f32 %v955, %v1147
        %v1164 = vadd.f32 %v956, %v1148
        %v1165 = vadd.f32 %v957, %v1149
        %v1166 = vadd.f32 %v958, %v1150
        %v1167 = vadd.f32 %v959, %v1151
        %v1168 = vadd.f32 %v960, %v1152
        %v1169 = vadd.f32 %v961, %v1153
        %v1170 = vadd.f32 %v962, %v1154
        %v1171 = vadd.f32 %v963, %v1155
        %v1172 = vadd.f32 %v964, %v1156
        %v1173 = vadd.f32 %v965, %v1157
        %v1174 = vadd.f32 %v966, %v1158
        %v1175 = vadd.f32 %v967, %v1159
        %v1176 = vld [vmem:[#allocation2 + $0xe] sm:$0xff]
        %v1177 = vld [vmem:[#allocation2 + $0x16] sm:$0xff]
        %v1178 = vld [vmem:[#allocation2 + $0x1e] sm:$0xff]
        %v1179 = vld [vmem:[#allocation2 + $0x26] sm:$0xff]
        %v1180 = vld [vmem:[#allocation2 + $0x2e] sm:$0xff]
        %v1181 = vld [vmem:[#allocation2 + $0x36] sm:$0xff]
        %v1182 = vld [vmem:[#allocation2 + $0x3e] sm:$0xff]
        %v1183 = vld [vmem:[#allocation2 + $0x46] sm:$0xff]
        %v1184 = vld [vmem:[#allocation2 + $0x66] sm:$0xff]
        %v1185 = vld [vmem:[#allocation2 + $0x6e] sm:$0xff]
        %v1186 = vld [vmem:[#allocation2 + $0x76] sm:$0xff]
        %v1187 = vld [vmem:[#allocation2 + $0x7e] sm:$0xff]
        %v1188 = vld [vmem:[#allocation2 + $0x86] sm:$0xff]
        %v1189 = vld [vmem:[#allocation2 + $0x8e] sm:$0xff]
        %v1190 = vld [vmem:[#allocation2 + $0x96] sm:$0xff]
        %v1191 = vld [vmem:[#allocation2 + $0x9e] sm:$0xff]
        %v1192 = vlaneseq
        %v1193 = vshrl.u32 %v1192, 7
        %v1194 = vsub.s32 7, %v1193
        %v1195 = vrot.slane %v858, %v1194
        %v1196 = vmul.f32 %v1195, %v1176
        %v1197 = vmul.f32 %v1195, %v1177
        %v1198 = vmul.f32 %v1195, %v1178
        %v1199 = vmul.f32 %v1195, %v1179
        %v1200 = vmul.f32 %v1195, %v1180
        %v1201 = vmul.f32 %v1195, %v1181
        %v1202 = vmul.f32 %v1195, %v1182
        %v1203 = vmul.f32 %v1195, %v1183
        %v1204 = vmul.f32 %v1195, %v1184
        %v1205 = vmul.f32 %v1195, %v1185
        %v1206 = vmul.f32 %v1195, %v1186
        %v1207 = vmul.f32 %v1195, %v1187
        %v1208 = vmul.f32 %v1195, %v1188
        %v1209 = vmul.f32 %v1195, %v1189
        %v1210 = vmul.f32 %v1195, %v1190
        %v1211 = vmul.f32 %v1195, %v1191
        %v1212 = vadd.f32 %v1004, %v1196
        %v1213 = vadd.f32 %v1005, %v1197
        %v1214 = vadd.f32 %v1006, %v1198
        %v1215 = vadd.f32 %v1007, %v1199
        %v1216 = vadd.f32 %v1008, %v1200
        %v1217 = vadd.f32 %v1009, %v1201
        %v1218 = vadd.f32 %v1010, %v1202
        %v1219 = vadd.f32 %v1011, %v1203
        %v1220 = vadd.f32 %v1012, %v1204
        %v1221 = vadd.f32 %v1013, %v1205
        %v1222 = vadd.f32 %v1014, %v1206
        %v1223 = vadd.f32 %v1015, %v1207
        %v1224 = vadd.f32 %v1016, %v1208
        %v1225 = vadd.f32 %v1017, %v1209
        %v1226 = vadd.f32 %v1018, %v1210
        %v1227 = vadd.f32 %v1019, %v1211
        %v1228 = vld [vmem:[#allocation2 + $0x47] sm:$0xff]
        %v1229 = vld [vmem:[#allocation2 + $0x9f] sm:$0xff]
        %v1230 = vlaneseq
        %v1231 = vshrl.u32 %v1230, 7
        %v1232 = vsub.s32 0, %v1231
        %v1233 = vrot.slane %v859, %v1232
        %v1234 = vmul.f32 %v1233, %v861
        %v1235 = vmul.f32 %v1233, %v862
        %v1236 = vmul.f32 %v1233, %v863
        %v1237 = vmul.f32 %v1233, %v864
        %v1238 = vmul.f32 %v1233, %v865
        %v1239 = vmul.f32 %v1233, %v866
        %v1240 = vmul.f32 %v1233, %v867
        %v1241 = vmul.f32 %v1233, %v1228
        %v1242 = vmul.f32 %v1233, %v869
        %v1243 = vmul.f32 %v1233, %v870
        %v1244 = vmul.f32 %v1233, %v871
        %v1245 = vmul.f32 %v1233, %v872
        %v1246 = vmul.f32 %v1233, %v873
        %v1247 = vmul.f32 %v1233, %v874
        %v1248 = vmul.f32 %v1233, %v875
        %v1249 = vmul.f32 %v1233, %v1229
        %v1250 = vadd.f32 %v1056, %v1234
        %v1251 = vadd.f32 %v1057, %v1235
        %v1252 = vadd.f32 %v1058, %v1236
        %v1253 = vadd.f32 %v1059, %v1237
        %v1254 = vadd.f32 %v1060, %v1238
        %v1255 = vadd.f32 %v1061, %v1239
        %v1256 = vadd.f32 %v1062, %v1240
        %v1257 = vadd.f32 %v1063, %v1241
        %v1258 = vadd.f32 %v1064, %v1242
        %v1259 = vadd.f32 %v1065, %v1243
        %v1260 = vadd.f32 %v1066, %v1244
        %v1261 = vadd.f32 %v1067, %v1245
        %v1262 = vadd.f32 %v1068, %v1246
        %v1263 = vadd.f32 %v1069, %v1247
        %v1264 = vadd.f32 %v1070, %v1248
        %v1265 = vadd.f32 %v1071, %v1249
        %v1266 = vld [vmem:[#allocation2 + $0x48] sm:$0xff]
        %v1267 = vld [vmem:[#allocation2 + $0xa0] sm:$0xff]
        %v1268 = vlaneseq
        %v1269 = vshrl.u32 %v1268, 7
        %v1270 = vsub.s32 1, %v1269
        %v1271 = vrot.slane %v859, %v1270
        %v1272 = vmul.f32 %v1271, %v897
        %v1273 = vmul.f32 %v1271, %v898
        %v1274 = vmul.f32 %v1271, %v899
        %v1275 = vmul.f32 %v1271, %v900
        %v1276 = vmul.f32 %v1271, %v901
        %v1277 = vmul.f32 %v1271, %v902
        %v1278 = vmul.f32 %v1271, %v903
        %v1279 = vmul.f32 %v1271, %v1266
        %v1280 = vmul.f32 %v1271, %v905
        %v1281 = vmul.f32 %v1271, %v906
        %v1282 = vmul.f32 %v1271, %v907
        %v1283 = vmul.f32 %v1271, %v908
        %v1284 = vmul.f32 %v1271, %v909
        %v1285 = vmul.f32 %v1271, %v910
        %v1286 = vmul.f32 %v1271, %v911
        %v1287 = vmul.f32 %v1271, %v1267
        %v1288 = vadd.f32 %v1108, %v1272
        %v1289 = vadd.f32 %v1109, %v1273
        %v1290 = vadd.f32 %v1110, %v1274
        %v1291 = vadd.f32 %v1111, %v1275
        %v1292 = vadd.f32 %v1112, %v1276
        %v1293 = vadd.f32 %v1113, %v1277
        %v1294 = vadd.f32 %v1114, %v1278
        %v1295 = vadd.f32 %v1115, %v1279
        %v1296 = vadd.f32 %v1116, %v1280
        %v1297 = vadd.f32 %v1117, %v1281
        %v1298 = vadd.f32 %v1118, %v1282
        %v1299 = vadd.f32 %v1119, %v1283
        %v1300 = vadd.f32 %v1120, %v1284
        %v1301 = vadd.f32 %v1121, %v1285
        %v1302 = vadd.f32 %v1122, %v1286
        %v1303 = vadd.f32 %v1123, %v1287
        %v1304 = vld [vmem:[%s5] sm:$0x1]
        %v1305 = vld [vmem:[#allocation2 + $0x11] sm:$0xff]
        %v1306 = vld [vmem:[#allocation2 + $0x19] sm:$0xff]
        %v1307 = vld [vmem:[#allocation2 + $0x21] sm:$0xff]
        %v1308 = vld [vmem:[#allocation2 + $0x29] sm:$0xff]
        %v1309 = vld [vmem:[#allocation2 + $0x31] sm:$0xff]
        %v1310 = vld [vmem:[#allocation2 + $0x39] sm:$0xff]
        %v1311 = vld [vmem:[#allocation2 + $0x41] sm:$0xff]
        %v1312 = vld [vmem:[#allocation2 + $0x49] sm:$0xff]
        %v1313 = vld [vmem:[#allocation2 + $0x69] sm:$0xff]
        %v1314 = vld [vmem:[#allocation2 + $0x71] sm:$0xff]
        %v1315 = vld [vmem:[#allocation2 + $0x79] sm:$0xff]
        %v1316 = vld [vmem:[#allocation2 + $0x81] sm:$0xff]
        %v1317 = vld [vmem:[#allocation2 + $0x89] sm:$0xff]
        %v1318 = vld [vmem:[#allocation2 + $0x91] sm:$0xff]
        %v1319 = vld [vmem:[#allocation2 + $0x99] sm:$0xff]
        %v1320 = vld [vmem:[#allocation2 + $0xa1] sm:$0xff]
        %v1322 = vlaneseq
        %v1323 = vshrl.u32 %v1322, 7
        %v1324 = vsub.s32 0, %v1323
        %v1325 = vrot.slane %v1304, %v1324
        %v1327 = vmul.f32 %v1325, %v1305
        %v1328 = vmul.f32 %v1325, %v1306
        %v1329 = vmul.f32 %v1325, %v1307
        %v1330 = vmul.f32 %v1325, %v1308
        %v1331 = vmul.f32 %v1325, %v1309
        %v1332 = vmul.f32 %v1325, %v1310
        %v1333 = vmul.f32 %v1325, %v1311
        %v1334 = vmul.f32 %v1325, %v1312
        %v1335 = vmul.f32 %v1325, %v1313
        %v1336 = vmul.f32 %v1325, %v1314
        %v1337 = vmul.f32 %v1325, %v1315
        %v1338 = vmul.f32 %v1325, %v1316
        %v1339 = vmul.f32 %v1325, %v1317
        %v1340 = vmul.f32 %v1325, %v1318
        %v1341 = vmul.f32 %v1325, %v1319
        %v1342 = vmul.f32 %v1325, %v1320
        %v1343 = vadd.f32 %v1160, %v1327
        %v1344 = vadd.f32 %v1161, %v1328
        %v1345 = vadd.f32 %v1162, %v1329
        %v1346 = vadd.f32 %v1163, %v1330
        %v1347 = vadd.f32 %v1164, %v1331
        %v1348 = vadd.f32 %v1165, %v1332
        %v1349 = vadd.f32 %v1166, %v1333
        %v1350 = vadd.f32 %v1167, %v1334
        %v1351 = vadd.f32 %v1168, %v1335
        %v1352 = vadd.f32 %v1169, %v1336
        %v1353 = vadd.f32 %v1170, %v1337
        %v1354 = vadd.f32 %v1171, %v1338
        %v1355 = vadd.f32 %v1172, %v1339
        %v1356 = vadd.f32 %v1173, %v1340
        %v1357 = vadd.f32 %v1174, %v1341
        %v1358 = vadd.f32 %v1175, %v1342
        %v1359 = vadd.f32 %v1212, %v1250
        %v1360 = vadd.f32 %v1213, %v1251
        %v1361 = vadd.f32 %v1214, %v1252
        %v1362 = vadd.f32 %v1215, %v1253
        %v1363 = vadd.f32 %v1216, %v1254
        %v1364 = vadd.f32 %v1217, %v1255
        %v1365 = vadd.f32 %v1218, %v1256
        %v1366 = vadd.f32 %v1219, %v1257
        %v1367 = vadd.f32 %v1220, %v1258
        %v1368 = vadd.f32 %v1221, %v1259
        %v1369 = vadd.f32 %v1222, %v1260
        %v1370 = vadd.f32 %v1223, %v1261
        %v1371 = vadd.f32 %v1224, %v1262
        %v1372 = vadd.f32 %v1225, %v1263
        %v1373 = vadd.f32 %v1226, %v1264
        %v1374 = vadd.f32 %v1227, %v1265
        %v1375 = vadd.f32 %v1288, %v1343
        %v1376 = vadd.f32 %v1289, %v1344
        %v1377 = vadd.f32 %v1290, %v1345
        %v1378 = vadd.f32 %v1291, %v1346
        %v1379 = vadd.f32 %v1292, %v1347
        %v1380 = vadd.f32 %v1293, %v1348
        %v1381 = vadd.f32 %v1294, %v1349
        %v1382 = vadd.f32 %v1295, %v1350
        %v1383 = vadd.f32 %v1296, %v1351
        %v1384 = vadd.f32 %v1297, %v1352
        %v1385 = vadd.f32 %v1298, %v1353
        %v1386 = vadd.f32 %v1299, %v1354
        %v1387 = vadd.f32 %v1300, %v1355
        %v1388 = vadd.f32 %v1301, %v1356
        %v1389 = vadd.f32 %v1302, %v1357
        %v1390 = vadd.f32 %v1303, %v1358
        %v1391 = vadd.f32 %v1359, %v1375
        %v1392 = vadd.f32 %v1360, %v1376
        %v1393 = vadd.f32 %v1361, %v1377
        %v1394 = vadd.f32 %v1362, %v1378
        %v1395 = vadd.f32 %v1363, %v1379
        %v1396 = vadd.f32 %v1364, %v1380
        %v1397 = vadd.f32 %v1365, %v1381
        %v1398 = vadd.f32 %v1366, %v1382
        %v1399 = vadd.f32 %v1367, %v1383
        %v1400 = vadd.f32 %v1368, %v1384
        %v1401 = vadd.f32 %v1369, %v1385
        %v1402 = vadd.f32 %v1370, %v1386
        %v1403 = vadd.f32 %v1371, %v1387
        %v1404 = vadd.f32 %v1372, %v1388
        %v1405 = vadd.f32 %v1373, %v1389
        %v1406 = vadd.f32 %v1374, %v1390
        %v1407 = vld [vmem:[%s274] sm:$0xff]
        %v1408 = vld [vmem:[%s274 + $0x8] sm:$0xff]
        %v1409 = vld [vmem:[%s274 + $0x10] sm:$0xff]
        %v1410 = vld [vmem:[%s274 + $0x18] sm:$0xff]
        %v1411 = vld [vmem:[%s274 + $0x20] sm:$0xff]
        %v1412 = vld [vmem:[%s274 + $0x28] sm:$0xff]
        %v1413 = vld [vmem:[%s274 + $0x30] sm:$0xff]
        %v1414 = vld [vmem:[%s274 + $0x38] sm:$0xff]
        %v1415 = vld [vmem:[%s274 + $0x40] sm:$0xff]
        %v1416 = vld [vmem:[%s274 + $0x48] sm:$0xff]
        %v1417 = vld [vmem:[%s274 + $0x50] sm:$0xff]
        %v1418 = vld [vmem:[%s274 + $0x58] sm:$0xff]
        %v1419 = vld [vmem:[%s274 + $0x60] sm:$0xff]
        %v1420 = vld [vmem:[%s274 + $0x68] sm:$0xff]
        %v1421 = vld [vmem:[%s274 + $0x70] sm:$0xff]
        %v1422 = vld [vmem:[%s274 + $0x78] sm:$0xff]
        %v1423 = vadd.f32 %v1391, %v1407
        %v1424 = vadd.f32 %v1392, %v1408
        %v1425 = vadd.f32 %v1393, %v1409
        %v1426 = vadd.f32 %v1394, %v1410
        %v1427 = vadd.f32 %v1395, %v1411
        %v1428 = vadd.f32 %v1396, %v1412
        %v1429 = vadd.f32 %v1397, %v1413
        %v1430 = vadd.f32 %v1398, %v1414
        %v1431 = vadd.f32 %v1399, %v1415
        %v1432 = vadd.f32 %v1400, %v1416
        %v1433 = vadd.f32 %v1401, %v1417
        %v1434 = vadd.f32 %v1402, %v1418
        %v1435 = vadd.f32 %v1403, %v1419
        %v1436 = vadd.f32 %v1404, %v1420
        %v1437 = vadd.f32 %v1405, %v1421
        %v1438 = vadd.f32 %v1406, %v1422
        %1439 = vst [vmem:[%s314] sm:$0xff] %v1423
        %1440 = vst [vmem:[%s314 + $0x8] sm:$0xff] %v1424
        %1441 = vst [vmem:[%s314 + $0x10] sm:$0xff] %v1425
        %1442 = vst [vmem:[%s314 + $0x18] sm:$0xff] %v1426
        %1443 = vst [vmem:[%s314 + $0x20] sm:$0xff] %v1427
        %1444 = vst [vmem:[%s314 + $0x28] sm:$0xff] %v1428
        %1445 = vst [vmem:[%s314 + $0x30] sm:$0xff] %v1429
        %1446 = vst [vmem:[%s314 + $0x38] sm:$0xff] %v1430
        %1447 = vst [vmem:[%s314 + $0x40] sm:$0xff] %v1431
        %1448 = vst [vmem:[%s314 + $0x48] sm:$0xff] %v1432
        %1449 = vst [vmem:[%s314 + $0x50] sm:$0xff] %v1433
        %1450 = vst [vmem:[%s314 + $0x58] sm:$0xff] %v1434
        %1451 = vst [vmem:[%s314 + $0x60] sm:$0xff] %v1435
        %1452 = vst [vmem:[%s314 + $0x68] sm:$0xff] %v1436
        %1453 = vst [vmem:[%s314 + $0x70] sm:$0xff] %v1437
        %1454 = vst [vmem:[%s314 + $0x78] sm:$0xff] %v1438
        %s1455 = sand.u32 %s164, 1
        %s1456 = scalar_lea.sflag [#allocation5], %s1455
        %s1457 = sand.u32 %s164, 1
        %s1458 = smul.addr %s1457, 128
        %s1459 = scalar_lea.vmem [#allocation11], %s1458
        // Predicated region
        $region61: #{tpu_custom_call.1} parent=43 // pred_check
          %p1460 = pneg %p174
        $region62: #{tpu_custom_call.1} parent=43 // pred_check_branch
          %1462 = sbr.rel (%p1460) target = $region64
        $region63: #{tpu_custom_call.1} parent=43 // pred_region
          %s1463 = smul.u32 2, %s25
          %s1465 = ssub.s32 2048, 2048
          %1466 = vsyncadd %s1456, %s1465
          %s1467 = smul.addr %s1463, 8
          %s1468 = smul.addr %s1467, 128
          %s1469 = scalar_lea.hbm %s6, %s1468
          %s1470 = sshll.u32 %s1459, 4
          %s1471 = int_to_ptr.vmem [resolvable:$true] %s1470
          %1476 = dma.vmem_to_hbm [thread:$0]  %s1471, 2048, %s1469, %s1456, 128, 128, 8
        $region64: #{tpu_custom_call.1} parent=43 // pred_fallthru
          _
      $region44: #{tpu_custom_call.1} parent=5 // pred_fallthru
        _
      %p1477 = scmp.le.s32.totalorder 2, %s20
      // Predicated region
      $region65: #{tpu_custom_call.1} parent=5 // pred_check
        %p1478 = pneg %p1477
      $region66: #{tpu_custom_call.1} parent=5 // pred_check_branch
        %1480 = sbr.rel (%p1478) target = $region68
      $region67: #{tpu_custom_call.1} parent=5 // pred_region
        %s1481 = ssub.s32 %s20, 2
        // Predicated region
        $region69: #{tpu_custom_call.1} parent=67 // pred_check
          %p1482 = pneg %p180
        $region70: #{tpu_custom_call.1} parent=67 // pred_check_branch
          %1484 = sbr.rel (%p1482) target = $region72
        $region71: #{tpu_custom_call.1} parent=67 // pred_region
          %s1485 = sand.u32 %s165, 1
          %s1486 = scalar_lea.sflag [#allocation5], %s1485
          %s1487 = sand.u32 %s165, 1
          %s1488 = smul.addr %s1487, 128
          %s1489 = scalar_lea.vmem [#allocation11], %s1488
          %1490 = dma.done %s1486, 2048
        $region72: #{tpu_custom_call.1} parent=67 // pred_fallthru
          _
      $region68: #{tpu_custom_call.1} parent=5 // pred_fallthru
        _
    $region6: #{tpu_custom_call.1} parent=1 // loop_footer
      %s24 = sadd.s32 1, %s20
    $region7: #{tpu_custom_call.1} parent=1 // loop_footer_branch
      %19 = sbr.rel target = $region3
    $region8: #{tpu_custom_call.1} parent=1 // loop_exit
      _
    %1491 = vsyncpa [#allocation4], 1
    %s1492 = scalar_lea.sflag [#allocation4], 1
    %1493 = vsyncpa %s1492, 1
    %1494 = vsyncpa [#allocation7], 1
    %1495 = vsyncpa [#allocation10], 1
    %1496 = vsyncpa [#allocation5], 1
    %s1497 = scalar_lea.sflag [#allocation5], 1
    %1498 = vsyncpa %s1497, 1

// kernel: tpu_custom_call.1
$region0: #{tpu_custom_call.1}
  #allocation0 [shape = 'u32[]', space=smem, size = 0x4, offset = 0x4, fixed_abs, tag = 'smem constant byte address 0x4 - core index']
  #allocation1 [shape = 'u32[144,128]{1,0:T(1,128)}', space=vmem, size = 0x12000, scoped, tag = 'internal scratch']
  #allocation2 [shape = 'f32[2,81,128]{2,1,0:T(8,128)}', space=vmem, size = 0x16000, scoped, tag = 'scratch operand']
  %s0 = inlined_call_operand.hbm [shape: f32[4,64,128], index: 0, kind: input, shape index: {}]
  %s1 = inlined_call_operand.hbm [shape: bf16[128,256], index: 1, kind: input, shape index: {}]
  %s2 = inlined_call_operand.vmem [shape: f32[1,256], index: 2, kind: input, shape index: {}]
  %s3 = inlined_call_operand.hbm [shape: bf16[256,128], index: 3, kind: input, shape index: {}]
  %s4 = inlined_call_operand.hbm [shape: f32[10,128], index: 4, kind: input, shape index: {}]
  %s5 = inlined_call_operand.vmem [shape: f32[1,128], index: 5, kind: input, shape index: {}]
  %s6 = inlined_call_operand.hbm [shape: f32[4,64,128], index: 6, kind: output, shape index: {}]
  %s7 = sld [smem:[#allocation0]]
  $region73: #{tpu_custom_call.1} parent=0
    _
  %s9 = ssub.s32 1, %s7
  %s10 = scalar_select 0, %s9, %s7
  $region1: #{tpu_custom_call.1} parent=0
    #allocation3 [shape = 'u8[131072]{0}', space=vmem, size = 0x20000, scoped, tag = 'input window, operand 0']
    #allocation4 [shape = 's32[2]{0}', space=sflag, size = 0x8, scoped, tag = 'scoped memory for tpu_custom_call.1']
    #allocation5 [shape = 's32[2]{0}', space=sflag, size = 0x8, scoped, tag = 'scoped memory for tpu_custom_call.1']
    #allocation6 [shape = 'u8[65536]{0}', space=vmem, size = 0x10000, scoped, tag = 'input window, operand 1, single buffered']
    #allocation7 [shape = 's32[1]{0}', space=sflag, size = 0x4, scoped, tag = 'scoped memory for tpu_custom_call.1']
    #allocation8 [shape = 'u8[65536]{0}', space=vmem, size = 0x10000, scoped, tag = 'input window, operand 3, single buffered']
    #allocation9 [shape = 'u8[8192]{0}', space=vmem, size = 0x2000, scoped, tag = 'input window, operand 4, single buffered']
    #allocation10 [shape = 's32[1]{0}', space=sflag, size = 0x4, scoped, tag = 'scoped memory for tpu_custom_call.1']
    #allocation11 [shape = 'u8[131072]{0}', space=vmem, size = 0x20000, scoped, tag = 'output window, operand 0']
    %11 = vsyncpa [#allocation4], 0
    %s12 = scalar_lea.sflag [#allocation4], 1
    %13 = vsyncpa %s12, 0
    %14 = vsyncpa [#allocation7], 0
    %15 = vsyncpa [#allocation10], 0
    %16 = vsyncpa [#allocation5], 0
    %s17 = scalar_lea.sflag [#allocation5], 1
    %18 = vsyncpa %s17, 0
    loop: start=0, step=1, limit=4
    $region2: #{tpu_custom_call.1} parent=1 // loop_pre_header
      _
    $region3: #{tpu_custom_call.1} parent=1 // loop_header
      %s20 = sphi 0, %s24
      %p21 = scmp.ge.s32.totalorder %s20, 4
      %s30 = sphi 0, %s32
      %s33 = sphi 0, %s30
      %s34 = sphi 0, %s33
      %s50 = sphi 0, %s34
      %s54 = sphi 0, %s54
      %s56 = sphi 0, %s54
      %s57 = sphi 0, %s56
      %s71 = sphi 0, %s57
      %s75 = sphi 0, %s75
      %s77 = sphi 0, %s75
      %s78 = sphi 0, %s77
      %s92 = sphi 0, %s78
      %s96 = sphi 0, %s96
      %s98 = sphi 0, %s96
      %s99 = sphi 0, %s98
      %s113 = sphi 0, %s99
      %s117 = sphi 0, %s117
      %s119 = sphi 0, %s117
      %s120 = sphi 0, %s119
      %s134 = sphi 0, %s120
      %s138 = sphi 0, %s138
      %s140 = sphi 0, %s138
      %s141 = sphi 0, %s140
      %s155 = sphi 0, %s141
      %s161 = sphi 0, %s163
      %s164 = sphi 0, %s161
      %s165 = sphi 0, %s164
      %s181 = sphi 0, %s165
    $region4: #{tpu_custom_call.1} parent=1 // loop_header_branch
      %23 = sbr.rel (%p21) target = $region8
    $region5: #{tpu_custom_call.1} parent=1 // loop_body
      %s25 = ssub.s32 %s20, 1
      %s26 = ssub.s32 %s20, 2
      %s27 = sadd.s32 %s20, 1
      %s28 = ssub.s32 %s20, %s27
      %p29 = scmp.eq.s32.totalorder %s28, 0
      %s31 = sadd.s32 %s30, 1
      %s32 = scalar_select %p29, %s30, %s31
      %p35 = pneg %p29
      %p36 = scmp.eq.s32.totalorder %s20, 1
      %p37 = por %p35, %p36
      %p38 = scmp.ne.s32.totalorder %s30, %s33
      %p39 = scmp.eq.s32.totalorder %s20, 0
      %p40 = por %p38, %p39
      %p41 = scmp.ne.s32.totalorder %s30, %s33
      %p42 = scmp.eq.s32.totalorder %s25, 1
      %p43 = por %p41, %p42
      %p44 = scmp.ne.s32.totalorder %s33, %s34
      %p45 = scmp.eq.s32.totalorder %s25, 0
      %p46 = por %p44, %p45
      %p47 = scmp.ne.s32.totalorder %s33, %s34
      %p48 = scmp.eq.s32.totalorder %s26, 1
      %p49 = por %p47, %p48
      %p51 = scmp.ne.s32.totalorder %s34, %s50
      %p52 = scmp.eq.s32.totalorder %s26, 0
      %p53 = por %p51, %p52
      %s55 = sadd.s32 %s54, 1
      %p58 = scmp.eq.s32.totalorder %s20, 1
      %p59 = scmp.ne.s32.totalorder %s54, %s56
      %p60 = scmp.eq.s32.totalorder %s20, 0
      %p61 = por %p59, %p60
      %p62 = scmp.ne.s32.totalorder %s54, %s56
      %p63 = scmp.eq.s32.totalorder %s25, 1
      %p64 = por %p62, %p63
      %p65 = scmp.ne.s32.totalorder %s56, %s57
      %p66 = scmp.eq.s32.totalorder %s25, 0
      %p67 = por %p65, %p66
      %p68 = scmp.ne.s32.totalorder %s56, %s57
      %p69 = scmp.eq.s32.totalorder %s26, 1
      %p70 = por %p68, %p69
      %p72 = scmp.ne.s32.totalorder %s57, %s71
      %p73 = scmp.eq.s32.totalorder %s26, 0
      %p74 = por %p72, %p73
      %s76 = sadd.s32 %s75, 1
      %p79 = scmp.eq.s32.totalorder %s20, 1
      %p80 = scmp.ne.s32.totalorder %s75, %s77
      %p81 = scmp.eq.s32.totalorder %s20, 0
      %p82 = por %p80, %p81
      %p83 = scmp.ne.s32.totalorder %s75, %s77
      %p84 = scmp.eq.s32.totalorder %s25, 1
      %p85 = por %p83, %p84
      %p86 = scmp.ne.s32.totalorder %s77, %s78
      %p87 = scmp.eq.s32.totalorder %s25, 0
      %p88 = por %p86, %p87
      %p89 = scmp.ne.s32.totalorder %s77, %s78
      %p90 = scmp.eq.s32.totalorder %s26, 1
      %p91 = por %p89, %p90
      %p93 = scmp.ne.s32.totalorder %s78, %s92
      %p94 = scmp.eq.s32.totalorder %s26, 0
      %p95 = por %p93, %p94
      %s97 = sadd.s32 %s96, 1
      %p100 = scmp.eq.s32.totalorder %s20, 1
      %p101 = scmp.ne.s32.totalorder %s96, %s98
      %p102 = scmp.eq.s32.totalorder %s20, 0
      %p103 = por %p101, %p102
      %p104 = scmp.ne.s32.totalorder %s96, %s98
      %p105 = scmp.eq.s32.totalorder %s25, 1
      %p106 = por %p104, %p105
      %p107 = scmp.ne.s32.totalorder %s98, %s99
      %p108 = scmp.eq.s32.totalorder %s25, 0
      %p109 = por %p107, %p108
      %p110 = scmp.ne.s32.totalorder %s98, %s99
      %p111 = scmp.eq.s32.totalorder %s26, 1
      %p112 = por %p110, %p111
      %p114 = scmp.ne.s32.totalorder %s99, %s113
      %p115 = scmp.eq.s32.totalorder %s26, 0
      %p116 = por %p114, %p115
      %s118 = sadd.s32 %s117, 1
      %p121 = scmp.eq.s32.totalorder %s20, 1
      %p122 = scmp.ne.s32.totalorder %s117, %s119
      %p123 = scmp.eq.s32.totalorder %s20, 0
      %p124 = por %p122, %p123
      %p125 = scmp.ne.s32.totalorder %s117, %s119
      %p126 = scmp.eq.s32.totalorder %s25, 1
      %p127 = por %p125, %p126
      %p128 = scmp.ne.s32.totalorder %s119, %s120
      %p129 = scmp.eq.s32.totalorder %s25, 0
      %p130 = por %p128, %p129
      %p131 = scmp.ne.s32.totalorder %s119, %s120
      %p132 = scmp.eq.s32.totalorder %s26, 1
      %p133 = por %p131, %p132
      %p135 = scmp.ne.s32.totalorder %s120, %s134
      %p136 = scmp.eq.s32.totalorder %s26, 0
      %p137 = por %p135, %p136
      %s139 = sadd.s32 %s138, 1
      %p142 = scmp.eq.s32.totalorder %s20, 1
      %p143 = scmp.ne.s32.totalorder %s138, %s140
      %p144 = scmp.eq.s32.totalorder %s20, 0
      %p145 = por %p143, %p144
      %p146 = scmp.ne.s32.totalorder %s138, %s140
      %p147 = scmp.eq.s32.totalorder %s25, 1
      %p148 = por %p146, %p147
      %p149 = scmp.ne.s32.totalorder %s140, %s141
      %p150 = scmp.eq.s32.totalorder %s25, 0
      %p151 = por %p149, %p150
      %p152 = scmp.ne.s32.totalorder %s140, %s141
      %p153 = scmp.eq.s32.totalorder %s26, 1
      %p154 = por %p152, %p153
      %p156 = scmp.ne.s32.totalorder %s141, %s155
      %p157 = scmp.eq.s32.totalorder %s26, 0
      %p158 = por %p156, %p157
      %s159 = ssub.s32 %s20, %s27
      %p160 = scmp.eq.s32.totalorder %s159, 0
      %s162 = sadd.s32 %s161, 1
      %s163 = scalar_select %p160, %s161, %s162
      %p166 = pneg %p160
      %p167 = scmp.eq.s32.totalorder %s20, 1
      %p168 = por %p166, %p167
      %p169 = scmp.ne.s32.totalorder %s161, %s164
      %p170 = scmp.eq.s32.totalorder %s20, 0
      %p171 = por %p169, %p170
      %p172 = scmp.ne.s32.totalorder %s161, %s164
      %p173 = scmp.eq.s32.totalorder %s25, 1
      %p174 = por %p172, %p173
      %p175 = scmp.ne.s32.totalorder %s164, %s165
      %p176 = scmp.eq.s32.totalorder %s25, 0
      %p177 = por %p175, %p176
      %p178 = scmp.ne.s32.totalorder %s164, %s165
      %p179 = scmp.eq.s32.totalorder %s26, 1
      %p180 = por %p178, %p179
      %p182 = scmp.ne.s32.totalorder %s165, %s181
      %p183 = scmp.eq.s32.totalorder %s26, 0
      %p184 = por %p182, %p183
      %p185 = scmp.le.s32.totalorder 1, %s20
      %p186 = scmp.lt.s32.totalorder %s20, 3
      %p187 = pnand %p185, %p186
      %p188 = pneg %p187
      // Predicated region
      $region9: #{tpu_custom_call.1} parent=5 // pred_check
        _
      $region10: #{tpu_custom_call.1} parent=5 // pred_check_branch
        %190 = sbr.rel (%p187) target = $region12
      $region11: #{tpu_custom_call.1} parent=5 // pred_region
        %s191 = ssub.s32 %s20, 1
        // Predicated region
        $region13: #{tpu_custom_call.1} parent=11 // pred_check
          %p192 = pneg %p67
        $region14: #{tpu_custom_call.1} parent=11 // pred_check_branch
          %194 = sbr.rel (%p192) target = $region16
        $region15: #{tpu_custom_call.1} parent=11 // pred_region
          %s196 = ssub.s32 2048, 2048
          %197 = vsyncadd [#allocation7], %s196
          %s198 = sshll.u32 [#allocation6], 4
          %s199 = int_to_ptr.vmem [resolvable:$true] %s198
          %204 = dma.hbm_to_vmem [thread:$0]  %s1, 2048, %s199, [#allocation7], 128, 128, 8
        $region16: #{tpu_custom_call.1} parent=11 // pred_fallthru
          _
        // Predicated region
        $region17: #{tpu_custom_call.1} parent=11 // pred_check
          %p205 = pneg %p88
        $region18: #{tpu_custom_call.1} parent=11 // pred_check_branch
          %207 = sbr.rel (%p205) target = $region20
        $region19: #{tpu_custom_call.1} parent=11 // pred_region
          _
        $region20: #{tpu_custom_call.1} parent=11 // pred_fallthru
          _
        // Predicated region
        $region21: #{tpu_custom_call.1} parent=11 // pred_check
          %p208 = pneg %p109
        $region22: #{tpu_custom_call.1} parent=11 // pred_check_branch
          %210 = sbr.rel (%p208) target = $region24
        $region23: #{tpu_custom_call.1} parent=11 // pred_region
          %s212 = ssub.s32 2048, 2048
          %213 = vsyncadd [#allocation7], %s212
          %s214 = sshll.u32 [#allocation8], 4
          %s215 = int_to_ptr.vmem [resolvable:$true] %s214
          %220 = dma.hbm_to_vmem [thread:$0]  %s3, 2048, %s215, [#allocation7], 64, 64, 4
        $region24: #{tpu_custom_call.1} parent=11 // pred_fallthru
          _
        // Predicated region
        $region25: #{tpu_custom_call.1} parent=11 // pred_check
          %p221 = pneg %p130
        $region26: #{tpu_custom_call.1} parent=11 // pred_check_branch
          %223 = sbr.rel (%p221) target = $region28
        $region27: #{tpu_custom_call.1} parent=11 // pred_region
          %s225 = ssub.s32 256, 256
          %226 = vsyncadd [#allocation10], %s225
          %s227 = sshll.u32 [#allocation9], 4
          %s228 = int_to_ptr.vmem [resolvable:$true] %s227
          %233 = dma.hbm_to_vmem [thread:$0]  %s4, 256, %s228, [#allocation10], 128, 128, 8
        $region28: #{tpu_custom_call.1} parent=11 // pred_fallthru
          _
        // Predicated region
        $region29: #{tpu_custom_call.1} parent=11 // pred_check
          %p234 = pneg %p151
        $region30: #{tpu_custom_call.1} parent=11 // pred_check_branch
          %236 = sbr.rel (%p234) target = $region32
        $region31: #{tpu_custom_call.1} parent=11 // pred_region
          _
        $region32: #{tpu_custom_call.1} parent=11 // pred_fallthru
          _
      $region12: #{tpu_custom_call.1} parent=5 // pred_fallthru
        _
      %p237 = scmp.lt.s32.totalorder %s20, 2
      // Predicated region
      $region33: #{tpu_custom_call.1} parent=5 // pred_check
        %p238 = pneg %p237
      $region34: #{tpu_custom_call.1} parent=5 // pred_check_branch
        %240 = sbr.rel (%p238) target = $region36
      $region35: #{tpu_custom_call.1} parent=5 // pred_region
        // Predicated region
        $region37: #{tpu_custom_call.1} parent=35 // pred_check
          %p241 = pneg %p40
        $region38: #{tpu_custom_call.1} parent=35 // pred_check_branch
          %243 = sbr.rel (%p241) target = $region40
        $region39: #{tpu_custom_call.1} parent=35 // pred_region
          %s244 = sand.u32 %s30, 1
          %s245 = scalar_lea.sflag [#allocation4], %s244
          %s246 = sand.u32 %s30, 1
          %s247 = smul.addr %s246, 128
          %s248 = scalar_lea.vmem [#allocation3], %s247
          %s249 = smul.u32 2, %s20
          %s251 = ssub.s32 2048, 2048
          %252 = vsyncadd %s245, %s251
          %s253 = smul.addr %s249, 8
          %s254 = smul.addr %s253, 128
          %s255 = scalar_lea.hbm %s0, %s254
          %s256 = sshll.u32 %s248, 4
          %s257 = int_to_ptr.vmem [resolvable:$true] %s256
          %262 = dma.hbm_to_vmem [thread:$0]  %s255, 2048, %s257, %s245, 128, 128, 8
        $region40: #{tpu_custom_call.1} parent=35 // pred_fallthru
          _
      $region36: #{tpu_custom_call.1} parent=5 // pred_fallthru
        _
      %p263 = scmp.le.s32.totalorder 1, %s20
      %p264 = scmp.lt.s32.totalorder %s20, 3
      %p265 = pnand %p263, %p264
      %p266 = pneg %p265
      // Predicated region
      $region41: #{tpu_custom_call.1} parent=5 // pred_check
        _
      $region42: #{tpu_custom_call.1} parent=5 // pred_check_branch
        %268 = sbr.rel (%p265) target = $region44
      $region43: #{tpu_custom_call.1} parent=5 // pred_region
        %s269 = ssub.s32 %s20, 1
        %s270 = sand.u32 %s33, 1
        %s271 = scalar_lea.sflag [#allocation4], %s270
        %s272 = sand.u32 %s33, 1
        %s273 = smul.addr %s272, 128
        %s274 = scalar_lea.vmem [#allocation3], %s273
        // Predicated region
        $region45: #{tpu_custom_call.1} parent=43 // pred_check
          %p275 = pneg %p46
        $region46: #{tpu_custom_call.1} parent=43 // pred_check_branch
          %277 = sbr.rel (%p275) target = $region48
        $region47: #{tpu_custom_call.1} parent=43 // pred_region
          %278 = dma.done %s271, 2048
        $region48: #{tpu_custom_call.1} parent=43 // pred_fallthru
          _
        // Predicated region
        $region49: #{tpu_custom_call.1} parent=43 // pred_check
          %p279 = pneg %p67
        $region50: #{tpu_custom_call.1} parent=43 // pred_check_branch
          %281 = sbr.rel (%p279) target = $region52
        $region51: #{tpu_custom_call.1} parent=43 // pred_region
          %282 = dma.done [#allocation7], 2048
        $region52: #{tpu_custom_call.1} parent=43 // pred_fallthru
          _
        // Predicated region
        $region53: #{tpu_custom_call.1} parent=43 // pred_check
          %p283 = pneg %p109
        $region54: #{tpu_custom_call.1} parent=43 // pred_check_branch
          %285 = sbr.rel (%p283) target = $region56
        $region55: #{tpu_custom_call.1} parent=43 // pred_region
          %286 = dma.done [#allocation7], 2048
        $region56: #{tpu_custom_call.1} parent=43 // pred_fallthru
          _
        // Predicated region
        $region57: #{tpu_custom_call.1} parent=43 // pred_check
          %p287 = pneg %p130
        $region58: #{tpu_custom_call.1} parent=43 // pred_check_branch
          %289 = sbr.rel (%p287) target = $region60
        $region59: #{tpu_custom_call.1} parent=43 // pred_region
          %290 = dma.done [#allocation10], 256
        $region60: #{tpu_custom_call.1} parent=43 // pred_fallthru
          _
        %s291 = sand.u32 %s33, 1
        %s292 = scalar_lea.sflag [#allocation4], %s291
        %s293 = sand.u32 %s33, 1
        %s294 = smul.addr %s293, 128
        %s295 = scalar_lea.vmem [#allocation3], %s294
        %p296 = pneg %p46
        %p297 = pneg %p43
        %p298 = pneg %p67
        %p299 = pneg %p64
        %p300 = pneg %p88
        %p301 = pneg %p85
        %p302 = pneg %p109
        %p303 = pneg %p106
        %p304 = pneg %p130
        %p305 = pneg %p127
        %p306 = pneg %p151
        %p307 = pneg %p148
        %p308 = pneg %p177
        %p309 = pneg %p174
        %s310 = sand.u32 %s164, 1
        %s311 = scalar_lea.sflag [#allocation5], %s310
        %s312 = sand.u32 %s164, 1
        %s313 = smul.addr %s312, 128
        %s314 = scalar_lea.vmem [#allocation11], %s313
        %s315 = smul.u32 2, %s25
        %s316 = smul.u32 2, %s25
        %v318 = vld [vmem:[%s274] sm:$0xff]
        %v319 = vld [vmem:[%s274 + $0x8] sm:$0xff]
        %v320 = vld [vmem:[%s274 + $0x10] sm:$0xff]
        %v321 = vld [vmem:[%s274 + $0x18] sm:$0xff]
        %v322 = vld [vmem:[%s274 + $0x20] sm:$0xff]
        %v323 = vld [vmem:[%s274 + $0x28] sm:$0xff]
        %v324 = vld [vmem:[%s274 + $0x30] sm:$0xff]
        %v325 = vld [vmem:[%s274 + $0x38] sm:$0xff]
        %v326 = vld [vmem:[%s274 + $0x40] sm:$0xff]
        %v327 = vld [vmem:[%s274 + $0x48] sm:$0xff]
        %v328 = vld [vmem:[%s274 + $0x50] sm:$0xff]
        %v329 = vld [vmem:[%s274 + $0x58] sm:$0xff]
        %v330 = vld [vmem:[%s274 + $0x60] sm:$0xff]
        %v331 = vld [vmem:[%s274 + $0x68] sm:$0xff]
        %v332 = vld [vmem:[%s274 + $0x70] sm:$0xff]
        %v333 = vld [vmem:[%s274 + $0x78] sm:$0xff]
        %v334 = vpack.c.bf16 %v319, %v318
        %v335 = vpack.c.bf16 %v321, %v320
        %v336 = vpack.c.bf16 %v323, %v322
        %v337 = vpack.c.bf16 %v325, %v324
        %v338 = vpack.c.bf16 %v327, %v326
        %v339 = vpack.c.bf16 %v329, %v328
        %v340 = vpack.c.bf16 %v331, %v330
        %v341 = vpack.c.bf16 %v333, %v332
        %v342 = vld [vmem:[#allocation6] sm:$0xff]
        %v343 = vld [vmem:[#allocation6 + $0x8] sm:$0xff]
        %v344 = vld [vmem:[#allocation6 + $0x10] sm:$0xff]
        %v345 = vld [vmem:[#allocation6 + $0x18] sm:$0xff]
        %v346 = vld [vmem:[#allocation6 + $0x20] sm:$0xff]
        %v347 = vld [vmem:[#allocation6 + $0x28] sm:$0xff]
        %v348 = vld [vmem:[#allocation6 + $0x30] sm:$0xff]
        %v349 = vld [vmem:[#allocation6 + $0x38] sm:$0xff]
        %v350 = vld [vmem:[#allocation6 + $0x40] sm:$0xff]
        %v351 = vld [vmem:[#allocation6 + $0x48] sm:$0xff]
        %v352 = vld [vmem:[#allocation6 + $0x50] sm:$0xff]
        %v353 = vld [vmem:[#allocation6 + $0x58] sm:$0xff]
        %v354 = vld [vmem:[#allocation6 + $0x60] sm:$0xff]
        %v355 = vld [vmem:[#allocation6 + $0x68] sm:$0xff]
        %v356 = vld [vmem:[#allocation6 + $0x70] sm:$0xff]
        %v357 = vld [vmem:[#allocation6 + $0x78] sm:$0xff]
        %v358 = vld [vmem:[%s2] sm:$0x3]
        %v360 = vlaneseq
        %v361 = vshrl.u32 %v360, 7
        %v362 = vsub.s32 0, %v361
        %v363 = vrot.slane %v358, %v362
        %v364 = vlaneseq
        %v365 = vshrl.u32 %v364, 7
        %v366 = vsub.s32 1, %v365
        %v367 = vrot.slane %v358, %v366
        %v386 = vunpack.c.l.b16 %v342
        %v387 = vunpack.c.h.b16 %v342
        %v388 = vunpack.c.l.b16 %v343
        %v389 = vunpack.c.h.b16 %v343
        %v390 = vunpack.c.l.b16 %v344
        %v391 = vunpack.c.h.b16 %v344
        %v392 = vunpack.c.l.b16 %v345
        %v393 = vunpack.c.h.b16 %v345
        %v394 = vunpack.c.l.b16 %v346
        %v395 = vunpack.c.h.b16 %v346
        %v396 = vunpack.c.l.b16 %v347
        %v397 = vunpack.c.h.b16 %v347
        %v398 = vunpack.c.l.b16 %v348
        %v399 = vunpack.c.h.b16 %v348
        %v400 = vunpack.c.l.b16 %v349
        %v401 = vunpack.c.h.b16 %v349
        %v402 = vunpack.c.l.b16 %v350
        %v403 = vunpack.c.h.b16 %v350
        %v404 = vunpack.c.l.b16 %v351
        %v405 = vunpack.c.h.b16 %v351
        %v406 = vunpack.c.l.b16 %v352
        %v407 = vunpack.c.h.b16 %v352
        %v408 = vunpack.c.l.b16 %v353
        %v409 = vunpack.c.h.b16 %v353
        %v410 = vunpack.c.l.b16 %v354
        %v411 = vunpack.c.h.b16 %v354
        %v412 = vunpack.c.l.b16 %v355
        %v413 = vunpack.c.h.b16 %v355
        %v414 = vunpack.c.l.b16 %v356
        %v415 = vunpack.c.h.b16 %v356
        %v416 = vunpack.c.l.b16 %v357
        %v417 = vunpack.c.h.b16 %v357
        %v418 = vpack.c.b16 %v388, %v386
        %v419 = vpack.c.b16 %v389, %v387
        %v420 = vpack.c.b16 %v392, %v390
        %v421 = vpack.c.b16 %v393, %v391
        %v422 = vpack.c.b16 %v396, %v394
        %v423 = vpack.c.b16 %v397, %v395
        %v424 = vpack.c.b16 %v400, %v398
        %v425 = vpack.c.b16 %v401, %v399
        %v426 = vpack.c.b16 %v404, %v402
        %v427 = vpack.c.b16 %v405, %v403
        %v428 = vpack.c.b16 %v408, %v406
        %v429 = vpack.c.b16 %v409, %v407
        %v430 = vpack.c.b16 %v412, %v410
        %v431 = vpack.c.b16 %v413, %v411
        %v432 = vpack.c.b16 %v416, %v414
        %v433 = vpack.c.b16 %v417, %v415
        %450 = vmatprep.subr.bf16.mxu0 %v433
        %451 = vmatpush1.bf16.msra.mxu0 %v432
        %452 = vmatprep.subr.bf16.mxu0 %v431
        %453 = vmatpush1.bf16.msra.mxu0 %v430
        %454 = vmatprep.subr.bf16.mxu0 %v429
        %455 = vmatpush1.bf16.msra.mxu0 %v428
        %456 = vmatprep.subr.bf16.mxu0 %v427
        %457 = vmatpush1.bf16.msra.mxu0 %v426
        %458 = vmatprep.subr.bf16.mxu0 %v425
        %459 = vmatpush1.bf16.msra.mxu0 %v424
        %460 = vmatprep.subr.bf16.mxu0 %v423
        %461 = vmatpush1.bf16.msra.mxu0 %v422
        %462 = vmatprep.subr.bf16.mxu0 %v421
        %463 = vmatpush1.bf16.msra.mxu0 %v420
        %464 = vmatprep.subr.bf16.mxu0 %v419
        %465 = vmatpush1.bf16.msra.mxu0 %v418
        %466 = vmatprep.subr.bf16.mxu0 0
        %467 = vmatpush2.bf16.msra.mxu0 0
        %468 = vmatprep.subr.bf16.mxu0 0
        %469 = vmatpush2.bf16.msra.mxu0 0
        %470 = vmatprep.subr.bf16.mxu0 0
        %471 = vmatpush2.bf16.msra.mxu0 0
        %472 = vmatprep.subr.bf16.mxu0 0
        %473 = vmatpush2.bf16.msra.mxu0 0
        %474 = vmatprep.subr.bf16.mxu0 0
        %475 = vmatpush2.bf16.msra.mxu0 0
        %476 = vmatprep.subr.bf16.mxu0 0
        %477 = vmatpush2.bf16.msra.mxu0 0
        %478 = vmatprep.subr.bf16.mxu0 0
        %479 = vmatpush2.bf16.msra.mxu0 0
        %480 = vmatprep.subr.bf16.mxu0 0
        %481 = vmatpush2.bf16.msra.mxu0 0
        %482 = vmatprep.mubr.bf16.mxu0 0
        %483 = vmatmul.mubr.bf16.gmra.mxu0 %v334
        %v484 = vpop.f32.mrf.mxu0
        %v485 = vadd.f32 %v363, %v484
        %v486 = vpop.f32.mrf.mxu0
        %v487 = vadd.f32 %v367, %v486
        %v488 = vpop.f32.mrf.mxu0
        %v489 = vadd.f32 %v363, %v488
        %v490 = vpop.f32.mrf.mxu0
        %v491 = vadd.f32 %v367, %v490
        %492 = vmatprep.mubr.bf16.mxu0 0
        %493 = vmatmul.mubr.bf16.gmra.mxu0 %v335
        %v494 = vpop.f32.mrf.mxu0
        %v495 = vadd.f32 %v363, %v494
        %v496 = vpop.f32.mrf.mxu0
        %v497 = vadd.f32 %v367, %v496
        %v498 = vpop.f32.mrf.mxu0
        %v499 = vadd.f32 %v363, %v498
        %v500 = vpop.f32.mrf.mxu0
        %v501 = vadd.f32 %v367, %v500
        %502 = vmatprep.mubr.bf16.mxu0 0
        %503 = vmatmul.mubr.bf16.gmra.mxu0 %v336
        %v504 = vpop.f32.mrf.mxu0
        %v505 = vadd.f32 %v363, %v504
        %v506 = vpop.f32.mrf.mxu0
        %v507 = vadd.f32 %v367, %v506
        %v508 = vpop.f32.mrf.mxu0
        %v509 = vadd.f32 %v363, %v508
        %v510 = vpop.f32.mrf.mxu0
        %v511 = vadd.f32 %v367, %v510
        %512 = vmatprep.mubr.bf16.mxu0 0
        %513 = vmatmul.mubr.bf16.gmra.mxu0 %v337
        %v514 = vpop.f32.mrf.mxu0
        %v515 = vadd.f32 %v363, %v514
        %v516 = vpop.f32.mrf.mxu0
        %v517 = vadd.f32 %v367, %v516
        %v518 = vpop.f32.mrf.mxu0
        %v519 = vadd.f32 %v363, %v518
        %v520 = vpop.f32.mrf.mxu0
        %v521 = vadd.f32 %v367, %v520
        %522 = vmatprep.mubr.bf16.mxu0 0
        %523 = vmatmul.mubr.bf16.gmra.mxu0 %v338
        %v524 = vpop.f32.mrf.mxu0
        %v525 = vadd.f32 %v363, %v524
        %v526 = vpop.f32.mrf.mxu0
        %v527 = vadd.f32 %v367, %v526
        %v528 = vpop.f32.mrf.mxu0
        %v529 = vadd.f32 %v363, %v528
        %v530 = vpop.f32.mrf.mxu0
        %v531 = vadd.f32 %v367, %v530
        %532 = vmatprep.mubr.bf16.mxu0 0
        %533 = vmatmul.mubr.bf16.gmra.mxu0 %v339
        %v534 = vpop.f32.mrf.mxu0
        %v535 = vadd.f32 %v363, %v534
        %v536 = vpop.f32.mrf.mxu0
        %v537 = vadd.f32 %v367, %v536
        %v538 = vpop.f32.mrf.mxu0
        %v539 = vadd.f32 %v363, %v538
        %v540 = vpop.f32.mrf.mxu0
        %v541 = vadd.f32 %v367, %v540
        %542 = vmatprep.mubr.bf16.mxu0 0
        %543 = vmatmul.mubr.bf16.gmra.mxu0 %v340
        %v544 = vpop.f32.mrf.mxu0
        %v545 = vadd.f32 %v363, %v544
        %v546 = vpop.f32.mrf.mxu0
        %v547 = vadd.f32 %v367, %v546
        %v548 = vpop.f32.mrf.mxu0
        %v549 = vadd.f32 %v363, %v548
        %v550 = vpop.f32.mrf.mxu0
        %v551 = vadd.f32 %v367, %v550
        %552 = vmatprep.mubr.bf16.mxu0 0
        %553 = vmatmul.mubr.bf16.gmra.mxu0 %v341
        %v554 = vpop.f32.mrf.mxu0
        %v555 = vadd.f32 %v363, %v554
        %v556 = vpop.f32.mrf.mxu0
        %v557 = vadd.f32 %v367, %v556
        %v558 = vpop.f32.mrf.mxu0
        %v559 = vadd.f32 %v363, %v558
        %v560 = vpop.f32.mrf.mxu0
        %v561 = vadd.f32 %v367, %v560
        %562 = vdwg.mxu0
        %v563 = vmax.f32 %v485, 0.0
        %v564 = vmax.f32 %v487, 0.0
        %v565 = vmax.f32 %v489, 0.0
        %v566 = vmax.f32 %v491, 0.0
        %v567 = vmax.f32 %v495, 0.0
        %v568 = vmax.f32 %v497, 0.0
        %v569 = vmax.f32 %v499, 0.0
        %v570 = vmax.f32 %v501, 0.0
        %v571 = vmax.f32 %v505, 0.0
        %v572 = vmax.f32 %v507, 0.0
        %v573 = vmax.f32 %v509, 0.0
        %v574 = vmax.f32 %v511, 0.0
        %v575 = vmax.f32 %v515, 0.0
        %v576 = vmax.f32 %v517, 0.0
        %v577 = vmax.f32 %v519, 0.0
        %v578 = vmax.f32 %v521, 0.0
        %v579 = vmax.f32 %v525, 0.0
        %v580 = vmax.f32 %v527, 0.0
        %v581 = vmax.f32 %v529, 0.0
        %v582 = vmax.f32 %v531, 0.0
        %v583 = vmax.f32 %v535, 0.0
        %v584 = vmax.f32 %v537, 0.0
        %v585 = vmax.f32 %v539, 0.0
        %v586 = vmax.f32 %v541, 0.0
        %v587 = vmax.f32 %v545, 0.0
        %v588 = vmax.f32 %v547, 0.0
        %v589 = vmax.f32 %v549, 0.0
        %v590 = vmax.f32 %v551, 0.0
        %v591 = vmax.f32 %v555, 0.0
        %v592 = vmax.f32 %v557, 0.0
        %v593 = vmax.f32 %v559, 0.0
        %v594 = vmax.f32 %v561, 0.0
        %v595 = vpack.c.bf16 %v565, %v563
        %v596 = vpack.c.bf16 %v566, %v564
        %v597 = vpack.c.bf16 %v569, %v567
        %v598 = vpack.c.bf16 %v570, %v568
        %v599 = vpack.c.bf16 %v573, %v571
        %v600 = vpack.c.bf16 %v574, %v572
        %v601 = vpack.c.bf16 %v577, %v575
        %v602 = vpack.c.bf16 %v578, %v576
        %v603 = vpack.c.bf16 %v581, %v579
        %v604 = vpack.c.bf16 %v582, %v580
        %v605 = vpack.c.bf16 %v585, %v583
        %v606 = vpack.c.bf16 %v586, %v584
        %v607 = vpack.c.bf16 %v589, %v587
        %v608 = vpack.c.bf16 %v590, %v588
        %v609 = vpack.c.bf16 %v593, %v591
        %v610 = vpack.c.bf16 %v594, %v592
        %v611 = vld [vmem:[#allocation8] sm:$0xf]
        %v612 = vld [vmem:[#allocation8 + $0x4] sm:$0xf]
        %v613 = vld [vmem:[#allocation8 + $0x8] sm:$0xf]
        %v614 = vld [vmem:[#allocation8 + $0xc] sm:$0xf]
        %v615 = vld [vmem:[#allocation8 + $0x10] sm:$0xf]
        %v616 = vld [vmem:[#allocation8 + $0x14] sm:$0xf]
        %v617 = vld [vmem:[#allocation8 + $0x18] sm:$0xf]
        %v618 = vld [vmem:[#allocation8 + $0x1c] sm:$0xf]
        %v619 = vld [vmem:[#allocation8 + $0x20] sm:$0xf]
        %v620 = vld [vmem:[#allocation8 + $0x24] sm:$0xf]
        %v621 = vld [vmem:[#allocation8 + $0x28] sm:$0xf]
        %v622 = vld [vmem:[#allocation8 + $0x2c] sm:$0xf]
        %v623 = vld [vmem:[#allocation8 + $0x30] sm:$0xf]
        %v624 = vld [vmem:[#allocation8 + $0x34] sm:$0xf]
        %v625 = vld [vmem:[#allocation8 + $0x38] sm:$0xf]
        %v626 = vld [vmem:[#allocation8 + $0x3c] sm:$0xf]
        %v627 = vld [vmem:[#allocation8 + $0x40] sm:$0xf]
        %v628 = vld [vmem:[#allocation8 + $0x44] sm:$0xf]
        %v629 = vld [vmem:[#allocation8 + $0x48] sm:$0xf]
        %v630 = vld [vmem:[#allocation8 + $0x4c] sm:$0xf]
        %v631 = vld [vmem:[#allocation8 + $0x50] sm:$0xf]
        %v632 = vld [vmem:[#allocation8 + $0x54] sm:$0xf]
        %v633 = vld [vmem:[#allocation8 + $0x58] sm:$0xf]
        %v634 = vld [vmem:[#allocation8 + $0x5c] sm:$0xf]
        %v635 = vld [vmem:[#allocation8 + $0x60] sm:$0xf]
        %v636 = vld [vmem:[#allocation8 + $0x64] sm:$0xf]
        %v637 = vld [vmem:[#allocation8 + $0x68] sm:$0xf]
        %v638 = vld [vmem:[#allocation8 + $0x6c] sm:$0xf]
        %v639 = vld [vmem:[#allocation8 + $0x70] sm:$0xf]
        %v640 = vld [vmem:[#allocation8 + $0x74] sm:$0xf]
        %v641 = vld [vmem:[#allocation8 + $0x78] sm:$0xf]
        %v642 = vld [vmem:[#allocation8 + $0x7c] sm:$0xf]
        %v675 = vunpack.c.l.b16 %v611
        %v676 = vunpack.c.l.b16 %v612
        %v677 = vunpack.c.l.b16 %v613
        %v678 = vunpack.c.l.b16 %v614
        %v679 = vunpack.c.l.b16 %v615
        %v680 = vunpack.c.l.b16 %v616
        %v681 = vunpack.c.l.b16 %v617
        %v682 = vunpack.c.l.b16 %v618
        %v683 = vunpack.c.l.b16 %v619
        %v684 = vunpack.c.l.b16 %v620
        %v685 = vunpack.c.l.b16 %v621
        %v686 = vunpack.c.l.b16 %v622
        %v687 = vunpack.c.l.b16 %v623
        %v688 = vunpack.c.l.b16 %v624
        %v689 = vunpack.c.l.b16 %v625
        %v690 = vunpack.c.l.b16 %v626
        %v691 = vunpack.c.l.b16 %v627
        %v692 = vunpack.c.l.b16 %v628
        %v693 = vunpack.c.l.b16 %v629
        %v694 = vunpack.c.l.b16 %v630
        %v695 = vunpack.c.l.b16 %v631
        %v696 = vunpack.c.l.b16 %v632
        %v697 = vunpack.c.l.b16 %v633
        %v698 = vunpack.c.l.b16 %v634
        %v699 = vunpack.c.l.b16 %v635
        %v700 = vunpack.c.l.b16 %v636
        %v701 = vunpack.c.l.b16 %v637
        %v702 = vunpack.c.l.b16 %v638
        %v703 = vunpack.c.l.b16 %v639
        %v704 = vunpack.c.l.b16 %v640
        %v705 = vunpack.c.l.b16 %v641
        %v706 = vunpack.c.l.b16 %v642
        %v707 = vpack.c.b16 %v676, %v675
        %v708 = vpack.c.b16 %v678, %v677
        %v709 = vpack.c.b16 %v680, %v679
        %v710 = vpack.c.b16 %v682, %v681
        %v711 = vpack.c.b16 %v684, %v683
        %v712 = vpack.c.b16 %v686, %v685
        %v713 = vpack.c.b16 %v688, %v687
        %v714 = vpack.c.b16 %v690, %v689
        %v715 = vpack.c.b16 %v692, %v691
        %v716 = vpack.c.b16 %v694, %v693
        %v717 = vpack.c.b16 %v696, %v695
        %v718 = vpack.c.b16 %v698, %v697
        %v719 = vpack.c.b16 %v700, %v699
        %v720 = vpack.c.b16 %v702, %v701
        %v721 = vpack.c.b16 %v704, %v703
        %v722 = vpack.c.b16 %v706, %v705
        %739 = vmatprep.subr.bf16.mxu0 0
        %740 = vmatpush1.bf16.msra.mxu0 %v714
        %741 = vmatprep.subr.bf16.mxu0 0
        %742 = vmatpush1.bf16.msra.mxu0 %v713
        %743 = vmatprep.subr.bf16.mxu0 0
        %744 = vmatpush1.bf16.msra.mxu0 %v712
        %745 = vmatprep.subr.bf16.mxu0 0
        %746 = vmatpush1.bf16.msra.mxu0 %v711
        %747 = vmatprep.subr.bf16.mxu0 0
        %748 = vmatpush1.bf16.msra.mxu0 %v710
        %749 = vmatprep.subr.bf16.mxu0 0
        %750 = vmatpush1.bf16.msra.mxu0 %v709
        %751 = vmatprep.subr.bf16.mxu0 0
        %752 = vmatpush1.bf16.msra.mxu0 %v708
        %753 = vmatprep.subr.bf16.mxu0 0
        %754 = vmatpush1.bf16.msra.mxu0 %v707
        %755 = vmatprep.subr.bf16.mxu0 0
        %756 = vmatpush2.bf16.msra.mxu0 %v722
        %757 = vmatprep.subr.bf16.mxu0 0
        %758 = vmatpush2.bf16.msra.mxu0 %v721
        %759 = vmatprep.subr.bf16.mxu0 0
        %760 = vmatpush2.bf16.msra.mxu0 %v720
        %761 = vmatprep.subr.bf16.mxu0 0
        %762 = vmatpush2.bf16.msra.mxu0 %v719
        %763 = vmatprep.subr.bf16.mxu0 0
        %764 = vmatpush2.bf16.msra.mxu0 %v718
        %765 = vmatprep.subr.bf16.mxu0 0
        %766 = vmatpush2.bf16.msra.mxu0 %v717
        %767 = vmatprep.subr.bf16.mxu0 0
        %768 = vmatpush2.bf16.msra.mxu0 %v716
        %769 = vmatprep.subr.bf16.mxu0 0
        %770 = vmatpush2.bf16.msra.mxu0 %v715
        %771 = vmatprep.mubr.bf16.mxu0 %v596
        %772 = vmatmul.mubr.bf16.gmra.mxu0 %v595
        %v773 = vpop.f32.mrf.mxu0
        %v774 = vadd.f32 0.0, %v773
        %v775 = vpop.f32.mrf.mxu0
        %v776 = vpop.f32.mrf.mxu0
        %v777 = vadd.f32 0.0, %v776
        %v778 = vpop.f32.mrf.mxu0
        %779 = vmatprep.mubr.bf16.mxu0 %v598
        %780 = vmatmul.mubr.bf16.gmra.mxu0 %v597
        %v781 = vpop.f32.mrf.mxu0
        %v782 = vadd.f32 0.0, %v781
        %v783 = vpop.f32.mrf.mxu0
        %v784 = vpop.f32.mrf.mxu0
        %v785 = vadd.f32 0.0, %v784
        %v786 = vpop.f32.mrf.mxu0
        %787 = vmatprep.mubr.bf16.mxu0 %v600
        %788 = vmatmul.mubr.bf16.gmra.mxu0 %v599
        %v789 = vpop.f32.mrf.mxu0
        %v790 = vadd.f32 0.0, %v789
        %v791 = vpop.f32.mrf.mxu0
        %v792 = vpop.f32.mrf.mxu0
        %v793 = vadd.f32 0.0, %v792
        %v794 = vpop.f32.mrf.mxu0
        %795 = vmatprep.mubr.bf16.mxu0 %v602
        %796 = vmatmul.mubr.bf16.gmra.mxu0 %v601
        %v797 = vpop.f32.mrf.mxu0
        %v798 = vadd.f32 0.0, %v797
        %v799 = vpop.f32.mrf.mxu0
        %v800 = vpop.f32.mrf.mxu0
        %v801 = vadd.f32 0.0, %v800
        %v802 = vpop.f32.mrf.mxu0
        %803 = vmatprep.mubr.bf16.mxu0 %v604
        %804 = vmatmul.mubr.bf16.gmra.mxu0 %v603
        %v805 = vpop.f32.mrf.mxu0
        %v806 = vadd.f32 0.0, %v805
        %v807 = vpop.f32.mrf.mxu0
        %v808 = vpop.f32.mrf.mxu0
        %v809 = vadd.f32 0.0, %v808
        %v810 = vpop.f32.mrf.mxu0
        %811 = vmatprep.mubr.bf16.mxu0 %v606
        %812 = vmatmul.mubr.bf16.gmra.mxu0 %v605
        %v813 = vpop.f32.mrf.mxu0
        %v814 = vadd.f32 0.0, %v813
        %v815 = vpop.f32.mrf.mxu0
        %v816 = vpop.f32.mrf.mxu0
        %v817 = vadd.f32 0.0, %v816
        %v818 = vpop.f32.mrf.mxu0
        %819 = vmatprep.mubr.bf16.mxu0 %v608
        %820 = vmatmul.mubr.bf16.gmra.mxu0 %v607
        %v821 = vpop.f32.mrf.mxu0
        %v822 = vadd.f32 0.0, %v821
        %v823 = vpop.f32.mrf.mxu0
        %v824 = vpop.f32.mrf.mxu0
        %v825 = vadd.f32 0.0, %v824
        %v826 = vpop.f32.mrf.mxu0
        %827 = vmatprep.mubr.bf16.mxu0 %v610
        %828 = vmatmul.mubr.bf16.gmra.mxu0 %v609
        %v829 = vpop.f32.mrf.mxu0
        %v830 = vadd.f32 0.0, %v829
        %v831 = vpop.f32.mrf.mxu0
        %v832 = vpop.f32.mrf.mxu0
        %v833 = vadd.f32 0.0, %v832
        %v834 = vpop.f32.mrf.mxu0
        %835 = vdwg.mxu0
        %836 = vst [vmem:[#allocation2] sm:$0xff] 0.0
        %837 = vst [vmem:[#allocation2 + $0x8] sm:$0xff] 0.0
        %838 = vst [vmem:[#allocation2 + $0x58] sm:$0xff] 0.0
        %839 = vst [vmem:[#allocation2 + $0x60] sm:$0xff] 0.0
        %840 = vst [vmem:[#allocation2 + $0x50] sm:$0x1] 0.0
        %841 = vst [vmem:[#allocation2 + $0xa8] sm:$0x1] 0.0
        %842 = vst [vmem:[#allocation2 + $0x10] sm:$0xff] %v774
        %843 = vst [vmem:[#allocation2 + $0x18] sm:$0xff] %v777
        %844 = vst [vmem:[#allocation2 + $0x20] sm:$0xff] %v782
        %845 = vst [vmem:[#allocation2 + $0x28] sm:$0xff] %v785
        %846 = vst [vmem:[#allocation2 + $0x30] sm:$0xff] %v790
        %847 = vst [vmem:[#allocation2 + $0x38] sm:$0xff] %v793
        %848 = vst [vmem:[#allocation2 + $0x40] sm:$0xff] %v798
        %849 = vst [vmem:[#allocation2 + $0x48] sm:$0xff] %v801
        %850 = vst [vmem:[#allocation2 + $0x68] sm:$0xff] %v806
        %851 = vst [vmem:[#allocation2 + $0x70] sm:$0xff] %v809
        %852 = vst [vmem:[#allocation2 + $0x78] sm:$0xff] %v814
        %853 = vst [vmem:[#allocation2 + $0x80] sm:$0xff] %v817
        %854 = vst [vmem:[#allocation2 + $0x88] sm:$0xff] %v822
        %855 = vst [vmem:[#allocation2 + $0x90] sm:$0xff] %v825
        %856 = vst [vmem:[#allocation2 + $0x98] sm:$0xff] %v830
        %857 = vst [vmem:[#allocation2 + $0xa0] sm:$0xff] %v833
        %v858 = vld [vmem:[#allocation9] sm:$0xff]
        %v859 = vld [vmem:[#allocation9 + $0x8] sm:$0x3]
        %v860 = vld [vmem:[#allocation2 + $0x7] sm:$0xff]
        %v861 = vld [vmem:[#allocation2 + $0xf] sm:$0xff]
        %v862 = vld [vmem:[#allocation2 + $0x17] sm:$0xff]
        %v863 = vld [vmem:[#allocation2 + $0x1f] sm:$0xff]
        %v864 = vld [vmem:[#allocation2 + $0x27] sm:$0xff]
        %v865 = vld [vmem:[#allocation2 + $0x2f] sm:$0xff]
        %v866 = vld [vmem:[#allocation2 + $0x37] sm:$0xff]
        %v867 = vld [vmem:[#allocation2 + $0x3f] sm:$0xff]
        %v868 = vld [vmem:[#allocation2 + $0x5f] sm:$0xff]
        %v869 = vld [vmem:[#allocation2 + $0x67] sm:$0xff]
        %v870 = vld [vmem:[#allocation2 + $0x6f] sm:$0xff]
        %v871 = vld [vmem:[#allocation2 + $0x77] sm:$0xff]
        %v872 = vld [vmem:[#allocation2 + $0x7f] sm:$0xff]
        %v873 = vld [vmem:[#allocation2 + $0x87] sm:$0xff]
        %v874 = vld [vmem:[#allocation2 + $0x8f] sm:$0xff]
        %v875 = vld [vmem:[#allocation2 + $0x97] sm:$0xff]
        %v876 = vlaneseq
        %v877 = vshrl.u32 %v876, 7
        %v878 = vsub.s32 0, %v877
        %v879 = vrot.slane %v858, %v878
        %v880 = vmul.f32 %v879, %v860
        %v881 = vmul.f32 %v879, %v861
        %v882 = vmul.f32 %v879, %v862
        %v883 = vmul.f32 %v879, %v863
        %v884 = vmul.f32 %v879, %v864
        %v885 = vmul.f32 %v879, %v865
        %v886 = vmul.f32 %v879, %v866
        %v887 = vmul.f32 %v879, %v867
        %v888 = vmul.f32 %v879, %v868
        %v889 = vmul.f32 %v879, %v869
        %v890 = vmul.f32 %v879, %v870
        %v891 = vmul.f32 %v879, %v871
        %v892 = vmul.f32 %v879, %v872
        %v893 = vmul.f32 %v879, %v873
        %v894 = vmul.f32 %v879, %v874
        %v895 = vmul.f32 %v879, %v875
        %v896 = vld [vmem:[#allocation2 + $0x8] sm:$0xff]
        %v897 = vld [vmem:[#allocation2 + $0x10] sm:$0xff]
        %v898 = vld [vmem:[#allocation2 + $0x18] sm:$0xff]
        %v899 = vld [vmem:[#allocation2 + $0x20] sm:$0xff]
        %v900 = vld [vmem:[#allocation2 + $0x28] sm:$0xff]
        %v901 = vld [vmem:[#allocation2 + $0x30] sm:$0xff]
        %v902 = vld [vmem:[#allocation2 + $0x38] sm:$0xff]
        %v903 = vld [vmem:[#allocation2 + $0x40] sm:$0xff]
        %v904 = vld [vmem:[#allocation2 + $0x60] sm:$0xff]
        %v905 = vld [vmem:[#allocation2 + $0x68] sm:$0xff]
        %v906 = vld [vmem:[#allocation2 + $0x70] sm:$0xff]
        %v907 = vld [vmem:[#allocation2 + $0x78] sm:$0xff]
        %v908 = vld [vmem:[#allocation2 + $0x80] sm:$0xff]
        %v909 = vld [vmem:[#allocation2 + $0x88] sm:$0xff]
        %v910 = vld [vmem:[#allocation2 + $0x90] sm:$0xff]
        %v911 = vld [vmem:[#allocation2 + $0x98] sm:$0xff]
        %v912 = vlaneseq
        %v913 = vshrl.u32 %v912, 7
        %v914 = vsub.s32 1, %v913
        %v915 = vrot.slane %v858, %v914
        %v916 = vmul.f32 %v915, %v896
        %v917 = vmul.f32 %v915, %v897
        %v918 = vmul.f32 %v915, %v898
        %v919 = vmul.f32 %v915, %v899
        %v920 = vmul.f32 %v915, %v900
        %v921 = vmul.f32 %v915, %v901
        %v922 = vmul.f32 %v915, %v902
        %v923 = vmul.f32 %v915, %v903
        %v924 = vmul.f32 %v915, %v904
        %v925 = vmul.f32 %v915, %v905
        %v926 = vmul.f32 %v915, %v906
        %v927 = vmul.f32 %v915, %v907
        %v928 = vmul.f32 %v915, %v908
        %v929 = vmul.f32 %v915, %v909
        %v930 = vmul.f32 %v915, %v910
        %v931 = vmul.f32 %v915, %v911
        %v932 = vld [vmem:[#allocation2 + $0x9] sm:$0xff]
        %v933 = vld [vmem:[#allocation2 + $0x11] sm:$0xff]
        %v934 = vld [vmem:[#allocation2 + $0x19] sm:$0xff]
        %v935 = vld [vmem:[#allocation2 + $0x21] sm:$0xff]
        %v936 = vld [vmem:[#allocation2 + $0x29] sm:$0xff]
        %v937 = vld [vmem:[#allocation2 + $0x31] sm:$0xff]
        %v938 = vld [vmem:[#allocation2 + $0x39] sm:$0xff]
        %v939 = vld [vmem:[#allocation2 + $0x41] sm:$0xff]
        %v940 = vld [vmem:[#allocation2 + $0x61] sm:$0xff]
        %v941 = vld [vmem:[#allocation2 + $0x69] sm:$0xff]
        %v942 = vld [vmem:[#allocation2 + $0x71] sm:$0xff]
        %v943 = vld [vmem:[#allocation2 + $0x79] sm:$0xff]
        %v944 = vld [vmem:[#allocation2 + $0x81] sm:$0xff]
        %v945 = vld [vmem:[#allocation2 + $0x89] sm:$0xff]
        %v946 = vld [vmem:[#allocation2 + $0x91] sm:$0xff]
        %v947 = vld [vmem:[#allocation2 + $0x99] sm:$0xff]
        %v948 = vlaneseq
        %v949 = vshrl.u32 %v948, 7
        %v950 = vsub.s32 2, %v949
        %v951 = vrot.slane %v858, %v950
        %v952 = vmul.f32 %v951, %v932
        %v953 = vmul.f32 %v951, %v933
        %v954 = vmul.f32 %v951, %v934
        %v955 = vmul.f32 %v951, %v935
        %v956 = vmul.f32 %v951, %v936
        %v957 = vmul.f32 %v951, %v937
        %v958 = vmul.f32 %v951, %v938
        %v959 = vmul.f32 %v951, %v939
        %v960 = vmul.f32 %v951, %v940
        %v961 = vmul.f32 %v951, %v941
        %v962 = vmul.f32 %v951, %v942
        %v963 = vmul.f32 %v951, %v943
        %v964 = vmul.f32 %v951, %v944
        %v965 = vmul.f32 %v951, %v945
        %v966 = vmul.f32 %v951, %v946
        %v967 = vmul.f32 %v951, %v947
        %v968 = vld [vmem:[#allocation2 + $0xa] sm:$0xff]
        %v969 = vld [vmem:[#allocation2 + $0x12] sm:$0xff]
        %v970 = vld [vmem:[#allocation2 + $0x1a] sm:$0xff]
        %v971 = vld [vmem:[#allocation2 + $0x22] sm:$0xff]
        %v972 = vld [vmem:[#allocation2 + $0x2a] sm:$0xff]
        %v973 = vld [vmem:[#allocation2 + $0x32] sm:$0xff]
        %v974 = vld [vmem:[#allocation2 + $0x3a] sm:$0xff]
        %v975 = vld [vmem:[#allocation2 + $0x42] sm:$0xff]
        %v976 = vld [vmem:[#allocation2 + $0x62] sm:$0xff]
        %v977 = vld [vmem:[#allocation2 + $0x6a] sm:$0xff]
        %v978 = vld [vmem:[#allocation2 + $0x72] sm:$0xff]
        %v979 = vld [vmem:[#allocation2 + $0x7a] sm:$0xff]
        %v980 = vld [vmem:[#allocation2 + $0x82] sm:$0xff]
        %v981 = vld [vmem:[#allocation2 + $0x8a] sm:$0xff]
        %v982 = vld [vmem:[#allocation2 + $0x92] sm:$0xff]
        %v983 = vld [vmem:[#allocation2 + $0x9a] sm:$0xff]
        %v984 = vlaneseq
        %v985 = vshrl.u32 %v984, 7
        %v986 = vsub.s32 3, %v985
        %v987 = vrot.slane %v858, %v986
        %v988 = vmul.f32 %v987, %v968
        %v989 = vmul.f32 %v987, %v969
        %v990 = vmul.f32 %v987, %v970
        %v991 = vmul.f32 %v987, %v971
        %v992 = vmul.f32 %v987, %v972
        %v993 = vmul.f32 %v987, %v973
        %v994 = vmul.f32 %v987, %v974
        %v995 = vmul.f32 %v987, %v975
        %v996 = vmul.f32 %v987, %v976
        %v997 = vmul.f32 %v987, %v977
        %v998 = vmul.f32 %v987, %v978
        %v999 = vmul.f32 %v987, %v979
        %v1000 = vmul.f32 %v987, %v980
        %v1001 = vmul.f32 %v987, %v981
        %v1002 = vmul.f32 %v987, %v982
        %v1003 = vmul.f32 %v987, %v983
        %v1004 = vadd.f32 %v774, %v988
        %v1005 = vadd.f32 %v777, %v989
        %v1006 = vadd.f32 %v782, %v990
        %v1007 = vadd.f32 %v785, %v991
        %v1008 = vadd.f32 %v790, %v992
        %v1009 = vadd.f32 %v793, %v993
        %v1010 = vadd.f32 %v798, %v994
        %v1011 = vadd.f32 %v801, %v995
        %v1012 = vadd.f32 %v806, %v996
        %v1013 = vadd.f32 %v809, %v997
        %v1014 = vadd.f32 %v814, %v998
        %v1015 = vadd.f32 %v817, %v999
        %v1016 = vadd.f32 %v822, %v1000
        %v1017 = vadd.f32 %v825, %v1001
        %v1018 = vadd.f32 %v830, %v1002
        %v1019 = vadd.f32 %v833, %v1003
        %v1020 = vld [vmem:[#allocation2 + $0xb] sm:$0xff]
        %v1021 = vld [vmem:[#allocation2 + $0x13] sm:$0xff]
        %v1022 = vld [vmem:[#allocation2 + $0x1b] sm:$0xff]
        %v1023 = vld [vmem:[#allocation2 + $0x23] sm:$0xff]
        %v1024 = vld [vmem:[#allocation2 + $0x2b] sm:$0xff]
        %v1025 = vld [vmem:[#allocation2 + $0x33] sm:$0xff]
        %v1026 = vld [vmem:[#allocation2 + $0x3b] sm:$0xff]
        %v1027 = vld [vmem:[#allocation2 + $0x43] sm:$0xff]
        %v1028 = vld [vmem:[#allocation2 + $0x63] sm:$0xff]
        %v1029 = vld [vmem:[#allocation2 + $0x6b] sm:$0xff]
        %v1030 = vld [vmem:[#allocation2 + $0x73] sm:$0xff]
        %v1031 = vld [vmem:[#allocation2 + $0x7b] sm:$0xff]
        %v1032 = vld [vmem:[#allocation2 + $0x83] sm:$0xff]
        %v1033 = vld [vmem:[#allocation2 + $0x8b] sm:$0xff]
        %v1034 = vld [vmem:[#allocation2 + $0x93] sm:$0xff]
        %v1035 = vld [vmem:[#allocation2 + $0x9b] sm:$0xff]
        %v1036 = vlaneseq
        %v1037 = vshrl.u32 %v1036, 7
        %v1038 = vsub.s32 4, %v1037
        %v1039 = vrot.slane %v858, %v1038
        %v1040 = vmul.f32 %v1039, %v1020
        %v1041 = vmul.f32 %v1039, %v1021
        %v1042 = vmul.f32 %v1039, %v1022
        %v1043 = vmul.f32 %v1039, %v1023
        %v1044 = vmul.f32 %v1039, %v1024
        %v1045 = vmul.f32 %v1039, %v1025
        %v1046 = vmul.f32 %v1039, %v1026
        %v1047 = vmul.f32 %v1039, %v1027
        %v1048 = vmul.f32 %v1039, %v1028
        %v1049 = vmul.f32 %v1039, %v1029
        %v1050 = vmul.f32 %v1039, %v1030
        %v1051 = vmul.f32 %v1039, %v1031
        %v1052 = vmul.f32 %v1039, %v1032
        %v1053 = vmul.f32 %v1039, %v1033
        %v1054 = vmul.f32 %v1039, %v1034
        %v1055 = vmul.f32 %v1039, %v1035
        %v1056 = vadd.f32 %v880, %v1040
        %v1057 = vadd.f32 %v881, %v1041
        %v1058 = vadd.f32 %v882, %v1042
        %v1059 = vadd.f32 %v883, %v1043
        %v1060 = vadd.f32 %v884, %v1044
        %v1061 = vadd.f32 %v885, %v1045
        %v1062 = vadd.f32 %v886, %v1046
        %v1063 = vadd.f32 %v887, %v1047
        %v1064 = vadd.f32 %v888, %v1048
        %v1065 = vadd.f32 %v889, %v1049
        %v1066 = vadd.f32 %v890, %v1050
        %v1067 = vadd.f32 %v891, %v1051
        %v1068 = vadd.f32 %v892, %v1052
        %v1069 = vadd.f32 %v893, %v1053
        %v1070 = vadd.f32 %v894, %v1054
        %v1071 = vadd.f32 %v895, %v1055
        %v1072 = vld [vmem:[#allocation2 + $0xc] sm:$0xff]
        %v1073 = vld [vmem:[#allocation2 + $0x14] sm:$0xff]
        %v1074 = vld [vmem:[#allocation2 + $0x1c] sm:$0xff]
        %v1075 = vld [vmem:[#allocation2 + $0x24] sm:$0xff]
        %v1076 = vld [vmem:[#allocation2 + $0x2c] sm:$0xff]
        %v1077 = vld [vmem:[#allocation2 + $0x34] sm:$0xff]
        %v1078 = vld [vmem:[#allocation2 + $0x3c] sm:$0xff]
        %v1079 = vld [vmem:[#allocation2 + $0x44] sm:$0xff]
        %v1080 = vld [vmem:[#allocation2 + $0x64] sm:$0xff]
        %v1081 = vld [vmem:[#allocation2 + $0x6c] sm:$0xff]
        %v1082 = vld [vmem:[#allocation2 + $0x74] sm:$0xff]
        %v1083 = vld [vmem:[#allocation2 + $0x7c] sm:$0xff]
        %v1084 = vld [vmem:[#allocation2 + $0x84] sm:$0xff]
        %v1085 = vld [vmem:[#allocation2 + $0x8c] sm:$0xff]
        %v1086 = vld [vmem:[#allocation2 + $0x94] sm:$0xff]
        %v1087 = vld [vmem:[#allocation2 + $0x9c] sm:$0xff]
        %v1088 = vlaneseq
        %v1089 = vshrl.u32 %v1088, 7
        %v1090 = vsub.s32 5, %v1089
        %v1091 = vrot.slane %v858, %v1090
        %v1092 = vmul.f32 %v1091, %v1072
        %v1093 = vmul.f32 %v1091, %v1073
        %v1094 = vmul.f32 %v1091, %v1074
        %v1095 = vmul.f32 %v1091, %v1075
        %v1096 = vmul.f32 %v1091, %v1076
        %v1097 = vmul.f32 %v1091, %v1077
        %v1098 = vmul.f32 %v1091, %v1078
        %v1099 = vmul.f32 %v1091, %v1079
        %v1100 = vmul.f32 %v1091, %v1080
        %v1101 = vmul.f32 %v1091, %v1081
        %v1102 = vmul.f32 %v1091, %v1082
        %v1103 = vmul.f32 %v1091, %v1083
        %v1104 = vmul.f32 %v1091, %v1084
        %v1105 = vmul.f32 %v1091, %v1085
        %v1106 = vmul.f32 %v1091, %v1086
        %v1107 = vmul.f32 %v1091, %v1087
        %v1108 = vadd.f32 %v916, %v1092
        %v1109 = vadd.f32 %v917, %v1093
        %v1110 = vadd.f32 %v918, %v1094
        %v1111 = vadd.f32 %v919, %v1095
        %v1112 = vadd.f32 %v920, %v1096
        %v1113 = vadd.f32 %v921, %v1097
        %v1114 = vadd.f32 %v922, %v1098
        %v1115 = vadd.f32 %v923, %v1099
        %v1116 = vadd.f32 %v924, %v1100
        %v1117 = vadd.f32 %v925, %v1101
        %v1118 = vadd.f32 %v926, %v1102
        %v1119 = vadd.f32 %v927, %v1103
        %v1120 = vadd.f32 %v928, %v1104
        %v1121 = vadd.f32 %v929, %v1105
        %v1122 = vadd.f32 %v930, %v1106
        %v1123 = vadd.f32 %v931, %v1107
        %v1124 = vld [vmem:[#allocation2 + $0xd] sm:$0xff]
        %v1125 = vld [vmem:[#allocation2 + $0x15] sm:$0xff]
        %v1126 = vld [vmem:[#allocation2 + $0x1d] sm:$0xff]
        %v1127 = vld [vmem:[#allocation2 + $0x25] sm:$0xff]
        %v1128 = vld [vmem:[#allocation2 + $0x2d] sm:$0xff]
        %v1129 = vld [vmem:[#allocation2 + $0x35] sm:$0xff]
        %v1130 = vld [vmem:[#allocation2 + $0x3d] sm:$0xff]
        %v1131 = vld [vmem:[#allocation2 + $0x45] sm:$0xff]
        %v1132 = vld [vmem:[#allocation2 + $0x65] sm:$0xff]
        %v1133 = vld [vmem:[#allocation2 + $0x6d] sm:$0xff]
        %v1134 = vld [vmem:[#allocation2 + $0x75] sm:$0xff]
        %v1135 = vld [vmem:[#allocation2 + $0x7d] sm:$0xff]
        %v1136 = vld [vmem:[#allocation2 + $0x85] sm:$0xff]
        %v1137 = vld [vmem:[#allocation2 + $0x8d] sm:$0xff]
        %v1138 = vld [vmem:[#allocation2 + $0x95] sm:$0xff]
        %v1139 = vld [vmem:[#allocation2 + $0x9d] sm:$0xff]
        %v1140 = vlaneseq
        %v1141 = vshrl.u32 %v1140, 7
        %v1142 = vsub.s32 6, %v1141
        %v1143 = vrot.slane %v858, %v1142
        %v1144 = vmul.f32 %v1143, %v1124
        %v1145 = vmul.f32 %v1143, %v1125
        %v1146 = vmul.f32 %v1143, %v1126
        %v1147 = vmul.f32 %v1143, %v1127
        %v1148 = vmul.f32 %v1143, %v1128
        %v1149 = vmul.f32 %v1143, %v1129
        %v1150 = vmul.f32 %v1143, %v1130
        %v1151 = vmul.f32 %v1143, %v1131
        %v1152 = vmul.f32 %v1143, %v1132
        %v1153 = vmul.f32 %v1143, %v1133
        %v1154 = vmul.f32 %v1143, %v1134
        %v1155 = vmul.f32 %v1143, %v1135
        %v1156 = vmul.f32 %v1143, %v1136
        %v1157 = vmul.f32 %v1143, %v1137
        %v1158 = vmul.f32 %v1143, %v1138
        %v1159 = vmul.f32 %v1143, %v1139
        %v1160 = vadd.f32 %v952, %v1144
        %v1161 = vadd.f32 %v953, %v1145
        %v1162 = vadd.f32 %v954, %v1146
        %v1163 = vadd.f32 %v955, %v1147
        %v1164 = vadd.f32 %v956, %v1148
        %v1165 = vadd.f32 %v957, %v1149
        %v1166 = vadd.f32 %v958, %v1150
        %v1167 = vadd.f32 %v959, %v1151
        %v1168 = vadd.f32 %v960, %v1152
        %v1169 = vadd.f32 %v961, %v1153
        %v1170 = vadd.f32 %v962, %v1154
        %v1171 = vadd.f32 %v963, %v1155
        %v1172 = vadd.f32 %v964, %v1156
        %v1173 = vadd.f32 %v965, %v1157
        %v1174 = vadd.f32 %v966, %v1158
        %v1175 = vadd.f32 %v967, %v1159
        %v1176 = vld [vmem:[#allocation2 + $0xe] sm:$0xff]
        %v1177 = vld [vmem:[#allocation2 + $0x16] sm:$0xff]
        %v1178 = vld [vmem:[#allocation2 + $0x1e] sm:$0xff]
        %v1179 = vld [vmem:[#allocation2 + $0x26] sm:$0xff]
        %v1180 = vld [vmem:[#allocation2 + $0x2e] sm:$0xff]
        %v1181 = vld [vmem:[#allocation2 + $0x36] sm:$0xff]
        %v1182 = vld [vmem:[#allocation2 + $0x3e] sm:$0xff]
        %v1183 = vld [vmem:[#allocation2 + $0x46] sm:$0xff]
        %v1184 = vld [vmem:[#allocation2 + $0x66] sm:$0xff]
        %v1185 = vld [vmem:[#allocation2 + $0x6e] sm:$0xff]
        %v1186 = vld [vmem:[#allocation2 + $0x76] sm:$0xff]
        %v1187 = vld [vmem:[#allocation2 + $0x7e] sm:$0xff]
        %v1188 = vld [vmem:[#allocation2 + $0x86] sm:$0xff]
        %v1189 = vld [vmem:[#allocation2 + $0x8e] sm:$0xff]
        %v1190 = vld [vmem:[#allocation2 + $0x96] sm:$0xff]
        %v1191 = vld [vmem:[#allocation2 + $0x9e] sm:$0xff]
        %v1192 = vlaneseq
        %v1193 = vshrl.u32 %v1192, 7
        %v1194 = vsub.s32 7, %v1193
        %v1195 = vrot.slane %v858, %v1194
        %v1196 = vmul.f32 %v1195, %v1176
        %v1197 = vmul.f32 %v1195, %v1177
        %v1198 = vmul.f32 %v1195, %v1178
        %v1199 = vmul.f32 %v1195, %v1179
        %v1200 = vmul.f32 %v1195, %v1180
        %v1201 = vmul.f32 %v1195, %v1181
        %v1202 = vmul.f32 %v1195, %v1182
        %v1203 = vmul.f32 %v1195, %v1183
        %v1204 = vmul.f32 %v1195, %v1184
        %v1205 = vmul.f32 %v1195, %v1185
        %v1206 = vmul.f32 %v1195, %v1186
        %v1207 = vmul.f32 %v1195, %v1187
        %v1208 = vmul.f32 %v1195, %v1188
        %v1209 = vmul.f32 %v1195, %v1189
        %v1210 = vmul.f32 %v1195, %v1190
        %v1211 = vmul.f32 %v1195, %v1191
        %v1212 = vadd.f32 %v1004, %v1196
        %v1213 = vadd.f32 %v1005, %v1197
        %v1214 = vadd.f32 %v1006, %v1198
        %v1215 = vadd.f32 %v1007, %v1199
        %v1216 = vadd.f32 %v1008, %v1200
        %v1217 = vadd.f32 %v1009, %v1201
        %v1218 = vadd.f32 %v1010, %v1202
        %v1219 = vadd.f32 %v1011, %v1203
        %v1220 = vadd.f32 %v1012, %v1204
        %v1221 = vadd.f32 %v1013, %v1205
        %v1222 = vadd.f32 %v1014, %v1206
        %v1223 = vadd.f32 %v1015, %v1207
        %v1224 = vadd.f32 %v1016, %v1208
        %v1225 = vadd.f32 %v1017, %v1209
        %v1226 = vadd.f32 %v1018, %v1210
        %v1227 = vadd.f32 %v1019, %v1211
        %v1228 = vld [vmem:[#allocation2 + $0x47] sm:$0xff]
        %v1229 = vld [vmem:[#allocation2 + $0x9f] sm:$0xff]
        %v1230 = vlaneseq
        %v1231 = vshrl.u32 %v1230, 7
        %v1232 = vsub.s32 0, %v1231
        %v1233 = vrot.slane %v859, %v1232
        %v1234 = vmul.f32 %v1233, %v861
        %v1235 = vmul.f32 %v1233, %v862
        %v1236 = vmul.f32 %v1233, %v863
        %v1237 = vmul.f32 %v1233, %v864
        %v1238 = vmul.f32 %v1233, %v865
        %v1239 = vmul.f32 %v1233, %v866
        %v1240 = vmul.f32 %v1233, %v867
        %v1241 = vmul.f32 %v1233, %v1228
        %v1242 = vmul.f32 %v1233, %v869
        %v1243 = vmul.f32 %v1233, %v870
        %v1244 = vmul.f32 %v1233, %v871
        %v1245 = vmul.f32 %v1233, %v872
        %v1246 = vmul.f32 %v1233, %v873
        %v1247 = vmul.f32 %v1233, %v874
        %v1248 = vmul.f32 %v1233, %v875
        %v1249 = vmul.f32 %v1233, %v1229
        %v1250 = vadd.f32 %v1056, %v1234
        %v1251 = vadd.f32 %v1057, %v1235
        %v1252 = vadd.f32 %v1058, %v1236
        %v1253 = vadd.f32 %v1059, %v1237
        %v1254 = vadd.f32 %v1060, %v1238
        %v1255 = vadd.f32 %v1061, %v1239
        %v1256 = vadd.f32 %v1062, %v1240
        %v1257 = vadd.f32 %v1063, %v1241
        %v1258 = vadd.f32 %v1064, %v1242
        %v1259 = vadd.f32 %v1065, %v1243
        %v1260 = vadd.f32 %v1066, %v1244
        %v1261 = vadd.f32 %v1067, %v1245
        %v1262 = vadd.f32 %v1068, %v1246
        %v1263 = vadd.f32 %v1069, %v1247
        %v1264 = vadd.f32 %v1070, %v1248
        %v1265 = vadd.f32 %v1071, %v1249
        %v1266 = vld [vmem:[#allocation2 + $0x48] sm:$0xff]
        %v1267 = vld [vmem:[#allocation2 + $0xa0] sm:$0xff]
        %v1268 = vlaneseq
        %v1269 = vshrl.u32 %v1268, 7
        %v1270 = vsub.s32 1, %v1269
        %v1271 = vrot.slane %v859, %v1270
        %v1272 = vmul.f32 %v1271, %v897
        %v1273 = vmul.f32 %v1271, %v898
        %v1274 = vmul.f32 %v1271, %v899
        %v1275 = vmul.f32 %v1271, %v900
        %v1276 = vmul.f32 %v1271, %v901
        %v1277 = vmul.f32 %v1271, %v902
        %v1278 = vmul.f32 %v1271, %v903
        %v1279 = vmul.f32 %v1271, %v1266
        %v1280 = vmul.f32 %v1271, %v905
        %v1281 = vmul.f32 %v1271, %v906
        %v1282 = vmul.f32 %v1271, %v907
        %v1283 = vmul.f32 %v1271, %v908
        %v1284 = vmul.f32 %v1271, %v909
        %v1285 = vmul.f32 %v1271, %v910
        %v1286 = vmul.f32 %v1271, %v911
        %v1287 = vmul.f32 %v1271, %v1267
        %v1288 = vadd.f32 %v1108, %v1272
        %v1289 = vadd.f32 %v1109, %v1273
        %v1290 = vadd.f32 %v1110, %v1274
        %v1291 = vadd.f32 %v1111, %v1275
        %v1292 = vadd.f32 %v1112, %v1276
        %v1293 = vadd.f32 %v1113, %v1277
        %v1294 = vadd.f32 %v1114, %v1278
        %v1295 = vadd.f32 %v1115, %v1279
        %v1296 = vadd.f32 %v1116, %v1280
        %v1297 = vadd.f32 %v1117, %v1281
        %v1298 = vadd.f32 %v1118, %v1282
        %v1299 = vadd.f32 %v1119, %v1283
        %v1300 = vadd.f32 %v1120, %v1284
        %v1301 = vadd.f32 %v1121, %v1285
        %v1302 = vadd.f32 %v1122, %v1286
        %v1303 = vadd.f32 %v1123, %v1287
        %v1304 = vld [vmem:[%s5] sm:$0x1]
        %v1305 = vld [vmem:[#allocation2 + $0x11] sm:$0xff]
        %v1306 = vld [vmem:[#allocation2 + $0x19] sm:$0xff]
        %v1307 = vld [vmem:[#allocation2 + $0x21] sm:$0xff]
        %v1308 = vld [vmem:[#allocation2 + $0x29] sm:$0xff]
        %v1309 = vld [vmem:[#allocation2 + $0x31] sm:$0xff]
        %v1310 = vld [vmem:[#allocation2 + $0x39] sm:$0xff]
        %v1311 = vld [vmem:[#allocation2 + $0x41] sm:$0xff]
        %v1312 = vld [vmem:[#allocation2 + $0x49] sm:$0xff]
        %v1313 = vld [vmem:[#allocation2 + $0x69] sm:$0xff]
        %v1314 = vld [vmem:[#allocation2 + $0x71] sm:$0xff]
        %v1315 = vld [vmem:[#allocation2 + $0x79] sm:$0xff]
        %v1316 = vld [vmem:[#allocation2 + $0x81] sm:$0xff]
        %v1317 = vld [vmem:[#allocation2 + $0x89] sm:$0xff]
        %v1318 = vld [vmem:[#allocation2 + $0x91] sm:$0xff]
        %v1319 = vld [vmem:[#allocation2 + $0x99] sm:$0xff]
        %v1320 = vld [vmem:[#allocation2 + $0xa1] sm:$0xff]
        %v1322 = vlaneseq
        %v1323 = vshrl.u32 %v1322, 7
        %v1324 = vsub.s32 0, %v1323
        %v1325 = vrot.slane %v1304, %v1324
        %v1327 = vmul.f32 %v1325, %v1305
        %v1328 = vmul.f32 %v1325, %v1306
        %v1329 = vmul.f32 %v1325, %v1307
        %v1330 = vmul.f32 %v1325, %v1308
        %v1331 = vmul.f32 %v1325, %v1309
        %v1332 = vmul.f32 %v1325, %v1310
        %v1333 = vmul.f32 %v1325, %v1311
        %v1334 = vmul.f32 %v1325, %v1312
        %v1335 = vmul.f32 %v1325, %v1313
        %v1336 = vmul.f32 %v1325, %v1314
        %v1337 = vmul.f32 %v1325, %v1315
        %v1338 = vmul.f32 %v1325, %v1316
        %v1339 = vmul.f32 %v1325, %v1317
        %v1340 = vmul.f32 %v1325, %v1318
        %v1341 = vmul.f32 %v1325, %v1319
        %v1342 = vmul.f32 %v1325, %v1320
        %v1343 = vadd.f32 %v1160, %v1327
        %v1344 = vadd.f32 %v1161, %v1328
        %v1345 = vadd.f32 %v1162, %v1329
        %v1346 = vadd.f32 %v1163, %v1330
        %v1347 = vadd.f32 %v1164, %v1331
        %v1348 = vadd.f32 %v1165, %v1332
        %v1349 = vadd.f32 %v1166, %v1333
        %v1350 = vadd.f32 %v1167, %v1334
        %v1351 = vadd.f32 %v1168, %v1335
        %v1352 = vadd.f32 %v1169, %v1336
        %v1353 = vadd.f32 %v1170, %v1337
        %v1354 = vadd.f32 %v1171, %v1338
        %v1355 = vadd.f32 %v1172, %v1339
        %v1356 = vadd.f32 %v1173, %v1340
        %v1357 = vadd.f32 %v1174, %v1341
        %v1358 = vadd.f32 %v1175, %v1342
        %v1359 = vadd.f32 %v1212, %v1250
        %v1360 = vadd.f32 %v1213, %v1251
        %v1361 = vadd.f32 %v1214, %v1252
        %v1362 = vadd.f32 %v1215, %v1253
        %v1363 = vadd.f32 %v1216, %v1254
        %v1364 = vadd.f32 %v1217, %v1255
        %v1365 = vadd.f32 %v1218, %v1256
        %v1366 = vadd.f32 %v1219, %v1257
        %v1367 = vadd.f32 %v1220, %v1258
        %v1368 = vadd.f32 %v1221, %v1259
        %v1369 = vadd.f32 %v1222, %v1260
        %v1370 = vadd.f32 %v1223, %v1261
        %v1371 = vadd.f32 %v1224, %v1262
        %v1372 = vadd.f32 %v1225, %v1263
        %v1373 = vadd.f32 %v1226, %v1264
        %v1374 = vadd.f32 %v1227, %v1265
        %v1375 = vadd.f32 %v1288, %v1343
        %v1376 = vadd.f32 %v1289, %v1344
        %v1377 = vadd.f32 %v1290, %v1345
        %v1378 = vadd.f32 %v1291, %v1346
        %v1379 = vadd.f32 %v1292, %v1347
        %v1380 = vadd.f32 %v1293, %v1348
        %v1381 = vadd.f32 %v1294, %v1349
        %v1382 = vadd.f32 %v1295, %v1350
        %v1383 = vadd.f32 %v1296, %v1351
        %v1384 = vadd.f32 %v1297, %v1352
        %v1385 = vadd.f32 %v1298, %v1353
        %v1386 = vadd.f32 %v1299, %v1354
        %v1387 = vadd.f32 %v1300, %v1355
        %v1388 = vadd.f32 %v1301, %v1356
        %v1389 = vadd.f32 %v1302, %v1357
        %v1390 = vadd.f32 %v1303, %v1358
        %v1391 = vadd.f32 %v1359, %v1375
        %v1392 = vadd.f32 %v1360, %v1376
        %v1393 = vadd.f32 %v1361, %v1377
        %v1394 = vadd.f32 %v1362, %v1378
        %v1395 = vadd.f32 %v1363, %v1379
        %v1396 = vadd.f32 %v1364, %v1380
        %v1397 = vadd.f32 %v1365, %v1381
        %v1398 = vadd.f32 %v1366, %v1382
        %v1399 = vadd.f32 %v1367, %v1383
        %v1400 = vadd.f32 %v1368, %v1384
        %v1401 = vadd.f32 %v1369, %v1385
        %v1402 = vadd.f32 %v1370, %v1386
        %v1403 = vadd.f32 %v1371, %v1387
        %v1404 = vadd.f32 %v1372, %v1388
        %v1405 = vadd.f32 %v1373, %v1389
        %v1406 = vadd.f32 %v1374, %v1390
        %v1407 = vld [vmem:[%s274] sm:$0xff]
        %v1408 = vld [vmem:[%s274 + $0x8] sm:$0xff]
        %v1409 = vld [vmem:[%s274 + $0x10] sm:$0xff]
        %v1410 = vld [vmem:[%s274 + $0x18] sm:$0xff]
        %v1411 = vld [vmem:[%s274 + $0x20] sm:$0xff]
        %v1412 = vld [vmem:[%s274 + $0x28] sm:$0xff]
        %v1413 = vld [vmem:[%s274 + $0x30] sm:$0xff]
        %v1414 = vld [vmem:[%s274 + $0x38] sm:$0xff]
        %v1415 = vld [vmem:[%s274 + $0x40] sm:$0xff]
        %v1416 = vld [vmem:[%s274 + $0x48] sm:$0xff]
        %v1417 = vld [vmem:[%s274 + $0x50] sm:$0xff]
        %v1418 = vld [vmem:[%s274 + $0x58] sm:$0xff]
        %v1419 = vld [vmem:[%s274 + $0x60] sm:$0xff]
        %v1420 = vld [vmem:[%s274 + $0x68] sm:$0xff]
        %v1421 = vld [vmem:[%s274 + $0x70] sm:$0xff]
        %v1422 = vld [vmem:[%s274 + $0x78] sm:$0xff]
        %v1423 = vadd.f32 %v1391, %v1407
        %v1424 = vadd.f32 %v1392, %v1408
        %v1425 = vadd.f32 %v1393, %v1409
        %v1426 = vadd.f32 %v1394, %v1410
        %v1427 = vadd.f32 %v1395, %v1411
        %v1428 = vadd.f32 %v1396, %v1412
        %v1429 = vadd.f32 %v1397, %v1413
        %v1430 = vadd.f32 %v1398, %v1414
        %v1431 = vadd.f32 %v1399, %v1415
        %v1432 = vadd.f32 %v1400, %v1416
        %v1433 = vadd.f32 %v1401, %v1417
        %v1434 = vadd.f32 %v1402, %v1418
        %v1435 = vadd.f32 %v1403, %v1419
        %v1436 = vadd.f32 %v1404, %v1420
        %v1437 = vadd.f32 %v1405, %v1421
        %v1438 = vadd.f32 %v1406, %v1422
        %1439 = vst [vmem:[%s314] sm:$0xff] %v1423
        %1440 = vst [vmem:[%s314 + $0x8] sm:$0xff] %v1424
        %1441 = vst [vmem:[%s314 + $0x10] sm:$0xff] %v1425
        %1442 = vst [vmem:[%s314 + $0x18] sm:$0xff] %v1426
        %1443 = vst [vmem:[%s314 + $0x20] sm:$0xff] %v1427
        %1444 = vst [vmem:[%s314 + $0x28] sm:$0xff] %v1428
        %1445 = vst [vmem:[%s314 + $0x30] sm:$0xff] %v1429
        %1446 = vst [vmem:[%s314 + $0x38] sm:$0xff] %v1430
        %1447 = vst [vmem:[%s314 + $0x40] sm:$0xff] %v1431
        %1448 = vst [vmem:[%s314 + $0x48] sm:$0xff] %v1432
        %1449 = vst [vmem:[%s314 + $0x50] sm:$0xff] %v1433
        %1450 = vst [vmem:[%s314 + $0x58] sm:$0xff] %v1434
        %1451 = vst [vmem:[%s314 + $0x60] sm:$0xff] %v1435
        %1452 = vst [vmem:[%s314 + $0x68] sm:$0xff] %v1436
        %1453 = vst [vmem:[%s314 + $0x70] sm:$0xff] %v1437
        %1454 = vst [vmem:[%s314 + $0x78] sm:$0xff] %v1438
        %s1455 = sand.u32 %s164, 1
        %s1456 = scalar_lea.sflag [#allocation5], %s1455
        %s1457 = sand.u32 %s164, 1
        %s1458 = smul.addr %s1457, 128
        %s1459 = scalar_lea.vmem [#allocation11], %s1458
        // Predicated region
        $region61: #{tpu_custom_call.1} parent=43 // pred_check
          %p1460 = pneg %p174
        $region62: #{tpu_custom_call.1} parent=43 // pred_check_branch
          %1462 = sbr.rel (%p1460) target = $region64
        $region63: #{tpu_custom_call.1} parent=43 // pred_region
          %s1463 = smul.u32 2, %s25
          %s1465 = ssub.s32 2048, 2048
          %1466 = vsyncadd %s1456, %s1465
          %s1467 = smul.addr %s1463, 8
          %s1468 = smul.addr %s1467, 128
          %s1469 = scalar_lea.hbm %s6, %s1468
          %s1470 = sshll.u32 %s1459, 4
          %s1471 = int_to_ptr.vmem [resolvable:$true] %s1470
          %1476 = dma.vmem_to_hbm [thread:$0]  %s1471, 2048, %s1469, %s1456, 128, 128, 8
        $region64: #{tpu_custom_call.1} parent=43 // pred_fallthru
          _
      $region44: #{tpu_custom_call.1} parent=5 // pred_fallthru
        _
      %p1477 = scmp.le.s32.totalorder 2, %s20
      // Predicated region
      $region65: #{tpu_custom_call.1} parent=5 // pred_check
        %p1478 = pneg %p1477
      $region66: #{tpu_custom_call.1} parent=5 // pred_check_branch
        %1480 = sbr.rel (%p1478) target = $region68
      $region67: #{tpu_custom_call.1} parent=5 // pred_region
        %s1481 = ssub.s32 %s20, 2
        // Predicated region
        $region69: #{tpu_custom_call.1} parent=67 // pred_check
          %p1482 = pneg %p180
        $region70: #{tpu_custom_call.1} parent=67 // pred_check_branch
          %1484 = sbr.rel (%p1482) target = $region72
        $region71: #{tpu_custom_call.1} parent=67 // pred_region
          %s1485 = sand.u32 %s165, 1
          %s1486 = scalar_lea.sflag [#allocation5], %s1485
          %s1487 = sand.u32 %s165, 1
          %s1488 = smul.addr %s1487, 128
          %s1489 = scalar_lea.vmem [#allocation11], %s1488
          %1490 = dma.done %s1486, 2048
        $region72: #{tpu_custom_call.1} parent=67 // pred_fallthru
          _
      $region68: #{tpu_custom_call.1} parent=5 // pred_fallthru
        _
    $region6: #{tpu_custom_call.1} parent=1 // loop_footer
      %s24 = sadd.s32 1, %s20
    $region7: #{tpu_custom_call.1} parent=1 // loop_footer_branch
      %19 = sbr.rel target = $region3
    $region8: #{tpu_custom_call.1} parent=1 // loop_exit
      _
    %1491 = vsyncpa [#allocation4], 1
    %s1492 = scalar_lea.sflag [#allocation4], 1
    %1493 = vsyncpa %s1492, 1
    %1494 = vsyncpa [#allocation7], 1
    %1495 = vsyncpa [#allocation10], 1
    %1496 = vsyncpa [#allocation5], 1
    %s1497 = scalar_lea.sflag [#allocation5], 1
    %1498 = vsyncpa %s1497, 1

</llo_original>
